<compile_context>
chip_gen: v6e
topology: v6e:2x2x1
jax: 0.10.0
libtpu: 0.0.40
codegen_flags: <defaults>
</compile_context>

<pallas_src>
import jax
import jax.numpy as jnp
from jax import lax
from jax.experimental import pallas as pl
from jax.experimental.pallas import tpu as pltpu  # noqa: F401  (TPU backend assumed)

# ----------------------------- config (small) --------------------------------
PATCH = 16
IMG = 32
IN_CH = 3
EMBED = 64
HEADS = 4
HEAD_DIM = EMBED // HEADS
DEPTH = 2
MLP_DIM = 4 * EMBED
FEAT_DIM = 1000          # vitB16 output dim (cls_fc = Linear(1000, C))
FEAT_PAD = 1024          # lane-dense padding of the 1000-dim feature
NUM_CLASSES = 31
CLS_PAD = 128            # lane-dense padding of the 31 logits
KERNEL_MUL = 2.0
KERNEL_NUM = 5
LN_EPS = 1e-6
NUM_PATCHES = (IMG // PATCH) ** 2
SEQ = NUM_PATCHES + 1
PATCH_DIM = IN_CH * PATCH * PATCH
NEG_INF = -1e30


# --------------------------- in-kernel helpers --------------------------------
def _ln(x, g, b):
    mu = jnp.mean(x, axis=-1, keepdims=True)
    var = jnp.mean((x - mu) ** 2, axis=-1, keepdims=True)
    return (x - mu) * lax.rsqrt(var + LN_EPS) * g + b


# ------------------------------ Pallas kernels --------------------------------
def _embed_kernel(xp_ref, is_cls_ref, pos_ref, pw_ref, pb_ref, cls_ref, o_ref):
    # xp_ref: (R, Cpp) patch rows (rows at cls positions are zeros and ignored)
    tok = jnp.dot(xp_ref[...], pw_ref[...],
                  preferred_element_type=jnp.float32) + pb_ref[...]
    h = jnp.where(is_cls_ref[...] > 0.5, cls_ref[...], tok)
    o_ref[...] = h + pos_ref[...]


def _block_kernel(h_ref, bias_ref,
                  ln1_g_ref, ln1_b_ref,
                  qw_ref, qb_ref, kw_ref, kb_ref, vw_ref, vb_ref,
                  pw_ref, pb_ref,
                  ln2_g_ref, ln2_b_ref,
                  f1w_ref, f1b_ref, f2w_ref, f2b_ref,
                  o_ref):
    """One full transformer block on a (R, E) slab; R = (2B)*SEQ rows."""
    h = h_ref[...]
    r = h.shape[0]
    bias = bias_ref[...]                           # block-diagonal attn bias (R, R)

    # --- attention ---
    y = _ln(h, ln1_g_ref[...], ln1_b_ref[...])
    q = jnp.dot(y, qw_ref[...], preferred_element_type=jnp.float32) + qb_ref[...]
    k = jnp.dot(y, kw_ref[...], preferred_element_type=jnp.float32) + kb_ref[...]
    v = jnp.dot(y, vw_ref[...], preferred_element_type=jnp.float32) + vb_ref[...]
    pw = pw_ref[...]

    lane = lax.broadcasted_iota(jnp.int32, (1, EMBED), 1)
    scale = 1.0 / float(HEAD_DIM) ** 0.5
    attn_proj = jnp.zeros((r, EMBED), jnp.float32)
    for hd in range(HEADS):                        # unrolled, all rows at once
        lo = hd * HEAD_DIM
        m = ((lane >= lo) & (lane < lo + HEAD_DIM)).astype(jnp.float32)  # (1, E)
        # (q*m) . k over all dims == q_head . k_head (zeros kill cross terms)
        s = lax.dot_general(q * m, k, (((1,), (1,)), ((), ())),
                            preferred_element_type=jnp.float32) * scale + bias
        s = s - jnp.max(s, axis=-1, keepdims=True)
        p = jnp.exp(s)
        p = p * pl.reciprocal(jnp.sum(p, axis=-1, keepdims=True), approx=True)
        oh = jnp.dot(p, v * m, preferred_element_type=jnp.float32)        # (r, E)
        # oh is nonzero only in this head's columns -> projects through the
        # matching rows of proj_w; summing heads == concat(heads) @ proj_w
        attn_proj = attn_proj + jnp.dot(oh, pw, preferred_element_type=jnp.float32)
    h = h + attn_proj + pb_ref[...]                # residual + proj bias (fused)

    # --- MLP ---
    y2 = _ln(h, ln2_g_ref[...], ln2_b_ref[...])
    z = jnp.dot(y2, f1w_ref[...], preferred_element_type=jnp.float32) + f1b_ref[...]
    z = jax.nn.gelu(z, approximate=True)
    z = jnp.dot(z, f2w_ref[...], preferred_element_type=jnp.float32) + f2b_ref[...]
    o_ref[...] = h + z                             # residual (fused)


def _head_kernel(x_ref, g_ref, b_ref, hw_ref, hb_ref, cw_ref, cb_ref,
                 feat_ref, logit_ref, prob_ref):
    """Final LN -> 1000-dim head (padded 1024) -> classifier (padded 128) -> softmax."""
    y = _ln(x_ref[...], g_ref[...], b_ref[...])
    feat = jnp.dot(y, hw_ref[...], preferred_element_type=jnp.float32) + hb_ref[...]
    feat_ref[...] = feat
    logits = jnp.dot(feat, cw_ref[...], preferred_element_type=jnp.float32) + cb_ref[...]
    logit_ref[...] = logits
    # masked softmax over the first NUM_CLASSES lanes (padding lanes -> prob 0)
    col = lax.broadcasted_iota(jnp.int32, logits.shape, 1)
    masked = jnp.where(col < NUM_CLASSES, logits, NEG_INF)
    m = jnp.max(masked, axis=-1, keepdims=True)
    e = jnp.exp(masked - m)
    prob_ref[...] = e / jnp.sum(e, axis=-1, keepdims=True)


def _lmmd_kernel(total_ref, wss_ref, wtt_ref, wst_ref, o_ref):
    # total_ref: (2B, F) = [source; target] features (zero-padded cols are inert)
    b = total_ref.shape[0] // 2
    total = total_ref[...]
    sq = jnp.sum(total * total, axis=-1, keepdims=True)                  # (2B, 1)
    gram = lax.dot_general(total, total, (((1,), (1,)), ((), ())),
                           preferred_element_type=jnp.float32)
    l2 = sq + sq.T - 2.0 * gram                                          # ||xi-xj||^2
    n = 2 * b
    bw = jnp.sum(l2) / float(n * n - n)
    bw = bw * (1.0 / (KERNEL_MUL ** (KERNEL_NUM // 2)))
    inv_bw = 1.0 / bw                                                    # one scalar divide
    kmat = jnp.zeros_like(l2)
    for i in range(KERNEL_NUM):                                          # 5 EUP exps
        kmat = kmat + jnp.exp(l2 * (-(KERNEL_MUL ** (-i)) * inv_bw))
    ss = kmat[:b, :b]
    tt = kmat[b:, b:]
    st = kmat[:b, b:]
    loss_mat = wss_ref[...] * ss + wtt_ref[...] * tt + 2.0 * wst_ref[...] * st
    loss = jnp.sum(loss_mat, axis=1, keepdims=True)
    loss = jnp.sum(loss, axis=0, keepdims=True)                          # (1, 1)
    any_nan = jnp.any(jnp.isnan(kmat))                                   # NaN guard -> 0
    o_ref[...] = jnp.where(any_nan, jnp.zeros_like(loss), loss)


# ------------------------------ Pallas wrappers --------------------------------
def embed_tokens(params, xp, is_cls, pos):
    rows = xp.shape[0]
    return pl.pallas_call(
        _embed_kernel,
        out_shape=jax.ShapeDtypeStruct((rows, EMBED), jnp.float32),
    )(xp, is_cls, pos, params["patch_w"], params["patch_b"], params["cls_token"])


def transformer_block(h, attn_bias, blk):
    rows = h.shape[0]
    return pl.pallas_call(
        _block_kernel,
        out_shape=jax.ShapeDtypeStruct((rows, EMBED), jnp.float32),
    )(h, attn_bias,
      blk["ln1_g"], blk["ln1_b"],
      blk["q_w"], blk["q_b"], blk["k_w"], blk["k_b"], blk["v_w"], blk["v_b"],
      blk["proj_w"], blk["proj_b"],
      blk["ln2_g"], blk["ln2_b"],
      blk["fc1_w"], blk["fc1_b"], blk["fc2_w"], blk["fc2_b"])


def head_classifier(params, cls_rows):
    n = cls_rows.shape[0]
    return pl.pallas_call(
        _head_kernel,
        out_shape=(jax.ShapeDtypeStruct((n, FEAT_PAD), jnp.float32),
                   jax.ShapeDtypeStruct((n, CLS_PAD), jnp.float32),
                   jax.ShapeDtypeStruct((n, CLS_PAD), jnp.float32)),
    )(cls_rows, params["lnf_g"], params["lnf_b"],
      params["head_w"], params["head_b"], params["cls_w"], params["cls_b"])


def lmmd_loss(total, w_ss, w_tt, w_st):
    out = pl.pallas_call(
        _lmmd_kernel,
        out_shape=jax.ShapeDtypeStruct((1, 1), jnp.float32),
    )(total, w_ss, w_tt, w_st)
    return out[0, 0]


# ------------------------------ plain-JAX glue --------------------------------
def cal_weight(s_label, t_probs, class_num):
    """LMMD_loss.cal_weight: numpy label bookkeeping, kept as JAX glue."""
    s_onehot = jax.nn.one_hot(s_label, class_num, dtype=jnp.float32)     # (B, C)
    s_sum = jnp.sum(s_onehot, axis=0, keepdims=True)
    s_sum = jnp.where(s_sum == 0, 100.0, s_sum)
    s_vec = s_onehot / s_sum

    t_sca = jnp.argmax(t_probs, axis=1)
    t_sum = jnp.sum(t_probs, axis=0, keepdims=True)
    t_sum = jnp.where(t_sum == 0, 100.0, t_sum)
    t_vec = t_probs / t_sum

    s_present = jnp.sum(s_onehot, axis=0) > 0
    t_present = jnp.sum(jax.nn.one_hot(t_sca, class_num, dtype=jnp.float32), axis=0) > 0
    mask = jnp.logical_and(s_present, t_present).astype(jnp.float32)     # (C,)

    s_vec = s_vec * mask[None, :]
    t_vec = t_vec * mask[None, :]

    w_ss = s_vec @ s_vec.T
    w_tt = t_vec @ t_vec.T
    w_st = s_vec @ t_vec.T

    length = jnp.sum(mask)
    denom = jnp.maximum(length, 1.0)
    valid = (length > 0).astype(jnp.float32)
    return (w_ss / denom * valid, w_tt / denom * valid, w_st / denom * valid)


def encode(params, x):
    """Batched ViT encoder on NCHW images; returns a (N*SEQ, EMBED) token slab."""
    n = x.shape[0]
    rows = n * SEQ
    hp = IMG // PATCH
    # NCHW -> patch rows (one-off relayout, plain XLA)
    xp = x.reshape(n, IN_CH, hp, PATCH, hp, PATCH)
    xp = xp.transpose(0, 2, 4, 1, 3, 5).reshape(n, NUM_PATCHES, PATCH_DIM)
    xp = jnp.pad(xp, ((0, 0), (1, 0), (0, 0)))          # zero row in each cls slot
    xp = xp.reshape(rows, PATCH_DIM)

    tok_idx = jnp.arange(rows, dtype=jnp.int32) % SEQ
    is_cls = (tok_idx == 0).astype(jnp.float32).reshape(rows, 1)
    pos = jnp.tile(params["pos_emb"], (n, 1))           # (rows, E)

    # block-diagonal attention bias: tokens only attend within their own image
    img_id = jnp.arange(rows, dtype=jnp.int32) // SEQ
    attn_bias = jnp.where(img_id[:, None] == img_id[None, :], 0.0, NEG_INF
                          ).astype(jnp.float32)

    h = embed_tokens(params, xp, is_cls, pos)
    for blk in params["blocks"]:
        h = transformer_block(h, attn_bias, blk)
    return h


def dsan_forward(params, source, target, s_label):
    b = source.shape[0]
    # single batched encoder pass over [source; target]
    x = jnp.concatenate([source, target], axis=0)       # (2B, C, H, W)
    h = encode(params, x)                               # (2B*SEQ, E)
    cls_rows = h.reshape(2 * b, SEQ, EMBED)[:, 0, :]     # (2B, E)
    feat, logits, probs = head_classifier(params, cls_rows)

    s_pred = logits[:b, :NUM_CLASSES]                   # cls_fc(source)
    t_probs = probs[b:, :NUM_CLASSES]                   # softmax(cls_fc(target))
    w_ss, w_tt, w_st = cal_weight(s_label, t_probs, NUM_CLASSES)
    loss = lmmd_loss(feat, w_ss, w_tt, w_st)            # feat is already [src; tgt]
    return s_pred, loss


# ------------------------------ parameter init --------------------------------
def _dense_init(key, fan_in, fan_out):
    w = 0.02 * jax.random.normal(key, (fan_in, fan_out), jnp.float32)
    b = jnp.zeros((1, fan_out), jnp.float32)
    return w, b


def init_params(key):
    keys = jax.random.split(key, 8 + DEPTH)
    patch_w, patch_b = _dense_init(keys[0], PATCH_DIM, EMBED)
    cls_token = 0.02 * jax.random.normal(keys[1], (1, EMBED), jnp.float32)
    pos_emb = 0.02 * jax.random.normal(keys[2], (SEQ, EMBED), jnp.float32)
    blocks = []
    for d in range(DEPTH):
        bk = jax.random.split(keys[3 + d], 6)
        q_w, q_b = _dense_init(bk[0], EMBED, EMBED)
        k_w, k_b = _dense_init(bk[1], EMBED, EMBED)
        v_w, v_b = _dense_init(bk[2], EMBED, EMBED)
        proj_w, proj_b = _dense_init(bk[3], EMBED, EMBED)
        fc1_w, fc1_b = _dense_init(bk[4], EMBED, MLP_DIM)
        fc2_w, fc2_b = _dense_init(bk[5], MLP_DIM, EMBED)
        blocks.append(dict(
            ln1_g=jnp.ones((1, EMBED), jnp.float32), ln1_b=jnp.zeros((1, EMBED), jnp.float32),
            ln2_g=jnp.ones((1, EMBED), jnp.float32), ln2_b=jnp.zeros((1, EMBED), jnp.float32),
            q_w=q_w, q_b=q_b, k_w=k_w, k_b=k_b, v_w=v_w, v_b=v_b,
            proj_w=proj_w, proj_b=proj_b,
            fc1_w=fc1_w, fc1_b=fc1_b, fc2_w=fc2_w, fc2_b=fc2_b))
    # head: EMBED -> 1000, zero-padded to 1024 lanes (padding is inert)
    hw = 0.02 * jax.random.normal(keys[3 + DEPTH], (EMBED, FEAT_DIM), jnp.float32)
    head_w = jnp.zeros((EMBED, FEAT_PAD), jnp.float32).at[:, :FEAT_DIM].set(hw)
    head_b = jnp.zeros((1, FEAT_PAD), jnp.float32)
    # classifier: 1000 -> 31, zero-padded to (1024, 128)
    cw = 0.02 * jax.random.normal(keys[4 + DEPTH], (FEAT_DIM, NUM_CLASSES), jnp.float32)
    cls_w = jnp.zeros((FEAT_PAD, CLS_PAD), jnp.float32).at[:FEAT_DIM, :NUM_CLASSES].set(cw)
    cls_b = jnp.zeros((1, CLS_PAD), jnp.float32)
    return dict(patch_w=patch_w, patch_b=patch_b,
                cls_token=cls_token, pos_emb=pos_emb, blocks=blocks,
                lnf_g=jnp.ones((1, EMBED), jnp.float32),
                lnf_b=jnp.zeros((1, EMBED), jnp.float32),
                head_w=head_w, head_b=head_b, cls_w=cls_w, cls_b=cls_b)


# ------------------------------------ main -------------------------------------
if __name__ == "__main__":
    key = jax.random.PRNGKey(0)
    pkey, skey, tkey, lkey = jax.random.split(key, 4)
    params = init_params(pkey)

    B = 2
    source = jax.random.normal(skey, (B, IN_CH, IMG, IMG), jnp.float32)
    target = jax.random.normal(tkey, (B, IN_CH, IMG, IMG), jnp.float32)
    s_label = jax.random.randint(lkey, (B,), 0, NUM_CLASSES)

    s_pred, loss = jax.jit(dsan_forward)(params, source, target, s_label)
    jax.block_until_ready((s_pred, loss))
    assert s_pred.shape == (B, NUM_CLASSES)
    assert loss.shape == ()
    print("KERNEL_OK")
</pallas_src>

<mosaic_0001>
module attributes {stable_mosaic.version = 11 : i64} {
  func.func @_embed_kernel(%arg0: memref<20x768xf32, #tpu.memory_space<vmem>>, %arg1: memref<20x1xf32, #tpu.memory_space<vmem>>, %arg2: memref<20x64xf32, #tpu.memory_space<vmem>>, %arg3: memref<768x64xf32, #tpu.memory_space<vmem>>, %arg4: memref<1x64xf32, #tpu.memory_space<vmem>>, %arg5: memref<1x64xf32, #tpu.memory_space<vmem>>, %arg6: memref<20x64xf32, #tpu.memory_space<vmem>>) attributes {dimension_semantics = [], scalar_prefetch = 0 : i64, scratch_operands = 0 : i64, tpu.core_type = #tpu.core_type<tc>} {
    %c0 = arith.constant 0 : index
    %c0_0 = arith.constant 0 : index
    %0 = vector.load %arg0[%c0, %c0_0] : memref<20x768xf32, #tpu.memory_space<vmem>>, vector<20x768xf32>
    %c0_1 = arith.constant 0 : index
    %c0_2 = arith.constant 0 : index
    %1 = vector.load %arg3[%c0_1, %c0_2] : memref<768x64xf32, #tpu.memory_space<vmem>>, vector<768x64xf32>
    %cst = arith.constant dense<0.000000e+00> : vector<20x64xf32>
    %2 = tpu.matmul %0, %1, %cst {dimension_numbers = #tpu.dot_dimension_numbers<[1], [0], [0], [1], [0, 0, 1, 1], [], []>} : vector<20x768xf32>, vector<768x64xf32>, vector<20x64xf32> -> vector<20x64xf32>
    %c0_3 = arith.constant 0 : index
    %c0_4 = arith.constant 0 : index
    %3 = vector.load %arg4[%c0_3, %c0_4] : memref<1x64xf32, #tpu.memory_space<vmem>>, vector<1x64xf32>
    %4 = vector.broadcast %3 : vector<1x64xf32> to vector<20x64xf32>
    %5 = arith.addf %2, %4 : vector<20x64xf32>
    %c0_5 = arith.constant 0 : index
    %c0_6 = arith.constant 0 : index
    %6 = vector.load %arg1[%c0_5, %c0_6] : memref<20x1xf32, #tpu.memory_space<vmem>>, vector<20x1xf32>
    %cst_7 = arith.constant 5.000000e-01 : f32
    %7 = vector.broadcast %cst_7 : f32 to vector<20x1xf32>
    %8 = arith.cmpf ogt, %6, %7 : vector<20x1xf32>
    %c0_8 = arith.constant 0 : index
    %c0_9 = arith.constant 0 : index
    %9 = vector.load %arg5[%c0_8, %c0_9] : memref<1x64xf32, #tpu.memory_space<vmem>>, vector<1x64xf32>
    %10 = vector.shape_cast %8 : vector<20x1xi1> to vector<20x1xi1>
    %11 = vector.broadcast %10 : vector<20x1xi1> to vector<20x64xi1>
    %12 = vector.shape_cast %9 : vector<1x64xf32> to vector<1x64xf32>
    %13 = vector.broadcast %12 : vector<1x64xf32> to vector<20x64xf32>
    %14 = arith.select %11, %13, %5 : vector<20x64xi1>, vector<20x64xf32>
    %c0_10 = arith.constant 0 : index
    %c0_11 = arith.constant 0 : index
    %15 = vector.load %arg2[%c0_10, %c0_11] : memref<20x64xf32, #tpu.memory_space<vmem>>, vector<20x64xf32>
    %16 = arith.addf %14, %15 : vector<20x64xf32>
    %c0_12 = arith.constant 0 : index
    %c0_13 = arith.constant 0 : index
    %17 = vector.load %arg6[%c0_12, %c0_13] : memref<20x64xf32, #tpu.memory_space<vmem>>, vector<20x64xf32>
    tpu.vector_store %arg6[%c0_12, %c0_13], %16 {strides = array<i32>} : memref<20x64xf32, #tpu.memory_space<vmem>>, vector<20x64xf32>,
    return
  }
}

module attributes {stable_mosaic.version = 11 : i64} {
  func.func @_head_kernel(%arg0: memref<4x64xf32, #tpu.memory_space<vmem>>, %arg1: memref<1x64xf32, #tpu.memory_space<vmem>>, %arg2: memref<1x64xf32, #tpu.memory_space<vmem>>, %arg3: memref<64x1024xf32, #tpu.memory_space<vmem>>, %arg4: memref<1x1024xf32, #tpu.memory_space<vmem>>, %arg5: memref<1024x128xf32, #tpu.memory_space<vmem>>, %arg6: memref<1x128xf32, #tpu.memory_space<vmem>>, %arg7: memref<4x1024xf32, #tpu.memory_space<vmem>>, %arg8: memref<4x128xf32, #tpu.memory_space<vmem>>, %arg9: memref<4x128xf32, #tpu.memory_space<vmem>>) attributes {dimension_semantics = [], scalar_prefetch = 0 : i64, scratch_operands = 0 : i64, tpu.core_type = #tpu.core_type<tc>} {
    %c0 = arith.constant 0 : index
    %c0_0 = arith.constant 0 : index
    %0 = vector.load %arg0[%c0, %c0_0] : memref<4x64xf32, #tpu.memory_space<vmem>>, vector<4x64xf32>
    %c0_1 = arith.constant 0 : index
    %c0_2 = arith.constant 0 : index
    %1 = vector.load %arg1[%c0_1, %c0_2] : memref<1x64xf32, #tpu.memory_space<vmem>>, vector<1x64xf32>
    %c0_3 = arith.constant 0 : index
    %c0_4 = arith.constant 0 : index
    %2 = vector.load %arg2[%c0_3, %c0_4] : memref<1x64xf32, #tpu.memory_space<vmem>>, vector<1x64xf32>
    %cst = arith.constant dense<0.000000e+00> : vector<4xf32>
    %3 = vector.multi_reduction <add>, %0, %cst [1] : vector<4x64xf32> to vector<4xf32>
    %4 = vector.shape_cast %3 : vector<4xf32> to vector<4x1xf32>
    %cst_5 = arith.constant 6.400000e+01 : f32
    %5 = vector.broadcast %cst_5 : f32 to vector<4x1xf32>
    %6 = arith.divf %4, %5 : vector<4x1xf32>
    %7 = vector.broadcast %6 : vector<4x1xf32> to vector<4x64xf32>
    %8 = arith.subf %0, %7 : vector<4x64xf32>
    %9 = arith.mulf %8, %8 : vector<4x64xf32>
    %cst_6 = arith.constant dense<0.000000e+00> : vector<4xf32>
    %10 = vector.multi_reduction <add>, %9, %cst_6 [1] : vector<4x64xf32> to vector<4xf32>
    %11 = vector.shape_cast %10 : vector<4xf32> to vector<4x1xf32>
    %cst_7 = arith.constant 6.400000e+01 : f32
    %12 = vector.broadcast %cst_7 : f32 to vector<4x1xf32>
    %13 = arith.divf %11, %12 : vector<4x1xf32>
    %14 = vector.broadcast %6 : vector<4x1xf32> to vector<4x64xf32>
    %15 = arith.subf %0, %14 : vector<4x64xf32>
    %cst_8 = arith.constant 9.99999997E-7 : f32
    %16 = vector.broadcast %cst_8 : f32 to vector<4x1xf32>
    %17 = arith.addf %13, %16 : vector<4x1xf32>
    %18 = math.rsqrt %17 : vector<4x1xf32>
    %19 = vector.broadcast %18 : vector<4x1xf32> to vector<4x64xf32>
    %20 = arith.mulf %15, %19 : vector<4x64xf32>
    %21 = vector.broadcast %1 : vector<1x64xf32> to vector<4x64xf32>
    %22 = arith.mulf %20, %21 : vector<4x64xf32>
    %23 = vector.broadcast %2 : vector<1x64xf32> to vector<4x64xf32>
    %24 = arith.addf %22, %23 : vector<4x64xf32>
    %c0_9 = arith.constant 0 : index
    %c0_10 = arith.constant 0 : index
    %25 = vector.load %arg3[%c0_9, %c0_10] : memref<64x1024xf32, #tpu.memory_space<vmem>>, vector<64x1024xf32>
    %cst_11 = arith.constant dense<0.000000e+00> : vector<4x1024xf32>
    %26 = tpu.matmul %24, %25, %cst_11 {dimension_numbers = #tpu.dot_dimension_numbers<[1], [0], [0], [1], [0, 0, 1, 1], [], []>} : vector<4x64xf32>, vector<64x1024xf32>, vector<4x1024xf32> -> vector<4x1024xf32>
    %c0_12 = arith.constant 0 : index
    %c0_13 = arith.constant 0 : index
    %27 = vector.load %arg4[%c0_12, %c0_13] : memref<1x1024xf32, #tpu.memory_space<vmem>>, vector<1x1024xf32>
    %28 = vector.broadcast %27 : vector<1x1024xf32> to vector<4x1024xf32>
    %29 = arith.addf %26, %28 : vector<4x1024xf32>
    %c0_14 = arith.constant 0 : index
    %c0_15 = arith.constant 0 : index
    %30 = vector.load %arg7[%c0_14, %c0_15] : memref<4x1024xf32, #tpu.memory_space<vmem>>, vector<4x1024xf32>
    tpu.vector_store %arg7[%c0_14, %c0_15], %29 {strides = array<i32>} : memref<4x1024xf32, #tpu.memory_space<vmem>>, vector<4x1024xf32>,
    %c0_16 = arith.constant 0 : index
    %c0_17 = arith.constant 0 : index
    %31 = vector.load %arg5[%c0_16, %c0_17] : memref<1024x128xf32, #tpu.memory_space<vmem>>, vector<1024x128xf32>
    %cst_18 = arith.constant dense<0.000000e+00> : vector<4x128xf32>
    %32 = tpu.matmul %29, %31, %cst_18 {dimension_numbers = #tpu.dot_dimension_numbers<[1], [0], [0], [1], [0, 0, 1, 1], [], []>} : vector<4x1024xf32>, vector<1024x128xf32>, vector<4x128xf32> -> vector<4x128xf32>
    %c0_19 = arith.constant 0 : index
    %c0_20 = arith.constant 0 : index
    %33 = vector.load %arg6[%c0_19, %c0_20] : memref<1x128xf32, #tpu.memory_space<vmem>>, vector<1x128xf32>
    %34 = vector.broadcast %33 : vector<1x128xf32> to vector<4x128xf32>
    %35 = arith.addf %32, %34 : vector<4x128xf32>
    %c0_21 = arith.constant 0 : index
    %c0_22 = arith.constant 0 : index
    %36 = vector.load %arg8[%c0_21, %c0_22] : memref<4x128xf32, #tpu.memory_space<vmem>>, vector<4x128xf32>
    tpu.vector_store %arg8[%c0_21, %c0_22], %35 {strides = array<i32>} : memref<4x128xf32, #tpu.memory_space<vmem>>, vector<4x128xf32>,
    %37 = tpu.iota {dimensions = array<i32: 1>} : vector<4x128xi32>
    %c31_i32 = arith.constant 31 : i32
    %38 = vector.broadcast %c31_i32 : i32 to vector<4x128xi32>
    %39 = arith.cmpi slt, %37, %38 : vector<4x128xi32>
    %cst_23 = arith.constant -1.000000e+30 : f32
    %40 = vector.broadcast %cst_23 : f32 to vector<4x128xf32>
    %41 = arith.select %39, %35, %40 : vector<4x128xi1>, vector<4x128xf32>
    %cst_24 = arith.constant dense<0xFF800000> : vector<4xf32>
    %42 = vector.multi_reduction <maximumf>, %41, %cst_24 [1] : vector<4x128xf32> to vector<4xf32>
    %43 = vector.shape_cast %42 : vector<4xf32> to vector<4x1xf32>
    %44 = vector.broadcast %43 : vector<4x1xf32> to vector<4x128xf32>
    %45 = arith.subf %41, %44 : vector<4x128xf32>
    %46 = math.exp %45 : vector<4x128xf32>
    %cst_25 = arith.constant dense<0.000000e+00> : vector<4xf32>
    %47 = vector.multi_reduction <add>, %46, %cst_25 [1] : vector<4x128xf32> to vector<4xf32>
    %48 = vector.shape_cast %47 : vector<4xf32> to vector<4x1xf32>
    %49 = vector.broadcast %48 : vector<4x1xf32> to vector<4x128xf32>
    %50 = arith.divf %46, %49 : vector<4x128xf32>
    %c0_26 = arith.constant 0 : index
    %c0_27 = arith.constant 0 : index
    %51 = vector.load %arg9[%c0_26, %c0_27] : memref<4x128xf32, #tpu.memory_space<vmem>>, vector<4x128xf32>
    tpu.vector_store %arg9[%c0_26, %c0_27], %50 {strides = array<i32>} : memref<4x128xf32, #tpu.memory_space<vmem>>, vector<4x128xf32>,
    return
  }
}

module attributes {stable_mosaic.version = 11 : i64} {
  func.func @_block_kernel(%arg0: memref<20x64xf32, #tpu.memory_space<vmem>>, %arg1: memref<20x20xf32, #tpu.memory_space<vmem>>, %arg2: memref<1x64xf32, #tpu.memory_space<vmem>>, %arg3: memref<1x64xf32, #tpu.memory_space<vmem>>, %arg4: memref<64x64xf32, #tpu.memory_space<vmem>>, %arg5: memref<1x64xf32, #tpu.memory_space<vmem>>, %arg6: memref<64x64xf32, #tpu.memory_space<vmem>>, %arg7: memref<1x64xf32, #tpu.memory_space<vmem>>, %arg8: memref<64x64xf32, #tpu.memory_space<vmem>>, %arg9: memref<1x64xf32, #tpu.memory_space<vmem>>, %arg10: memref<64x64xf32, #tpu.memory_space<vmem>>, %arg11: memref<1x64xf32, #tpu.memory_space<vmem>>, %arg12: memref<1x64xf32, #tpu.memory_space<vmem>>, %arg13: memref<1x64xf32, #tpu.memory_space<vmem>>, %arg14: memref<64x256xf32, #tpu.memory_space<vmem>>, %arg15: memref<1x256xf32, #tpu.memory_space<vmem>>, %arg16: memref<256x64xf32, #tpu.memory_space<vmem>>, %arg17: memref<1x64xf32, #tpu.memory_space<vmem>>, %arg18: memref<20x64xf32, #tpu.memory_space<vmem>>) attributes {dimension_semantics = [], scalar_prefetch = 0 : i64, scratch_operands = 0 : i64, tpu.core_type = #tpu.core_type<tc>} {
    %c0 = arith.constant 0 : index
    %c0_0 = arith.constant 0 : index
    %0 = vector.load %arg0[%c0, %c0_0] : memref<20x64xf32, #tpu.memory_space<vmem>>, vector<20x64xf32>
    %c0_1 = arith.constant 0 : index
    %c0_2 = arith.constant 0 : index
    %1 = vector.load %arg1[%c0_1, %c0_2] : memref<20x20xf32, #tpu.memory_space<vmem>>, vector<20x20xf32>
    %c0_3 = arith.constant 0 : index
    %c0_4 = arith.constant 0 : index
    %2 = vector.load %arg2[%c0_3, %c0_4] : memref<1x64xf32, #tpu.memory_space<vmem>>, vector<1x64xf32>
    %c0_5 = arith.constant 0 : index
    %c0_6 = arith.constant 0 : index
    %3 = vector.load %arg3[%c0_5, %c0_6] : memref<1x64xf32, #tpu.memory_space<vmem>>, vector<1x64xf32>
    %cst = arith.constant dense<0.000000e+00> : vector<20xf32>
    %4 = vector.multi_reduction <add>, %0, %cst [1] : vector<20x64xf32> to vector<20xf32>
    %5 = vector.shape_cast %4 : vector<20xf32> to vector<20x1xf32>
    %cst_7 = arith.constant 6.400000e+01 : f32
    %6 = vector.broadcast %cst_7 : f32 to vector<20x1xf32>
    %7 = arith.divf %5, %6 : vector<20x1xf32>
    %8 = vector.broadcast %7 : vector<20x1xf32> to vector<20x64xf32>
    %9 = arith.subf %0, %8 : vector<20x64xf32>
    %10 = arith.mulf %9, %9 : vector<20x64xf32>
    %cst_8 = arith.constant dense<0.000000e+00> : vector<20xf32>
    %11 = vector.multi_reduction <add>, %10, %cst_8 [1] : vector<20x64xf32> to vector<20xf32>
    %12 = vector.shape_cast %11 : vector<20xf32> to vector<20x1xf32>
    %cst_9 = arith.constant 6.400000e+01 : f32
    %13 = vector.broadcast %cst_9 : f32 to vector<20x1xf32>
    %14 = arith.divf %12, %13 : vector<20x1xf32>
    %15 = vector.broadcast %7 : vector<20x1xf32> to vector<20x64xf32>
    %16 = arith.subf %0, %15 : vector<20x64xf32>
    %cst_10 = arith.constant 9.99999997E-7 : f32
    %17 = vector.broadcast %cst_10 : f32 to vector<20x1xf32>
    %18 = arith.addf %14, %17 : vector<20x1xf32>
    %19 = math.rsqrt %18 : vector<20x1xf32>
    %20 = vector.broadcast %19 : vector<20x1xf32> to vector<20x64xf32>
    %21 = arith.mulf %16, %20 : vector<20x64xf32>
    %22 = vector.broadcast %2 : vector<1x64xf32> to vector<20x64xf32>
    %23 = arith.mulf %21, %22 : vector<20x64xf32>
    %24 = vector.broadcast %3 : vector<1x64xf32> to vector<20x64xf32>
    %25 = arith.addf %23, %24 : vector<20x64xf32>
    %c0_11 = arith.constant 0 : index
    %c0_12 = arith.constant 0 : index
    %26 = vector.load %arg4[%c0_11, %c0_12] : memref<64x64xf32, #tpu.memory_space<vmem>>, vector<64x64xf32>
    %cst_13 = arith.constant dense<0.000000e+00> : vector<20x64xf32>
    %27 = tpu.matmul %25, %26, %cst_13 {dimension_numbers = #tpu.dot_dimension_numbers<[1], [0], [0], [1], [0, 0, 1, 1], [], []>} : vector<20x64xf32>, vector<64x64xf32>, vector<20x64xf32> -> vector<20x64xf32>
    %c0_14 = arith.constant 0 : index
    %c0_15 = arith.constant 0 : index
    %28 = vector.load %arg5[%c0_14, %c0_15] : memref<1x64xf32, #tpu.memory_space<vmem>>, vector<1x64xf32>
    %29 = vector.broadcast %28 : vector<1x64xf32> to vector<20x64xf32>
    %30 = arith.addf %27, %29 : vector<20x64xf32>
    %c0_16 = arith.constant 0 : index
    %c0_17 = arith.constant 0 : index
    %31 = vector.load %arg6[%c0_16, %c0_17] : memref<64x64xf32, #tpu.memory_space<vmem>>, vector<64x64xf32>
    %cst_18 = arith.constant dense<0.000000e+00> : vector<20x64xf32>
    %32 = tpu.matmul %25, %31, %cst_18 {dimension_numbers = #tpu.dot_dimension_numbers<[1], [0], [0], [1], [0, 0, 1, 1], [], []>} : vector<20x64xf32>, vector<64x64xf32>, vector<20x64xf32> -> vector<20x64xf32>
    %c0_19 = arith.constant 0 : index
    %c0_20 = arith.constant 0 : index
    %33 = vector.load %arg7[%c0_19, %c0_20] : memref<1x64xf32, #tpu.memory_space<vmem>>, vector<1x64xf32>
    %34 = vector.broadcast %33 : vector<1x64xf32> to vector<20x64xf32>
    %35 = arith.addf %32, %34 : vector<20x64xf32>
    %c0_21 = arith.constant 0 : index
    %c0_22 = arith.constant 0 : index
    %36 = vector.load %arg8[%c0_21, %c0_22] : memref<64x64xf32, #tpu.memory_space<vmem>>, vector<64x64xf32>
    %cst_23 = arith.constant dense<0.000000e+00> : vector<20x64xf32>
    %37 = tpu.matmul %25, %36, %cst_23 {dimension_numbers = #tpu.dot_dimension_numbers<[1], [0], [0], [1], [0, 0, 1, 1], [], []>} : vector<20x64xf32>, vector<64x64xf32>, vector<20x64xf32> -> vector<20x64xf32>
    %c0_24 = arith.constant 0 : index
    %c0_25 = arith.constant 0 : index
    %38 = vector.load %arg9[%c0_24, %c0_25] : memref<1x64xf32, #tpu.memory_space<vmem>>, vector<1x64xf32>
    %39 = vector.broadcast %38 : vector<1x64xf32> to vector<20x64xf32>
    %40 = arith.addf %37, %39 : vector<20x64xf32>
    %c0_26 = arith.constant 0 : index
    %c0_27 = arith.constant 0 : index
    %41 = vector.load %arg10[%c0_26, %c0_27] : memref<64x64xf32, #tpu.memory_space<vmem>>, vector<64x64xf32>
    %42 = tpu.iota {dimensions = array<i32: 1>} : vector<1x64xi32>
    %cst_28 = arith.constant 0.000000e+00 : f32
    %43 = vector.broadcast %cst_28 : f32 to vector<20x64xf32>
    %c0_i32 = arith.constant 0 : i32
    %44 = vector.broadcast %c0_i32 : i32 to vector<1x64xi32>
    %45 = arith.cmpi sge, %42, %44 : vector<1x64xi32>
    %c16_i32 = arith.constant 16 : i32
    %46 = vector.broadcast %c16_i32 : i32 to vector<1x64xi32>
    %47 = arith.cmpi slt, %42, %46 : vector<1x64xi32>
    %48 = arith.andi %45, %47 : vector<1x64xi1>
    %49 = arith.extui %48 : vector<1x64xi1> to vector<1x64xi32>
    %50 = arith.sitofp %49 : vector<1x64xi32> to vector<1x64xf32>
    %51 = vector.broadcast %50 : vector<1x64xf32> to vector<20x64xf32>
    %52 = arith.mulf %30, %51 : vector<20x64xf32>
    %cst_29 = arith.constant dense<0.000000e+00> : vector<20x20xf32>
    %53 = tpu.matmul %52, %35, %cst_29 {dimension_numbers = #tpu.dot_dimension_numbers<[1], [1], [0], [0], [0, 0, 1, 0], [], []>} : vector<20x64xf32>, vector<20x64xf32>, vector<20x20xf32> -> vector<20x20xf32>
    %cst_30 = arith.constant 2.500000e-01 : f32
    %54 = vector.broadcast %cst_30 : f32 to vector<20x20xf32>
    %55 = arith.mulf %53, %54 : vector<20x20xf32>
    %56 = arith.addf %55, %1 : vector<20x20xf32>
    %cst_31 = arith.constant dense<0xFF800000> : vector<20xf32>
    %57 = vector.multi_reduction <maximumf>, %56, %cst_31 [1] : vector<20x20xf32> to vector<20xf32>
    %58 = vector.shape_cast %57 : vector<20xf32> to vector<20x1xf32>
    %59 = vector.broadcast %58 : vector<20x1xf32> to vector<20x20xf32>
    %60 = arith.subf %56, %59 : vector<20x20xf32>
    %61 = math.exp %60 : vector<20x20xf32>
    %cst_32 = arith.constant dense<0.000000e+00> : vector<20xf32>
    %62 = vector.multi_reduction <add>, %61, %cst_32 [1] : vector<20x20xf32> to vector<20xf32>
    %63 = vector.shape_cast %62 : vector<20xf32> to vector<20x1xf32>
    %64 = tpu.reciprocal %63 {approx = true} : vector<20x1xf32> -> vector<20x1xf32>
    %65 = vector.broadcast %64 : vector<20x1xf32> to vector<20x20xf32>
    %66 = arith.mulf %61, %65 : vector<20x20xf32>
    %67 = vector.broadcast %50 : vector<1x64xf32> to vector<20x64xf32>
    %68 = arith.mulf %40, %67 : vector<20x64xf32>
    %cst_33 = arith.constant dense<0.000000e+00> : vector<20x64xf32>
    %69 = tpu.matmul %66, %68, %cst_33 {dimension_numbers = #tpu.dot_dimension_numbers<[1], [0], [0], [1], [0, 0, 1, 1], [], []>} : vector<20x20xf32>, vector<20x64xf32>, vector<20x64xf32> -> vector<20x64xf32>
    %cst_34 = arith.constant dense<0.000000e+00> : vector<20x64xf32>
    %70 = tpu.matmul %69, %41, %cst_34 {dimension_numbers = #tpu.dot_dimension_numbers<[1], [0], [0], [1], [0, 0, 1, 1], [], []>} : vector<20x64xf32>, vector<64x64xf32>, vector<20x64xf32> -> vector<20x64xf32>
    %71 = arith.addf %43, %70 : vector<20x64xf32>
    %c16_i32_35 = arith.constant 16 : i32
    %72 = vector.broadcast %c16_i32_35 : i32 to vector<1x64xi32>
    %73 = arith.cmpi sge, %42, %72 : vector<1x64xi32>
    %c32_i32 = arith.constant 32 : i32
    %74 = vector.broadcast %c32_i32 : i32 to vector<1x64xi32>
    %75 = arith.cmpi slt, %42, %74 : vector<1x64xi32>
    %76 = arith.andi %73, %75 : vector<1x64xi1>
    %77 = arith.extui %76 : vector<1x64xi1> to vector<1x64xi32>
    %78 = arith.sitofp %77 : vector<1x64xi32> to vector<1x64xf32>
    %79 = vector.broadcast %78 : vector<1x64xf32> to vector<20x64xf32>
    %80 = arith.mulf %30, %79 : vector<20x64xf32>
    %cst_36 = arith.constant dense<0.000000e+00> : vector<20x20xf32>
    %81 = tpu.matmul %80, %35, %cst_36 {dimension_numbers = #tpu.dot_dimension_numbers<[1], [1], [0], [0], [0, 0, 1, 0], [], []>} : vector<20x64xf32>, vector<20x64xf32>, vector<20x20xf32> -> vector<20x20xf32>
    %cst_37 = arith.constant 2.500000e-01 : f32
    %82 = vector.broadcast %cst_37 : f32 to vector<20x20xf32>
    %83 = arith.mulf %81, %82 : vector<20x20xf32>
    %84 = arith.addf %83, %1 : vector<20x20xf32>
    %cst_38 = arith.constant dense<0xFF800000> : vector<20xf32>
    %85 = vector.multi_reduction <maximumf>, %84, %cst_38 [1] : vector<20x20xf32> to vector<20xf32>
    %86 = vector.shape_cast %85 : vector<20xf32> to vector<20x1xf32>
    %87 = vector.broadcast %86 : vector<20x1xf32> to vector<20x20xf32>
    %88 = arith.subf %84, %87 : vector<20x20xf32>
    %89 = math.exp %88 : vector<20x20xf32>
    %cst_39 = arith.constant dense<0.000000e+00> : vector<20xf32>
    %90 = vector.multi_reduction <add>, %89, %cst_39 [1] : vector<20x20xf32> to vector<20xf32>
    %91 = vector.shape_cast %90 : vector<20xf32> to vector<20x1xf32>
    %92 = tpu.reciprocal %91 {approx = true} : vector<20x1xf32> -> vector<20x1xf32>
    %93 = vector.broadcast %92 : vector<20x1xf32> to vector<20x20xf32>
    %94 = arith.mulf %89, %93 : vector<20x20xf32>
    %95 = vector.broadcast %78 : vector<1x64xf32> to vector<20x64xf32>
    %96 = arith.mulf %40, %95 : vector<20x64xf32>
    %cst_40 = arith.constant dense<0.000000e+00> : vector<20x64xf32>
    %97 = tpu.matmul %94, %96, %cst_40 {dimension_numbers = #tpu.dot_dimension_numbers<[1], [0], [0], [1], [0, 0, 1, 1], [], []>} : vector<20x20xf32>, vector<20x64xf32>, vector<20x64xf32> -> vector<20x64xf32>
    %cst_41 = arith.constant dense<0.000000e+00> : vector<20x64xf32>
    %98 = tpu.matmul %97, %41, %cst_41 {dimension_numbers = #tpu.dot_dimension_numbers<[1], [0], [0], [1], [0, 0, 1, 1], [], []>} : vector<20x64xf32>, vector<64x64xf32>, vector<20x64xf32> -> vector<20x64xf32>
    %99 = arith.addf %71, %98 : vector<20x64xf32>
    %c32_i32_42 = arith.constant 32 : i32
    %100 = vector.broadcast %c32_i32_42 : i32 to vector<1x64xi32>
    %101 = arith.cmpi sge, %42, %100 : vector<1x64xi32>
    %c48_i32 = arith.constant 48 : i32
    %102 = vector.broadcast %c48_i32 : i32 to vector<1x64xi32>
    %103 = arith.cmpi slt, %42, %102 : vector<1x64xi32>
    %104 = arith.andi %101, %103 : vector<1x64xi1>
    %105 = arith.extui %104 : vector<1x64xi1> to vector<1x64xi32>
    %106 = arith.sitofp %105 : vector<1x64xi32> to vector<1x64xf32>
    %107 = vector.broadcast %106 : vector<1x64xf32> to vector<20x64xf32>
    %108 = arith.mulf %30, %107 : vector<20x64xf32>
    %cst_43 = arith.constant dense<0.000000e+00> : vector<20x20xf32>
    %109 = tpu.matmul %108, %35, %cst_43 {dimension_numbers = #tpu.dot_dimension_numbers<[1], [1], [0], [0], [0, 0, 1, 0], [], []>} : vector<20x64xf32>, vector<20x64xf32>, vector<20x20xf32> -> vector<20x20xf32>
    %cst_44 = arith.constant 2.500000e-01 : f32
    %110 = vector.broadcast %cst_44 : f32 to vector<20x20xf32>
    %111 = arith.mulf %109, %110 : vector<20x20xf32>
    %112 = arith.addf %111, %1 : vector<20x20xf32>
    %cst_45 = arith.constant dense<0xFF800000> : vector<20xf32>
    %113 = vector.multi_reduction <maximumf>, %112, %cst_45 [1] : vector<20x20xf32> to vector<20xf32>
    %114 = vector.shape_cast %113 : vector<20xf32> to vector<20x1xf32>
    %115 = vector.broadcast %114 : vector<20x1xf32> to vector<20x20xf32>
    %116 = arith.subf %112, %115 : vector<20x20xf32>
    %117 = math.exp %116 : vector<20x20xf32>
    %cst_46 = arith.constant dense<0.000000e+00> : vector<20xf32>
    %118 = vector.multi_reduction <add>, %117, %cst_46 [1] : vector<20x20xf32> to vector<20xf32>
    %119 = vector.shape_cast %118 : vector<20xf32> to vector<20x1xf32>
    %120 = tpu.reciprocal %119 {approx = true} : vector<20x1xf32> -> vector<20x1xf32>
    %121 = vector.broadcast %120 : vector<20x1xf32> to vector<20x20xf32>
    %122 = arith.mulf %117, %121 : vector<20x20xf32>
    %123 = vector.broadcast %106 : vector<1x64xf32> to vector<20x64xf32>
    %124 = arith.mulf %40, %123 : vector<20x64xf32>
    %cst_47 = arith.constant dense<0.000000e+00> : vector<20x64xf32>
    %125 = tpu.matmul %122, %124, %cst_47 {dimension_numbers = #tpu.dot_dimension_numbers<[1], [0], [0], [1], [0, 0, 1, 1], [], []>} : vector<20x20xf32>, vector<20x64xf32>, vector<20x64xf32> -> vector<20x64xf32>
    %cst_48 = arith.constant dense<0.000000e+00> : vector<20x64xf32>
    %126 = tpu.matmul %125, %41, %cst_48 {dimension_numbers = #tpu.dot_dimension_numbers<[1], [0], [0], [1], [0, 0, 1, 1], [], []>} : vector<20x64xf32>, vector<64x64xf32>, vector<20x64xf32> -> vector<20x64xf32>
    %127 = arith.addf %99, %126 : vector<20x64xf32>
    %c48_i32_49 = arith.constant 48 : i32
    %128 = vector.broadcast %c48_i32_49 : i32 to vector<1x64xi32>
    %129 = arith.cmpi sge, %42, %128 : vector<1x64xi32>
    %c64_i32 = arith.constant 64 : i32
    %130 = vector.broadcast %c64_i32 : i32 to vector<1x64xi32>
    %131 = arith.cmpi slt, %42, %130 : vector<1x64xi32>
    %132 = arith.andi %129, %131 : vector<1x64xi1>
    %133 = arith.extui %132 : vector<1x64xi1> to vector<1x64xi32>
    %134 = arith.sitofp %133 : vector<1x64xi32> to vector<1x64xf32>
    %135 = vector.broadcast %134 : vector<1x64xf32> to vector<20x64xf32>
    %136 = arith.mulf %30, %135 : vector<20x64xf32>
    %cst_50 = arith.constant dense<0.000000e+00> : vector<20x20xf32>
    %137 = tpu.matmul %136, %35, %cst_50 {dimension_numbers = #tpu.dot_dimension_numbers<[1], [1], [0], [0], [0, 0, 1, 0], [], []>} : vector<20x64xf32>, vector<20x64xf32>, vector<20x20xf32> -> vector<20x20xf32>
    %cst_51 = arith.constant 2.500000e-01 : f32
    %138 = vector.broadcast %cst_51 : f32 to vector<20x20xf32>
    %139 = arith.mulf %137, %138 : vector<20x20xf32>
    %140 = arith.addf %139, %1 : vector<20x20xf32>
    %cst_52 = arith.constant dense<0xFF800000> : vector<20xf32>
    %141 = vector.multi_reduction <maximumf>, %140, %cst_52 [1] : vector<20x20xf32> to vector<20xf32>
    %142 = vector.shape_cast %141 : vector<20xf32> to vector<20x1xf32>
    %143 = vector.broadcast %142 : vector<20x1xf32> to vector<20x20xf32>
    %144 = arith.subf %140, %143 : vector<20x20xf32>
    %145 = math.exp %144 : vector<20x20xf32>
    %cst_53 = arith.constant dense<0.000000e+00> : vector<20xf32>
    %146 = vector.multi_reduction <add>, %145, %cst_53 [1] : vector<20x20xf32> to vector<20xf32>
    %147 = vector.shape_cast %146 : vector<20xf32> to vector<20x1xf32>
    %148 = tpu.reciprocal %147 {approx = true} : vector<20x1xf32> -> vector<20x1xf32>
    %149 = vector.broadcast %148 : vector<20x1xf32> to vector<20x20xf32>
    %150 = arith.mulf %145, %149 : vector<20x20xf32>
    %151 = vector.broadcast %134 : vector<1x64xf32> to vector<20x64xf32>
    %152 = arith.mulf %40, %151 : vector<20x64xf32>
    %cst_54 = arith.constant dense<0.000000e+00> : vector<20x64xf32>
    %153 = tpu.matmul %150, %152, %cst_54 {dimension_numbers = #tpu.dot_dimension_numbers<[1], [0], [0], [1], [0, 0, 1, 1], [], []>} : vector<20x20xf32>, vector<20x64xf32>, vector<20x64xf32> -> vector<20x64xf32>
    %cst_55 = arith.constant dense<0.000000e+00> : vector<20x64xf32>
    %154 = tpu.matmul %153, %41, %cst_55 {dimension_numbers = #tpu.dot_dimension_numbers<[1], [0], [0], [1], [0, 0, 1, 1], [], []>} : vector<20x64xf32>, vector<64x64xf32>, vector<20x64xf32> -> vector<20x64xf32>
    %155 = arith.addf %127, %154 : vector<20x64xf32>
    %156 = arith.addf %0, %155 : vector<20x64xf32>
    %c0_56 = arith.constant 0 : index
    %c0_57 = arith.constant 0 : index
    %157 = vector.load %arg11[%c0_56, %c0_57] : memref<1x64xf32, #tpu.memory_space<vmem>>, vector<1x64xf32>
    %158 = vector.broadcast %157 : vector<1x64xf32> to vector<20x64xf32>
    %159 = arith.addf %156, %158 : vector<20x64xf32>
    %c0_58 = arith.constant 0 : index
    %c0_59 = arith.constant 0 : index
    %160 = vector.load %arg12[%c0_58, %c0_59] : memref<1x64xf32, #tpu.memory_space<vmem>>, vector<1x64xf32>
    %c0_60 = arith.constant 0 : index
    %c0_61 = arith.constant 0 : index
    %161 = vector.load %arg13[%c0_60, %c0_61] : memref<1x64xf32, #tpu.memory_space<vmem>>, vector<1x64xf32>
    %cst_62 = arith.constant dense<0.000000e+00> : vector<20xf32>
    %162 = vector.multi_reduction <add>, %159, %cst_62 [1] : vector<20x64xf32> to vector<20xf32>
    %163 = vector.shape_cast %162 : vector<20xf32> to vector<20x1xf32>
    %cst_63 = arith.constant 6.400000e+01 : f32
    %164 = vector.broadcast %cst_63 : f32 to vector<20x1xf32>
    %165 = arith.divf %163, %164 : vector<20x1xf32>
    %166 = vector.broadcast %165 : vector<20x1xf32> to vector<20x64xf32>
    %167 = arith.subf %159, %166 : vector<20x64xf32>
    %168 = arith.mulf %167, %167 : vector<20x64xf32>
    %cst_64 = arith.constant dense<0.000000e+00> : vector<20xf32>
    %169 = vector.multi_reduction <add>, %168, %cst_64 [1] : vector<20x64xf32> to vector<20xf32>
    %170 = vector.shape_cast %169 : vector<20xf32> to vector<20x1xf32>
    %cst_65 = arith.constant 6.400000e+01 : f32
    %171 = vector.broadcast %cst_65 : f32 to vector<20x1xf32>
    %172 = arith.divf %170, %171 : vector<20x1xf32>
    %173 = vector.broadcast %165 : vector<20x1xf32> to vector<20x64xf32>
    %174 = arith.subf %159, %173 : vector<20x64xf32>
    %cst_66 = arith.constant 9.99999997E-7 : f32
    %175 = vector.broadcast %cst_66 : f32 to vector<20x1xf32>
    %176 = arith.addf %172, %175 : vector<20x1xf32>
    %177 = math.rsqrt %176 : vector<20x1xf32>
    %178 = vector.broadcast %177 : vector<20x1xf32> to vector<20x64xf32>
    %179 = arith.mulf %174, %178 : vector<20x64xf32>
    %180 = vector.broadcast %160 : vector<1x64xf32> to vector<20x64xf32>
    %181 = arith.mulf %179, %180 : vector<20x64xf32>
    %182 = vector.broadcast %161 : vector<1x64xf32> to vector<20x64xf32>
    %183 = arith.addf %181, %182 : vector<20x64xf32>
    %c0_67 = arith.constant 0 : index
    %c0_68 = arith.constant 0 : index
    %184 = vector.load %arg14[%c0_67, %c0_68] : memref<64x256xf32, #tpu.memory_space<vmem>>, vector<64x256xf32>
    %cst_69 = arith.constant dense<0.000000e+00> : vector<20x256xf32>
    %185 = tpu.matmul %183, %184, %cst_69 {dimension_numbers = #tpu.dot_dimension_numbers<[1], [0], [0], [1], [0, 0, 1, 1], [], []>} : vector<20x64xf32>, vector<64x256xf32>, vector<20x256xf32> -> vector<20x256xf32>
    %c0_70 = arith.constant 0 : index
    %c0_71 = arith.constant 0 : index
    %186 = vector.load %arg15[%c0_70, %c0_71] : memref<1x256xf32, #tpu.memory_space<vmem>>, vector<1x256xf32>
    %187 = vector.broadcast %186 : vector<1x256xf32> to vector<20x256xf32>
    %188 = arith.addf %185, %187 : vector<20x256xf32>
    %189 = arith.mulf %188, %188 : vector<20x256xf32>
    %190 = arith.mulf %188, %189 : vector<20x256xf32>
    %cst_72 = arith.constant 4.471500e-02 : f32
    %191 = vector.broadcast %cst_72 : f32 to vector<20x256xf32>
    %192 = arith.mulf %191, %190 : vector<20x256xf32>
    %193 = arith.addf %188, %192 : vector<20x256xf32>
    %cst_73 = arith.constant 0.797884583 : f32
    %194 = vector.broadcast %cst_73 : f32 to vector<20x256xf32>
    %195 = arith.mulf %194, %193 : vector<20x256xf32>
    %196 = math.tanh %195 : vector<20x256xf32>
    %cst_74 = arith.constant 1.000000e+00 : f32
    %197 = vector.broadcast %cst_74 : f32 to vector<20x256xf32>
    %198 = arith.addf %197, %196 : vector<20x256xf32>
    %cst_75 = arith.constant 5.000000e-01 : f32
    %199 = vector.broadcast %cst_75 : f32 to vector<20x256xf32>
    %200 = arith.mulf %199, %198 : vector<20x256xf32>
    %201 = arith.mulf %188, %200 : vector<20x256xf32>
    %c0_76 = arith.constant 0 : index
    %c0_77 = arith.constant 0 : index
    %202 = vector.load %arg16[%c0_76, %c0_77] : memref<256x64xf32, #tpu.memory_space<vmem>>, vector<256x64xf32>
    %cst_78 = arith.constant dense<0.000000e+00> : vector<20x64xf32>
    %203 = tpu.matmul %201, %202, %cst_78 {dimension_numbers = #tpu.dot_dimension_numbers<[1], [0], [0], [1], [0, 0, 1, 1], [], []>} : vector<20x256xf32>, vector<256x64xf32>, vector<20x64xf32> -> vector<20x64xf32>
    %c0_79 = arith.constant 0 : index
    %c0_80 = arith.constant 0 : index
    %204 = vector.load %arg17[%c0_79, %c0_80] : memref<1x64xf32, #tpu.memory_space<vmem>>, vector<1x64xf32>
    %205 = vector.broadcast %204 : vector<1x64xf32> to vector<20x64xf32>
    %206 = arith.addf %203, %205 : vector<20x64xf32>
    %207 = arith.addf %159, %206 : vector<20x64xf32>
    %c0_81 = arith.constant 0 : index
    %c0_82 = arith.constant 0 : index
    %208 = vector.load %arg18[%c0_81, %c0_82] : memref<20x64xf32, #tpu.memory_space<vmem>>, vector<20x64xf32>
    tpu.vector_store %arg18[%c0_81, %c0_82], %207 {strides = array<i32>} : memref<20x64xf32, #tpu.memory_space<vmem>>, vector<20x64xf32>,
    return
  }
}

module attributes {stable_mosaic.version = 11 : i64} {
  func.func @_lmmd_kernel(%arg0: memref<4x1024xf32, #tpu.memory_space<vmem>>, %arg1: memref<2x2xf32, #tpu.memory_space<vmem>>, %arg2: memref<2x2xf32, #tpu.memory_space<vmem>>, %arg3: memref<2x2xf32, #tpu.memory_space<vmem>>, %arg4: memref<1x1xf32, #tpu.memory_space<vmem>>) attributes {dimension_semantics = [], scalar_prefetch = 0 : i64, scratch_operands = 0 : i64, tpu.core_type = #tpu.core_type<tc>} {
    %c0 = arith.constant 0 : index
    %c0_0 = arith.constant 0 : index
    %0 = vector.load %arg0[%c0, %c0_0] : memref<4x1024xf32, #tpu.memory_space<vmem>>, vector<4x1024xf32>
    %1 = arith.mulf %0, %0 : vector<4x1024xf32>
    %cst = arith.constant dense<0.000000e+00> : vector<4xf32>
    %2 = vector.multi_reduction <add>, %1, %cst [1] : vector<4x1024xf32> to vector<4xf32>
    %3 = vector.shape_cast %2 : vector<4xf32> to vector<4x1xf32>
    %cst_1 = arith.constant dense<0.000000e+00> : vector<4x4xf32>
    %4 = tpu.matmul %0, %0, %cst_1 {dimension_numbers = #tpu.dot_dimension_numbers<[1], [1], [0], [0], [0, 0, 1, 0], [], []>} : vector<4x1024xf32>, vector<4x1024xf32>, vector<4x4xf32> -> vector<4x4xf32>
    %5 = tpu.transpose %3, [1, 0] : vector<4x1xf32> -> vector<1x4xf32>
    %6 = vector.broadcast %3 : vector<4x1xf32> to vector<4x4xf32>
    %7 = vector.broadcast %5 : vector<1x4xf32> to vector<4x4xf32>
    %8 = arith.addf %6, %7 : vector<4x4xf32>
    %cst_2 = arith.constant 2.000000e+00 : f32
    %9 = vector.broadcast %cst_2 : f32 to vector<4x4xf32>
    %10 = arith.mulf %9, %4 : vector<4x4xf32>
    %11 = arith.subf %8, %10 : vector<4x4xf32>
    %12 = vector.shape_cast %11 : vector<4x4xf32> to vector<1x4x4xf32>
    %cst_3 = arith.constant dense<0.000000e+00> : vector<1xf32>
    %13 = vector.multi_reduction <add>, %12, %cst_3 [1, 2] : vector<1x4x4xf32> to vector<1xf32>
    %14 = vector.shape_cast %13 : vector<1xf32> to vector<1x1x1xf32>
    %15 = vector.extract %14[0, 0, 0] : f32 from vector<1x1x1xf32>
    %cst_4 = arith.constant 1.200000e+01 : f32
    %16 = arith.divf %15, %cst_4 : f32
    %cst_5 = arith.constant 2.500000e-01 : f32
    %17 = arith.mulf %16, %cst_5 : f32
    %cst_6 = arith.constant 1.000000e+00 : f32
    %18 = arith.divf %cst_6, %17 : f32
    %cst_7 = arith.constant 0.000000e+00 : f32
    %19 = vector.broadcast %cst_7 : f32 to vector<4x4xf32>
    %cst_8 = arith.constant -1.000000e+00 : f32
    %20 = arith.mulf %cst_8, %18 : f32
    %21 = vector.broadcast %20 : f32 to vector<4x4xf32>
    %22 = arith.mulf %11, %21 : vector<4x4xf32>
    %23 = math.exp %22 : vector<4x4xf32>
    %24 = arith.addf %19, %23 : vector<4x4xf32>
    %cst_9 = arith.constant -5.000000e-01 : f32
    %25 = arith.mulf %cst_9, %18 : f32
    %26 = vector.broadcast %25 : f32 to vector<4x4xf32>
    %27 = arith.mulf %11, %26 : vector<4x4xf32>
    %28 = math.exp %27 : vector<4x4xf32>
    %29 = arith.addf %24, %28 : vector<4x4xf32>
    %cst_10 = arith.constant -2.500000e-01 : f32
    %30 = arith.mulf %cst_10, %18 : f32
    %31 = vector.broadcast %30 : f32 to vector<4x4xf32>
    %32 = arith.mulf %11, %31 : vector<4x4xf32>
    %33 = math.exp %32 : vector<4x4xf32>
    %34 = arith.addf %29, %33 : vector<4x4xf32>
    %cst_11 = arith.constant -1.250000e-01 : f32
    %35 = arith.mulf %cst_11, %18 : f32
    %36 = vector.broadcast %35 : f32 to vector<4x4xf32>
    %37 = arith.mulf %11, %36 : vector<4x4xf32>
    %38 = math.exp %37 : vector<4x4xf32>
    %39 = arith.addf %34, %38 : vector<4x4xf32>
    %cst_12 = arith.constant -6.250000e-02 : f32
    %40 = arith.mulf %cst_12, %18 : f32
    %41 = vector.broadcast %40 : f32 to vector<4x4xf32>
    %42 = arith.mulf %11, %41 : vector<4x4xf32>
    %43 = math.exp %42 : vector<4x4xf32>
    %44 = arith.addf %39, %43 : vector<4x4xf32>
    %45 = vector.extract_strided_slice %44 {offsets = [0, 0], sizes = [2, 2], strides = [1, 1]} : vector<4x4xf32> to vector<2x2xf32>
    %46 = vector.extract_strided_slice %44 {offsets = [2, 2], sizes = [2, 2], strides = [1, 1]} : vector<4x4xf32> to vector<2x2xf32>
    %47 = vector.extract_strided_slice %44 {offsets = [0, 2], sizes = [2, 2], strides = [1, 1]} : vector<4x4xf32> to vector<2x2xf32>
    %c0_13 = arith.constant 0 : index
    %c0_14 = arith.constant 0 : index
    %48 = vector.load %arg1[%c0_13, %c0_14] : memref<2x2xf32, #tpu.memory_space<vmem>>, vector<2x2xf32>
    %49 = arith.mulf %48, %45 : vector<2x2xf32>
    %c0_15 = arith.constant 0 : index
    %c0_16 = arith.constant 0 : index
    %50 = vector.load %arg2[%c0_15, %c0_16] : memref<2x2xf32, #tpu.memory_space<vmem>>, vector<2x2xf32>
    %51 = arith.mulf %50, %46 : vector<2x2xf32>
    %52 = arith.addf %49, %51 : vector<2x2xf32>
    %c0_17 = arith.constant 0 : index
    %c0_18 = arith.constant 0 : index
    %53 = vector.load %arg3[%c0_17, %c0_18] : memref<2x2xf32, #tpu.memory_space<vmem>>, vector<2x2xf32>
    %cst_19 = arith.constant 2.000000e+00 : f32
    %54 = vector.broadcast %cst_19 : f32 to vector<2x2xf32>
    %55 = arith.mulf %54, %53 : vector<2x2xf32>
    %56 = arith.mulf %55, %47 : vector<2x2xf32>
    %57 = arith.addf %52, %56 : vector<2x2xf32>
    %cst_20 = arith.constant dense<0.000000e+00> : vector<2xf32>
    %58 = vector.multi_reduction <add>, %57, %cst_20 [1] : vector<2x2xf32> to vector<2xf32>
    %59 = vector.shape_cast %58 : vector<2xf32> to vector<2x1xf32>
    %cst_21 = arith.constant dense<0.000000e+00> : vector<1xf32>
    %60 = vector.multi_reduction <add>, %59, %cst_21 [0] : vector<2x1xf32> to vector<1xf32>
    %61 = vector.shape_cast %60 : vector<1xf32> to vector<1x1xf32>
    %62 = arith.cmpf one, %44, %44 : vector<4x4xf32>
    %cst_22 = arith.constant 1.000000e+00 : f32
    %cst_23 = arith.constant 0.000000e+00 : f32
    %63 = vector.broadcast %cst_22 : f32 to vector<4x4xf32>
    %64 = vector.broadcast %cst_23 : f32 to vector<4x4xf32>
    %65 = arith.select %62, %63, %64 : vector<4x4xi1>, vector<4x4xf32>
    %66 = vector.shape_cast %65 : vector<4x4xf32> to vector<1x4x4xf32>
    %cst_24 = arith.constant dense<0xFF800000> : vector<1xf32>
    %67 = vector.multi_reduction <maximumf>, %66, %cst_24 [1, 2] : vector<1x4x4xf32> to vector<1xf32>
    %68 = vector.shape_cast %67 : vector<1xf32> to vector<1x1x1xf32>
    %69 = vector.extract %68[0, 0, 0] : f32 from vector<1x1x1xf32>
    %cst_25 = arith.constant 0.000000e+00 : f32
    %70 = arith.cmpf ogt, %69, %cst_25 : f32
    %cst_26 = arith.constant 0.000000e+00 : f32
    %71 = vector.broadcast %cst_26 : f32 to vector<1x1xf32>
    %72 = arith.select %70, %71, %61 : vector<1x1xf32>
    %c0_27 = arith.constant 0 : index
    %c0_28 = arith.constant 0 : index
    %73 = vector.load %arg4[%c0_27, %c0_28] : memref<1x1xf32, #tpu.memory_space<vmem>>, vector<1x1xf32>
    tpu.vector_store %arg4[%c0_27, %c0_28], %72 {strides = array<i32>} : memref<1x1xf32, #tpu.memory_space<vmem>>, vector<1x1xf32>,
    return
  }
}

</mosaic_0001>

<llo_original>
// kernel: tile.9
$region0: #{tile.9}
  %s0 = inlined_call_operand.vmem [shape: f32[4,5,64], index: 0, kind: input, shape index: {}]
  %s1 = inlined_call_operand.vmem [shape: f32[20,64], index: 1, kind: output, shape index: {}]
  %v2 = vld [vmem:[%s0] sm:$0x1f]
  %vm3 = vcmask 523264
  %4 = vst.msk [vmem:[%s1] sm:$0x1f] %vm3, %v2
  %s5 = scalar_lea.vmem %s0, 8
  %v6 = vld [vmem:[%s5] sm:$0x1f]
  %vm7 = vcmask 523264
  %s8 = scalar_lea.vmem %s1, 5
  %9 = vst.msk [vmem:[%s8] sm:$0x1f] %vm7, %v6
  %s10 = scalar_lea.vmem %s0, 16
  %v11 = vld [vmem:[%s10] sm:$0x1f]
  %vm12 = vcmask 523264
  %s13 = scalar_lea.vmem %s1, 10
  %14 = vst.msk [vmem:[%s13] sm:$0x1f] %vm12, %v11
  %s15 = scalar_lea.vmem %s0, 24
  %v16 = vld [vmem:[%s15] sm:$0x1f]
  %vm17 = vcmask 523264
  %s18 = scalar_lea.vmem %s1, 15
  %19 = vst.msk [vmem:[%s18] sm:$0x1f] %vm17, %v16

// kernel: dsan_forward.5
$region0: #{dsan_forward.5}
  #allocation0 [shape = 'u32[]', space=smem, size = 0x4, offset = 0x4, fixed_abs, tag = 'smem constant byte address 0x4 - core index']
  #allocation1 [shape = 'u32[144,128]{1,0:T(1,128)}', space=vmem, size = 0x12000, scoped, tag = 'internal scratch']
  %s0 = inlined_call_operand.vmem [shape: f32[20,768], index: 0, kind: input, shape index: {}]
  %s1 = inlined_call_operand.vmem [shape: f32[20,1], index: 1, kind: input, shape index: {}]
  %s2 = inlined_call_operand.vmem [shape: f32[20,64], index: 2, kind: input, shape index: {}]
  %s3 = inlined_call_operand.vmem [shape: f32[768,64], index: 3, kind: input, shape index: {}]
  %s4 = inlined_call_operand.vmem [shape: f32[1,64], index: 4, kind: input, shape index: {}]
  %s5 = inlined_call_operand.vmem [shape: f32[1,64], index: 5, kind: input, shape index: {}]
  %s6 = inlined_call_operand.vmem [shape: f32[20,64], index: 6, kind: output, shape index: {}]
  %s7 = sld [smem:[#allocation0]]
  $region34: #{dsan_forward.5} parent=0
    _
  %s9 = ssub.s32 1, %s7
  %s10 = scalar_select 0, %s9, %s7
  // Predicated region
  $region2: #{dsan_forward.5} parent=0 // pred_check
    _
  $region3: #{dsan_forward.5} parent=0 // pred_check_branch
    %12 = sbr.rel (0) target = $region5
  $region4: #{dsan_forward.5} parent=0 // pred_region
    _
  $region5: #{dsan_forward.5} parent=0 // pred_fallthru
    _
  // Predicated region
  $region6: #{dsan_forward.5} parent=0 // pred_check
    _
  $region7: #{dsan_forward.5} parent=0 // pred_check_branch
    %14 = sbr.rel (0) target = $region9
  $region8: #{dsan_forward.5} parent=0 // pred_region
    _
  $region9: #{dsan_forward.5} parent=0 // pred_fallthru
    _
  // Predicated region
  $region10: #{dsan_forward.5} parent=0 // pred_check
    _
  $region11: #{dsan_forward.5} parent=0 // pred_check_branch
    %16 = sbr.rel (0) target = $region13
  $region12: #{dsan_forward.5} parent=0 // pred_region
    _
  $region13: #{dsan_forward.5} parent=0 // pred_fallthru
    _
  // Predicated region
  $region14: #{dsan_forward.5} parent=0 // pred_check
    _
  $region15: #{dsan_forward.5} parent=0 // pred_check_branch
    %18 = sbr.rel (0) target = $region17
  $region16: #{dsan_forward.5} parent=0 // pred_region
    _
  $region17: #{dsan_forward.5} parent=0 // pred_fallthru
    _
  // Predicated region
  $region18: #{dsan_forward.5} parent=0 // pred_check
    _
  $region19: #{dsan_forward.5} parent=0 // pred_check_branch
    %20 = sbr.rel (0) target = $region21
  $region20: #{dsan_forward.5} parent=0 // pred_region
    _
  $region21: #{dsan_forward.5} parent=0 // pred_fallthru
    _
  // Predicated region
  $region22: #{dsan_forward.5} parent=0 // pred_check
    _
  $region23: #{dsan_forward.5} parent=0 // pred_check_branch
    %22 = sbr.rel (0) target = $region25
  $region24: #{dsan_forward.5} parent=0 // pred_region
    _
  $region25: #{dsan_forward.5} parent=0 // pred_fallthru
    _
  %v23 = vld [vmem:[%s0] sm:$0xff]
  %v24 = vld [vmem:[%s0 + $0x8] sm:$0xff]
  %v25 = vld [vmem:[%s0 + $0x10] sm:$0xff]
  %v26 = vld [vmem:[%s0 + $0x18] sm:$0xff]
  %v27 = vld [vmem:[%s0 + $0x20] sm:$0xff]
  %v28 = vld [vmem:[%s0 + $0x28] sm:$0xff]
  %v29 = vld [vmem:[%s0 + $0x30] sm:$0xff]
  %v30 = vld [vmem:[%s0 + $0x38] sm:$0xff]
  %v31 = vld [vmem:[%s0 + $0x40] sm:$0xff]
  %v32 = vld [vmem:[%s0 + $0x48] sm:$0xff]
  %v33 = vld [vmem:[%s0 + $0x50] sm:$0xff]
  %v34 = vld [vmem:[%s0 + $0x58] sm:$0xff]
  %v35 = vld [vmem:[%s0 + $0x60] sm:$0xf]
  %v36 = vld [vmem:[%s0 + $0x68] sm:$0xf]
  %v37 = vld [vmem:[%s0 + $0x70] sm:$0xf]
  %v38 = vld [vmem:[%s0 + $0x78] sm:$0xf]
  %v39 = vld [vmem:[%s0 + $0x80] sm:$0xf]
  %v40 = vld [vmem:[%s0 + $0x88] sm:$0xf]
  %v41 = vld [vmem:[%s3] sm:$0xff]
  %v42 = vld [vmem:[%s3 + $0x8] sm:$0xff]
  %v43 = vld [vmem:[%s3 + $0x10] sm:$0xff]
  %v44 = vld [vmem:[%s3 + $0x18] sm:$0xff]
  %v45 = vld [vmem:[%s3 + $0x20] sm:$0xff]
  %v46 = vld [vmem:[%s3 + $0x28] sm:$0xff]
  %v47 = vld [vmem:[%s3 + $0x30] sm:$0xff]
  %v48 = vld [vmem:[%s3 + $0x38] sm:$0xff]
  %v49 = vld [vmem:[%s3 + $0x40] sm:$0xff]
  %v50 = vld [vmem:[%s3 + $0x48] sm:$0xff]
  %v51 = vld [vmem:[%s3 + $0x50] sm:$0xff]
  %v52 = vld [vmem:[%s3 + $0x58] sm:$0xff]
  %v53 = vld [vmem:[%s3 + $0x60] sm:$0xff]
  %v54 = vld [vmem:[%s3 + $0x68] sm:$0xff]
  %v55 = vld [vmem:[%s3 + $0x70] sm:$0xff]
  %v56 = vld [vmem:[%s3 + $0x78] sm:$0xff]
  %v57 = vld [vmem:[%s3 + $0x80] sm:$0xff]
  %v58 = vld [vmem:[%s3 + $0x88] sm:$0xff]
  %v59 = vld [vmem:[%s3 + $0x90] sm:$0xff]
  %v60 = vld [vmem:[%s3 + $0x98] sm:$0xff]
  %v61 = vld [vmem:[%s3 + $0xa0] sm:$0xff]
  %v62 = vld [vmem:[%s3 + $0xa8] sm:$0xff]
  %v63 = vld [vmem:[%s3 + $0xb0] sm:$0xff]
  %v64 = vld [vmem:[%s3 + $0xb8] sm:$0xff]
  %v65 = vld [vmem:[%s3 + $0xc0] sm:$0xff]
  %v66 = vld [vmem:[%s3 + $0xc8] sm:$0xff]
  %v67 = vld [vmem:[%s3 + $0xd0] sm:$0xff]
  %v68 = vld [vmem:[%s3 + $0xd8] sm:$0xff]
  %v69 = vld [vmem:[%s3 + $0xe0] sm:$0xff]
  %v70 = vld [vmem:[%s3 + $0xe8] sm:$0xff]
  %v71 = vld [vmem:[%s3 + $0xf0] sm:$0xff]
  %v72 = vld [vmem:[%s3 + $0xf8] sm:$0xff]
  %v73 = vld [vmem:[%s3 + $0x100] sm:$0xff]
  %v74 = vld [vmem:[%s3 + $0x108] sm:$0xff]
  %v75 = vld [vmem:[%s3 + $0x110] sm:$0xff]
  %v76 = vld [vmem:[%s3 + $0x118] sm:$0xff]
  %v77 = vld [vmem:[%s3 + $0x120] sm:$0xff]
  %v78 = vld [vmem:[%s3 + $0x128] sm:$0xff]
  %v79 = vld [vmem:[%s3 + $0x130] sm:$0xff]
  %v80 = vld [vmem:[%s3 + $0x138] sm:$0xff]
  %v81 = vld [vmem:[%s3 + $0x140] sm:$0xff]
  %v82 = vld [vmem:[%s3 + $0x148] sm:$0xff]
  %v83 = vld [vmem:[%s3 + $0x150] sm:$0xff]
  %v84 = vld [vmem:[%s3 + $0x158] sm:$0xff]
  %v85 = vld [vmem:[%s3 + $0x160] sm:$0xff]
  %v86 = vld [vmem:[%s3 + $0x168] sm:$0xff]
  %v87 = vld [vmem:[%s3 + $0x170] sm:$0xff]
  %v88 = vld [vmem:[%s3 + $0x178] sm:$0xff]
  %v89 = vld [vmem:[%s3 + $0x180] sm:$0xff]
  %v90 = vld [vmem:[%s3 + $0x188] sm:$0xff]
  %v91 = vld [vmem:[%s3 + $0x190] sm:$0xff]
  %v92 = vld [vmem:[%s3 + $0x198] sm:$0xff]
  %v93 = vld [vmem:[%s3 + $0x1a0] sm:$0xff]
  %v94 = vld [vmem:[%s3 + $0x1a8] sm:$0xff]
  %v95 = vld [vmem:[%s3 + $0x1b0] sm:$0xff]
  %v96 = vld [vmem:[%s3 + $0x1b8] sm:$0xff]
  %v97 = vld [vmem:[%s3 + $0x1c0] sm:$0xff]
  %v98 = vld [vmem:[%s3 + $0x1c8] sm:$0xff]
  %v99 = vld [vmem:[%s3 + $0x1d0] sm:$0xff]
  %v100 = vld [vmem:[%s3 + $0x1d8] sm:$0xff]
  %v101 = vld [vmem:[%s3 + $0x1e0] sm:$0xff]
  %v102 = vld [vmem:[%s3 + $0x1e8] sm:$0xff]
  %v103 = vld [vmem:[%s3 + $0x1f0] sm:$0xff]
  %v104 = vld [vmem:[%s3 + $0x1f8] sm:$0xff]
  %v105 = vld [vmem:[%s3 + $0x200] sm:$0xff]
  %v106 = vld [vmem:[%s3 + $0x208] sm:$0xff]
  %v107 = vld [vmem:[%s3 + $0x210] sm:$0xff]
  %v108 = vld [vmem:[%s3 + $0x218] sm:$0xff]
  %v109 = vld [vmem:[%s3 + $0x220] sm:$0xff]
  %v110 = vld [vmem:[%s3 + $0x228] sm:$0xff]
  %v111 = vld [vmem:[%s3 + $0x230] sm:$0xff]
  %v112 = vld [vmem:[%s3 + $0x238] sm:$0xff]
  %v113 = vld [vmem:[%s3 + $0x240] sm:$0xff]
  %v114 = vld [vmem:[%s3 + $0x248] sm:$0xff]
  %v115 = vld [vmem:[%s3 + $0x250] sm:$0xff]
  %v116 = vld [vmem:[%s3 + $0x258] sm:$0xff]
  %v117 = vld [vmem:[%s3 + $0x260] sm:$0xff]
  %v118 = vld [vmem:[%s3 + $0x268] sm:$0xff]
  %v119 = vld [vmem:[%s3 + $0x270] sm:$0xff]
  %v120 = vld [vmem:[%s3 + $0x278] sm:$0xff]
  %v121 = vld [vmem:[%s3 + $0x280] sm:$0xff]
  %v122 = vld [vmem:[%s3 + $0x288] sm:$0xff]
  %v123 = vld [vmem:[%s3 + $0x290] sm:$0xff]
  %v124 = vld [vmem:[%s3 + $0x298] sm:$0xff]
  %v125 = vld [vmem:[%s3 + $0x2a0] sm:$0xff]
  %v126 = vld [vmem:[%s3 + $0x2a8] sm:$0xff]
  %v127 = vld [vmem:[%s3 + $0x2b0] sm:$0xff]
  %v128 = vld [vmem:[%s3 + $0x2b8] sm:$0xff]
  %v129 = vld [vmem:[%s3 + $0x2c0] sm:$0xff]
  %v130 = vld [vmem:[%s3 + $0x2c8] sm:$0xff]
  %v131 = vld [vmem:[%s3 + $0x2d0] sm:$0xff]
  %v132 = vld [vmem:[%s3 + $0x2d8] sm:$0xff]
  %v133 = vld [vmem:[%s3 + $0x2e0] sm:$0xff]
  %v134 = vld [vmem:[%s3 + $0x2e8] sm:$0xff]
  %v135 = vld [vmem:[%s3 + $0x2f0] sm:$0xff]
  %v136 = vld [vmem:[%s3 + $0x2f8] sm:$0xff]
  %v137 = vld [vmem:[%s4] sm:$0x1]
  %v139 = vlaneseq
  %v140 = vshrl.u32 %v139, 7
  %v141 = vsub.s32 0, %v140
  %v142 = vrot.slane %v137, %v141
  %144 = vmatprep.subr.mxu0 0.0
  %145 = vmatpush1.msra.mxu0 %v56
  %146 = vmatprep.subr.mxu0 0.0
  %147 = vmatpush1.msra.mxu0 %v55
  %148 = vmatprep.subr.mxu0 0.0
  %149 = vmatpush1.msra.mxu0 %v54
  %150 = vmatprep.subr.mxu0 0.0
  %151 = vmatpush1.msra.mxu0 %v53
  %152 = vmatprep.subr.mxu0 0.0
  %153 = vmatpush1.msra.mxu0 %v52
  %154 = vmatprep.subr.mxu0 0.0
  %155 = vmatpush1.msra.mxu0 %v51
  %156 = vmatprep.subr.mxu0 0.0
  %157 = vmatpush1.msra.mxu0 %v50
  %158 = vmatprep.subr.mxu0 0.0
  %159 = vmatpush1.msra.mxu0 %v49
  %160 = vmatprep.subr.mxu0 0.0
  %161 = vmatpush1.msra.mxu0 %v48
  %162 = vmatprep.subr.mxu0 0.0
  %163 = vmatpush1.msra.mxu0 %v47
  %164 = vmatprep.subr.mxu0 0.0
  %165 = vmatpush1.msra.mxu0 %v46
  %166 = vmatprep.subr.mxu0 0.0
  %167 = vmatpush1.msra.mxu0 %v45
  %168 = vmatprep.subr.mxu0 0.0
  %169 = vmatpush1.msra.mxu0 %v44
  %170 = vmatprep.subr.mxu0 0.0
  %171 = vmatpush1.msra.mxu0 %v43
  %172 = vmatprep.subr.mxu0 0.0
  %173 = vmatpush1.msra.mxu0 %v42
  %174 = vmatprep.subr.mxu0 0.0
  %175 = vmatpush1.msra.mxu0 %v41
  %176 = vmatprep.subr.mxu0 0.0
  %177 = vmatpush2.msra.mxu0 %v72
  %178 = vmatprep.subr.mxu0 0.0
  %179 = vmatpush2.msra.mxu0 %v71
  %180 = vmatprep.subr.mxu0 0.0
  %181 = vmatpush2.msra.mxu0 %v70
  %182 = vmatprep.subr.mxu0 0.0
  %183 = vmatpush2.msra.mxu0 %v69
  %184 = vmatprep.subr.mxu0 0.0
  %185 = vmatpush2.msra.mxu0 %v68
  %186 = vmatprep.subr.mxu0 0.0
  %187 = vmatpush2.msra.mxu0 %v67
  %188 = vmatprep.subr.mxu0 0.0
  %189 = vmatpush2.msra.mxu0 %v66
  %190 = vmatprep.subr.mxu0 0.0
  %191 = vmatpush2.msra.mxu0 %v65
  %192 = vmatprep.subr.mxu0 0.0
  %193 = vmatpush2.msra.mxu0 %v64
  %194 = vmatprep.subr.mxu0 0.0
  %195 = vmatpush2.msra.mxu0 %v63
  %196 = vmatprep.subr.mxu0 0.0
  %197 = vmatpush2.msra.mxu0 %v62
  %198 = vmatprep.subr.mxu0 0.0
  %199 = vmatpush2.msra.mxu0 %v61
  %200 = vmatprep.subr.mxu0 0.0
  %201 = vmatpush2.msra.mxu0 %v60
  %202 = vmatprep.subr.mxu0 0.0
  %203 = vmatpush2.msra.mxu0 %v59
  %204 = vmatprep.subr.mxu0 0.0
  %205 = vmatpush2.msra.mxu0 %v58
  %206 = vmatprep.subr.mxu0 0.0
  %207 = vmatpush2.msra.mxu0 %v57
  %208 = vmatprep.mubr.f32.mxu0 %v24
  %209 = vmatmul.mubr.f32.gmra.mxu0 %v23
  %v210 = vpop.f32.mrf.mxu0
  %v211 = vadd.f32 %v142, %v210
  %v212 = vpop.f32.mrf.mxu0
  %213 = vmatprep.mubr.f32.mxu0 %v30
  %214 = vmatmul.mubr.f32.gmra.mxu0 %v29
  %v215 = vpop.f32.mrf.mxu0
  %v216 = vadd.f32 %v142, %v215
  %v217 = vpop.f32.mrf.mxu0
  %218 = vmatprep.mubr.f32.mxu0 %v36
  %219 = vmatmul.mubr.f32.gmra.mxu0 %v35
  %v220 = vpop.f32.mrf.mxu0
  %v221 = vadd.f32 %v142, %v220
  %v222 = vpop.f32.mrf.mxu0
  %223 = vdwg.mxu0
  %224 = vmatprep.subr.mxu0 0.0
  %225 = vmatpush1.msra.mxu0 %v88
  %226 = vmatprep.subr.mxu0 0.0
  %227 = vmatpush1.msra.mxu0 %v87
  %228 = vmatprep.subr.mxu0 0.0
  %229 = vmatpush1.msra.mxu0 %v86
  %230 = vmatprep.subr.mxu0 0.0
  %231 = vmatpush1.msra.mxu0 %v85
  %232 = vmatprep.subr.mxu0 0.0
  %233 = vmatpush1.msra.mxu0 %v84
  %234 = vmatprep.subr.mxu0 0.0
  %235 = vmatpush1.msra.mxu0 %v83
  %236 = vmatprep.subr.mxu0 0.0
  %237 = vmatpush1.msra.mxu0 %v82
  %238 = vmatprep.subr.mxu0 0.0
  %239 = vmatpush1.msra.mxu0 %v81
  %240 = vmatprep.subr.mxu0 0.0
  %241 = vmatpush1.msra.mxu0 %v80
  %242 = vmatprep.subr.mxu0 0.0
  %243 = vmatpush1.msra.mxu0 %v79
  %244 = vmatprep.subr.mxu0 0.0
  %245 = vmatpush1.msra.mxu0 %v78
  %246 = vmatprep.subr.mxu0 0.0
  %247 = vmatpush1.msra.mxu0 %v77
  %248 = vmatprep.subr.mxu0 0.0
  %249 = vmatpush1.msra.mxu0 %v76
  %250 = vmatprep.subr.mxu0 0.0
  %251 = vmatpush1.msra.mxu0 %v75
  %252 = vmatprep.subr.mxu0 0.0
  %253 = vmatpush1.msra.mxu0 %v74
  %254 = vmatprep.subr.mxu0 0.0
  %255 = vmatpush1.msra.mxu0 %v73
  %256 = vmatprep.subr.mxu0 0.0
  %257 = vmatpush2.msra.mxu0 %v104
  %258 = vmatprep.subr.mxu0 0.0
  %259 = vmatpush2.msra.mxu0 %v103
  %260 = vmatprep.subr.mxu0 0.0
  %261 = vmatpush2.msra.mxu0 %v102
  %262 = vmatprep.subr.mxu0 0.0
  %263 = vmatpush2.msra.mxu0 %v101
  %264 = vmatprep.subr.mxu0 0.0
  %265 = vmatpush2.msra.mxu0 %v100
  %266 = vmatprep.subr.mxu0 0.0
  %267 = vmatpush2.msra.mxu0 %v99
  %268 = vmatprep.subr.mxu0 0.0
  %269 = vmatpush2.msra.mxu0 %v98
  %270 = vmatprep.subr.mxu0 0.0
  %271 = vmatpush2.msra.mxu0 %v97
  %272 = vmatprep.subr.mxu0 0.0
  %273 = vmatpush2.msra.mxu0 %v96
  %274 = vmatprep.subr.mxu0 0.0
  %275 = vmatpush2.msra.mxu0 %v95
  %276 = vmatprep.subr.mxu0 0.0
  %277 = vmatpush2.msra.mxu0 %v94
  %278 = vmatprep.subr.mxu0 0.0
  %279 = vmatpush2.msra.mxu0 %v93
  %280 = vmatprep.subr.mxu0 0.0
  %281 = vmatpush2.msra.mxu0 %v92
  %282 = vmatprep.subr.mxu0 0.0
  %283 = vmatpush2.msra.mxu0 %v91
  %284 = vmatprep.subr.mxu0 0.0
  %285 = vmatpush2.msra.mxu0 %v90
  %286 = vmatprep.subr.mxu0 0.0
  %287 = vmatpush2.msra.mxu0 %v89
  %288 = vmatprep.mubr.f32.mxu0 %v26
  %289 = vmatmul.mubr.f32.gmra.mxu0 %v25
  %v290 = vpop.f32.mrf.mxu0
  %v291 = vadd.f32 %v211, %v290
  %v292 = vpop.f32.mrf.mxu0
  %293 = vmatprep.mubr.f32.mxu0 %v32
  %294 = vmatmul.mubr.f32.gmra.mxu0 %v31
  %v295 = vpop.f32.mrf.mxu0
  %v296 = vadd.f32 %v216, %v295
  %v297 = vpop.f32.mrf.mxu0
  %298 = vmatprep.mubr.f32.mxu0 %v38
  %299 = vmatmul.mubr.f32.gmra.mxu0 %v37
  %v300 = vpop.f32.mrf.mxu0
  %v301 = vadd.f32 %v221, %v300
  %v302 = vpop.f32.mrf.mxu0
  %303 = vdwg.mxu0
  %304 = vmatprep.subr.mxu0 0.0
  %305 = vmatpush1.msra.mxu0 %v120
  %306 = vmatprep.subr.mxu0 0.0
  %307 = vmatpush1.msra.mxu0 %v119
  %308 = vmatprep.subr.mxu0 0.0
  %309 = vmatpush1.msra.mxu0 %v118
  %310 = vmatprep.subr.mxu0 0.0
  %311 = vmatpush1.msra.mxu0 %v117
  %312 = vmatprep.subr.mxu0 0.0
  %313 = vmatpush1.msra.mxu0 %v116
  %314 = vmatprep.subr.mxu0 0.0
  %315 = vmatpush1.msra.mxu0 %v115
  %316 = vmatprep.subr.mxu0 0.0
  %317 = vmatpush1.msra.mxu0 %v114
  %318 = vmatprep.subr.mxu0 0.0
  %319 = vmatpush1.msra.mxu0 %v113
  %320 = vmatprep.subr.mxu0 0.0
  %321 = vmatpush1.msra.mxu0 %v112
  %322 = vmatprep.subr.mxu0 0.0
  %323 = vmatpush1.msra.mxu0 %v111
  %324 = vmatprep.subr.mxu0 0.0
  %325 = vmatpush1.msra.mxu0 %v110
  %326 = vmatprep.subr.mxu0 0.0
  %327 = vmatpush1.msra.mxu0 %v109
  %328 = vmatprep.subr.mxu0 0.0
  %329 = vmatpush1.msra.mxu0 %v108
  %330 = vmatprep.subr.mxu0 0.0
  %331 = vmatpush1.msra.mxu0 %v107
  %332 = vmatprep.subr.mxu0 0.0
  %333 = vmatpush1.msra.mxu0 %v106
  %334 = vmatprep.subr.mxu0 0.0
  %335 = vmatpush1.msra.mxu0 %v105
  %336 = vmatprep.subr.mxu0 0.0
  %337 = vmatpush2.msra.mxu0 %v136
  %338 = vmatprep.subr.mxu0 0.0
  %339 = vmatpush2.msra.mxu0 %v135
  %340 = vmatprep.subr.mxu0 0.0
  %341 = vmatpush2.msra.mxu0 %v134
  %342 = vmatprep.subr.mxu0 0.0
  %343 = vmatpush2.msra.mxu0 %v133
  %344 = vmatprep.subr.mxu0 0.0
  %345 = vmatpush2.msra.mxu0 %v132
  %346 = vmatprep.subr.mxu0 0.0
  %347 = vmatpush2.msra.mxu0 %v131
  %348 = vmatprep.subr.mxu0 0.0
  %349 = vmatpush2.msra.mxu0 %v130
  %350 = vmatprep.subr.mxu0 0.0
  %351 = vmatpush2.msra.mxu0 %v129
  %352 = vmatprep.subr.mxu0 0.0
  %353 = vmatpush2.msra.mxu0 %v128
  %354 = vmatprep.subr.mxu0 0.0
  %355 = vmatpush2.msra.mxu0 %v127
  %356 = vmatprep.subr.mxu0 0.0
  %357 = vmatpush2.msra.mxu0 %v126
  %358 = vmatprep.subr.mxu0 0.0
  %359 = vmatpush2.msra.mxu0 %v125
  %360 = vmatprep.subr.mxu0 0.0
  %361 = vmatpush2.msra.mxu0 %v124
  %362 = vmatprep.subr.mxu0 0.0
  %363 = vmatpush2.msra.mxu0 %v123
  %364 = vmatprep.subr.mxu0 0.0
  %365 = vmatpush2.msra.mxu0 %v122
  %366 = vmatprep.subr.mxu0 0.0
  %367 = vmatpush2.msra.mxu0 %v121
  %368 = vmatprep.mubr.f32.mxu0 %v28
  %369 = vmatmul.mubr.f32.gmra.mxu0 %v27
  %v370 = vpop.f32.mrf.mxu0
  %v371 = vadd.f32 %v291, %v370
  %v372 = vpop.f32.mrf.mxu0
  %373 = vmatprep.mubr.f32.mxu0 %v34
  %374 = vmatmul.mubr.f32.gmra.mxu0 %v33
  %v375 = vpop.f32.mrf.mxu0
  %v376 = vadd.f32 %v296, %v375
  %v377 = vpop.f32.mrf.mxu0
  %378 = vmatprep.mubr.f32.mxu0 %v40
  %379 = vmatmul.mubr.f32.gmra.mxu0 %v39
  %v380 = vpop.f32.mrf.mxu0
  %v381 = vadd.f32 %v301, %v380
  %v382 = vpop.f32.mrf.mxu0
  %383 = vdwg.mxu0
  %v384 = vld [vmem:[%s1] sm:$0xff]
  %v385 = vld [vmem:[%s1 + $0x8] sm:$0xff]
  %v386 = vld [vmem:[%s1 + $0x10] sm:$0xf]
  %vm387 = vcmp.gt.f32.partialorder %v384, 0.5
  %vm388 = vcmp.gt.f32.partialorder %v385, 0.5
  %vm389 = vcmp.gt.f32.partialorder %v386, 0.5
  %v390 = vld [vmem:[%s5] sm:$0x1]
  %v391 = vsel %vm387, 1, 0
  %v392 = vsel %vm388, 1, 0
  %v393 = vsel %vm389, 1, 0
  %394 = vset.pattern.permute.xlu0 0
  %395 = vperm.xlu0 %394, %v391
  %v396 = vpop.permute.xlu0 %395
  %397 = vset.pattern.permute.xlu0 0
  %398 = vperm.xlu0 %397, %v392
  %v399 = vpop.permute.xlu0 %398
  %400 = vset.pattern.permute.xlu0 0
  %401 = vperm.xlu0 %400, %v393
  %v402 = vpop.permute.xlu0 %401
  %vm403 = vcmp.eq.s32.totalorder %v396, 1
  %vm404 = vcmp.eq.s32.totalorder %v399, 1
  %vm405 = vcmp.eq.s32.totalorder %v402, 1
  %v407 = vlaneseq
  %v408 = vshrl.u32 %v407, 7
  %v409 = vsub.s32 0, %v408
  %v410 = vrot.slane %v390, %v409
  %v412 = vsel %vm403, %v410, %v371
  %v413 = vsel %vm404, %v410, %v376
  %v414 = vsel %vm405, %v410, %v381
  %v415 = vld [vmem:[%s2] sm:$0xff]
  %v416 = vld [vmem:[%s2 + $0x8] sm:$0xff]
  %v417 = vld [vmem:[%s2 + $0x10] sm:$0xf]
  %v418 = vadd.f32 %v412, %v415
  %v419 = vadd.f32 %v413, %v416
  %v420 = vadd.f32 %v414, %v417
  %vm421 = vcmask 523264
  %422 = vst.msk [vmem:[%s6] sm:$0xff] %vm421, %v418
  %423 = vst.msk [vmem:[%s6 + $0x8] sm:$0xff] %vm421, %v419
  %vm424 = vcmask 519168
  %425 = vst.msk [vmem:[%s6 + $0x10] sm:$0xf] %vm424, %v420
  // Predicated region
  $region26: #{dsan_forward.5} parent=0 // pred_check
    _
  $region27: #{dsan_forward.5} parent=0 // pred_check_branch
    %427 = sbr.rel (0) target = $region29
  $region28: #{dsan_forward.5} parent=0 // pred_region
    _
  $region29: #{dsan_forward.5} parent=0 // pred_fallthru
    _
  // Predicated region
  $region30: #{dsan_forward.5} parent=0 // pred_check
    _
  $region31: #{dsan_forward.5} parent=0 // pred_check_branch
    %429 = sbr.rel (0) target = $region33
  $region32: #{dsan_forward.5} parent=0 // pred_region
    _
  $region33: #{dsan_forward.5} parent=0 // pred_fallthru
    _

// kernel: dsan_forward.8
$region0: #{dsan_forward.8}
  #allocation0 [shape = 'u32[]', space=smem, size = 0x4, offset = 0x4, fixed_abs, tag = 'smem constant byte address 0x4 - core index']
  #allocation1 [shape = 'u32[144,128]{1,0:T(1,128)}', space=vmem, size = 0x12000, scoped, tag = 'internal scratch']
  %s0 = inlined_call_operand.vmem [shape: f32[4,64], index: 0, kind: input, shape index: {}]
  %s1 = inlined_call_operand.vmem [shape: f32[1,64], index: 1, kind: input, shape index: {}]
  %s2 = inlined_call_operand.vmem [shape: f32[1,64], index: 2, kind: input, shape index: {}]
  %s3 = inlined_call_operand.vmem [shape: f32[64,1024], index: 3, kind: input, shape index: {}]
  %s4 = inlined_call_operand.vmem [shape: f32[1,1024], index: 4, kind: input, shape index: {}]
  %s5 = inlined_call_operand.vmem [shape: f32[1024,128], index: 5, kind: input, shape index: {}]
  %s6 = inlined_call_operand.vmem [shape: f32[1,128], index: 6, kind: input, shape index: {}]
  %s7 = inlined_call_operand.vmem [shape: f32[4,1024], index: 7, kind: output, shape index: {0}]
  %s8 = inlined_call_operand.vmem [shape: f32[4,128], index: 8, kind: output, shape index: {1}]
  %s9 = inlined_call_operand.vmem [shape: f32[4,128], index: 9, kind: output, shape index: {2}]
  %10 = xla_tuple %s7, %s8, %s9
  %s11 = sld [smem:[#allocation0]]
  $region54: #{dsan_forward.8} parent=0
    _
  %s13 = ssub.s32 1, %s11
  %s14 = scalar_select 0, %s13, %s11
  // Predicated region
  $region2: #{dsan_forward.8} parent=0 // pred_check
    _
  $region3: #{dsan_forward.8} parent=0 // pred_check_branch
    %16 = sbr.rel (0) target = $region5
  $region4: #{dsan_forward.8} parent=0 // pred_region
    _
  $region5: #{dsan_forward.8} parent=0 // pred_fallthru
    _
  // Predicated region
  $region6: #{dsan_forward.8} parent=0 // pred_check
    _
  $region7: #{dsan_forward.8} parent=0 // pred_check_branch
    %18 = sbr.rel (0) target = $region9
  $region8: #{dsan_forward.8} parent=0 // pred_region
    _
  $region9: #{dsan_forward.8} parent=0 // pred_fallthru
    _
  // Predicated region
  $region10: #{dsan_forward.8} parent=0 // pred_check
    _
  $region11: #{dsan_forward.8} parent=0 // pred_check_branch
    %20 = sbr.rel (0) target = $region13
  $region12: #{dsan_forward.8} parent=0 // pred_region
    _
  $region13: #{dsan_forward.8} parent=0 // pred_fallthru
    _
  // Predicated region
  $region14: #{dsan_forward.8} parent=0 // pred_check
    _
  $region15: #{dsan_forward.8} parent=0 // pred_check_branch
    %22 = sbr.rel (0) target = $region17
  $region16: #{dsan_forward.8} parent=0 // pred_region
    _
  $region17: #{dsan_forward.8} parent=0 // pred_fallthru
    _
  // Predicated region
  $region18: #{dsan_forward.8} parent=0 // pred_check
    _
  $region19: #{dsan_forward.8} parent=0 // pred_check_branch
    %24 = sbr.rel (0) target = $region21
  $region20: #{dsan_forward.8} parent=0 // pred_region
    _
  $region21: #{dsan_forward.8} parent=0 // pred_fallthru
    _
  // Predicated region
  $region22: #{dsan_forward.8} parent=0 // pred_check
    _
  $region23: #{dsan_forward.8} parent=0 // pred_check_branch
    %26 = sbr.rel (0) target = $region25
  $region24: #{dsan_forward.8} parent=0 // pred_region
    _
  $region25: #{dsan_forward.8} parent=0 // pred_fallthru
    _
  // Predicated region
  $region26: #{dsan_forward.8} parent=0 // pred_check
    _
  $region27: #{dsan_forward.8} parent=0 // pred_check_branch
    %28 = sbr.rel (0) target = $region29
  $region28: #{dsan_forward.8} parent=0 // pred_region
    _
  $region29: #{dsan_forward.8} parent=0 // pred_fallthru
    _
  %v29 = vld [vmem:[%s0] sm:$0xf]
  %v30 = vld [vmem:[%s1] sm:$0x1]
  %v31 = vld [vmem:[%s2] sm:$0x1]
  %vm32 = vcmask 519168
  %v33 = vsel %vm32, %v29, 0.0
  %34 = vadd.xlane.f32.xlu0 %v33
  %v35 = vpop.xlane.xlu0 %34
  %v36 = vrcp.pop 64.0
  %v37 = vmul.f32 %v35, %v36
  %v38 = vsub.f32 %v29, %v37
  %v39 = vmul.f32 %v38, %v38
  %v40 = vsel %vm32, %v39, 0.0
  %41 = vadd.xlane.f32.xlu0 %v40
  %v42 = vpop.xlane.xlu0 %41
  %v43 = vmul.f32 %v42, %v36
  %v44 = vadd.f32 %v43, 1e-06
  %v45 = vrsqrt.pop %v44
  %v46 = vmul.f32 %v38, %v45
  %v48 = vlaneseq
  %v49 = vshrl.u32 %v48, 7
  %v50 = vsub.s32 0, %v49
  %v51 = vrot.slane %v30, %v50
  %v53 = vmul.f32 %v46, %v51
  %v55 = vlaneseq
  %v56 = vshrl.u32 %v55, 7
  %v57 = vsub.s32 0, %v56
  %v58 = vrot.slane %v31, %v57
  %v60 = vadd.f32 %v53, %v58
  %v61 = vld [vmem:[%s3] sm:$0xff]
  %v62 = vld [vmem:[%s3 + $0x8] sm:$0xff]
  %v63 = vld [vmem:[%s3 + $0x10] sm:$0xff]
  %v64 = vld [vmem:[%s3 + $0x18] sm:$0xff]
  %v65 = vld [vmem:[%s3 + $0x20] sm:$0xff]
  %v66 = vld [vmem:[%s3 + $0x28] sm:$0xff]
  %v67 = vld [vmem:[%s3 + $0x30] sm:$0xff]
  %v68 = vld [vmem:[%s3 + $0x38] sm:$0xff]
  %v69 = vld [vmem:[%s3 + $0x40] sm:$0xff]
  %v70 = vld [vmem:[%s3 + $0x48] sm:$0xff]
  %v71 = vld [vmem:[%s3 + $0x50] sm:$0xff]
  %v72 = vld [vmem:[%s3 + $0x58] sm:$0xff]
  %v73 = vld [vmem:[%s3 + $0x60] sm:$0xff]
  %v74 = vld [vmem:[%s3 + $0x68] sm:$0xff]
  %v75 = vld [vmem:[%s3 + $0x70] sm:$0xff]
  %v76 = vld [vmem:[%s3 + $0x78] sm:$0xff]
  %v77 = vld [vmem:[%s3 + $0x80] sm:$0xff]
  %v78 = vld [vmem:[%s3 + $0x88] sm:$0xff]
  %v79 = vld [vmem:[%s3 + $0x90] sm:$0xff]
  %v80 = vld [vmem:[%s3 + $0x98] sm:$0xff]
  %v81 = vld [vmem:[%s3 + $0xa0] sm:$0xff]
  %v82 = vld [vmem:[%s3 + $0xa8] sm:$0xff]
  %v83 = vld [vmem:[%s3 + $0xb0] sm:$0xff]
  %v84 = vld [vmem:[%s3 + $0xb8] sm:$0xff]
  %v85 = vld [vmem:[%s3 + $0xc0] sm:$0xff]
  %v86 = vld [vmem:[%s3 + $0xc8] sm:$0xff]
  %v87 = vld [vmem:[%s3 + $0xd0] sm:$0xff]
  %v88 = vld [vmem:[%s3 + $0xd8] sm:$0xff]
  %v89 = vld [vmem:[%s3 + $0xe0] sm:$0xff]
  %v90 = vld [vmem:[%s3 + $0xe8] sm:$0xff]
  %v91 = vld [vmem:[%s3 + $0xf0] sm:$0xff]
  %v92 = vld [vmem:[%s3 + $0xf8] sm:$0xff]
  %v93 = vld [vmem:[%s3 + $0x100] sm:$0xff]
  %v94 = vld [vmem:[%s3 + $0x108] sm:$0xff]
  %v95 = vld [vmem:[%s3 + $0x110] sm:$0xff]
  %v96 = vld [vmem:[%s3 + $0x118] sm:$0xff]
  %v97 = vld [vmem:[%s3 + $0x120] sm:$0xff]
  %v98 = vld [vmem:[%s3 + $0x128] sm:$0xff]
  %v99 = vld [vmem:[%s3 + $0x130] sm:$0xff]
  %v100 = vld [vmem:[%s3 + $0x138] sm:$0xff]
  %v101 = vld [vmem:[%s3 + $0x140] sm:$0xff]
  %v102 = vld [vmem:[%s3 + $0x148] sm:$0xff]
  %v103 = vld [vmem:[%s3 + $0x150] sm:$0xff]
  %v104 = vld [vmem:[%s3 + $0x158] sm:$0xff]
  %v105 = vld [vmem:[%s3 + $0x160] sm:$0xff]
  %v106 = vld [vmem:[%s3 + $0x168] sm:$0xff]
  %v107 = vld [vmem:[%s3 + $0x170] sm:$0xff]
  %v108 = vld [vmem:[%s3 + $0x178] sm:$0xff]
  %v109 = vld [vmem:[%s3 + $0x180] sm:$0xff]
  %v110 = vld [vmem:[%s3 + $0x188] sm:$0xff]
  %v111 = vld [vmem:[%s3 + $0x190] sm:$0xff]
  %v112 = vld [vmem:[%s3 + $0x198] sm:$0xff]
  %v113 = vld [vmem:[%s3 + $0x1a0] sm:$0xff]
  %v114 = vld [vmem:[%s3 + $0x1a8] sm:$0xff]
  %v115 = vld [vmem:[%s3 + $0x1b0] sm:$0xff]
  %v116 = vld [vmem:[%s3 + $0x1b8] sm:$0xff]
  %v117 = vld [vmem:[%s3 + $0x1c0] sm:$0xff]
  %v118 = vld [vmem:[%s3 + $0x1c8] sm:$0xff]
  %v119 = vld [vmem:[%s3 + $0x1d0] sm:$0xff]
  %v120 = vld [vmem:[%s3 + $0x1d8] sm:$0xff]
  %v121 = vld [vmem:[%s3 + $0x1e0] sm:$0xff]
  %v122 = vld [vmem:[%s3 + $0x1e8] sm:$0xff]
  %v123 = vld [vmem:[%s3 + $0x1f0] sm:$0xff]
  %v124 = vld [vmem:[%s3 + $0x1f8] sm:$0xff]
  %v125 = vld [vmem:[%s4] sm:$0xff]
  %v127 = vlaneseq
  %v128 = vshrl.u32 %v127, 7
  %v129 = vsub.s32 0, %v128
  %v130 = vrot.slane %v125, %v129
  %v131 = vlaneseq
  %v132 = vshrl.u32 %v131, 7
  %v133 = vsub.s32 1, %v132
  %v134 = vrot.slane %v125, %v133
  %v135 = vlaneseq
  %v136 = vshrl.u32 %v135, 7
  %v137 = vsub.s32 2, %v136
  %v138 = vrot.slane %v125, %v137
  %v139 = vlaneseq
  %v140 = vshrl.u32 %v139, 7
  %v141 = vsub.s32 3, %v140
  %v142 = vrot.slane %v125, %v141
  %v143 = vlaneseq
  %v144 = vshrl.u32 %v143, 7
  %v145 = vsub.s32 4, %v144
  %v146 = vrot.slane %v125, %v145
  %v147 = vlaneseq
  %v148 = vshrl.u32 %v147, 7
  %v149 = vsub.s32 5, %v148
  %v150 = vrot.slane %v125, %v149
  %v151 = vlaneseq
  %v152 = vshrl.u32 %v151, 7
  %v153 = vsub.s32 6, %v152
  %v154 = vrot.slane %v125, %v153
  %v155 = vlaneseq
  %v156 = vshrl.u32 %v155, 7
  %v157 = vsub.s32 7, %v156
  %v158 = vrot.slane %v125, %v157
  %vm167 = vcmask 523264
  %v169 = vsel %vm167, %v60, 0
  %171 = vmatprep.subr.mxu0 0.0
  %172 = vmatpush1.msra.mxu0 0.0
  %173 = vmatprep.subr.mxu0 0.0
  %174 = vmatpush1.msra.mxu0 0.0
  %175 = vmatprep.subr.mxu0 0.0
  %176 = vmatpush1.msra.mxu0 0.0
  %177 = vmatprep.subr.mxu0 0.0
  %178 = vmatpush1.msra.mxu0 0.0
  %179 = vmatprep.subr.mxu0 0.0
  %180 = vmatpush1.msra.mxu0 0.0
  %181 = vmatprep.subr.mxu0 0.0
  %182 = vmatpush1.msra.mxu0 0.0
  %183 = vmatprep.subr.mxu0 0.0
  %184 = vmatpush1.msra.mxu0 0.0
  %185 = vmatprep.subr.mxu0 0.0
  %186 = vmatpush1.msra.mxu0 0.0
  %187 = vmatprep.subr.mxu0 %v118
  %188 = vmatpush1.msra.mxu0 %v117
  %189 = vmatprep.subr.mxu0 %v110
  %190 = vmatpush1.msra.mxu0 %v109
  %191 = vmatprep.subr.mxu0 %v102
  %192 = vmatpush1.msra.mxu0 %v101
  %193 = vmatprep.subr.mxu0 %v94
  %194 = vmatpush1.msra.mxu0 %v93
  %195 = vmatprep.subr.mxu0 %v86
  %196 = vmatpush1.msra.mxu0 %v85
  %197 = vmatprep.subr.mxu0 %v78
  %198 = vmatpush1.msra.mxu0 %v77
  %199 = vmatprep.subr.mxu0 %v70
  %200 = vmatpush1.msra.mxu0 %v69
  %201 = vmatprep.subr.mxu0 %v62
  %202 = vmatpush1.msra.mxu0 %v61
  %203 = vmatprep.subr.mxu0 0.0
  %204 = vmatpush2.msra.mxu0 0.0
  %205 = vmatprep.subr.mxu0 0.0
  %206 = vmatpush2.msra.mxu0 0.0
  %207 = vmatprep.subr.mxu0 0.0
  %208 = vmatpush2.msra.mxu0 0.0
  %209 = vmatprep.subr.mxu0 0.0
  %210 = vmatpush2.msra.mxu0 0.0
  %211 = vmatprep.subr.mxu0 0.0
  %212 = vmatpush2.msra.mxu0 0.0
  %213 = vmatprep.subr.mxu0 0.0
  %214 = vmatpush2.msra.mxu0 0.0
  %215 = vmatprep.subr.mxu0 0.0
  %216 = vmatpush2.msra.mxu0 0.0
  %217 = vmatprep.subr.mxu0 0.0
  %218 = vmatpush2.msra.mxu0 0.0
  %219 = vmatprep.subr.mxu0 0.0
  %220 = vmatpush2.msra.mxu0 0.0
  %221 = vmatprep.subr.mxu0 0.0
  %222 = vmatpush2.msra.mxu0 0.0
  %223 = vmatprep.subr.mxu0 0.0
  %224 = vmatpush2.msra.mxu0 0.0
  %225 = vmatprep.subr.mxu0 0.0
  %226 = vmatpush2.msra.mxu0 0.0
  %227 = vmatprep.subr.mxu0 0.0
  %228 = vmatpush2.msra.mxu0 0.0
  %229 = vmatprep.subr.mxu0 0.0
  %230 = vmatpush2.msra.mxu0 0.0
  %231 = vmatprep.subr.mxu0 0.0
  %232 = vmatpush2.msra.mxu0 0.0
  %233 = vmatprep.subr.mxu0 0.0
  %234 = vmatpush2.msra.mxu0 0.0
  %235 = vmatprep.mubr.f32.mxu0 0.0
  %236 = vmatmul.mubr.f32.gmra.mxu0 %v169
  %v237 = vpop.f32.mrf.mxu0
  %v238 = vadd.f32 %v130, %v237
  %v239 = vpop.f32.mrf.mxu0
  %v240 = vadd.f32 %v134, %v239
  %241 = vdwg.mxu0
  %242 = vmatprep.subr.mxu0 0.0
  %243 = vmatpush1.msra.mxu0 0.0
  %244 = vmatprep.subr.mxu0 0.0
  %245 = vmatpush1.msra.mxu0 0.0
  %246 = vmatprep.subr.mxu0 0.0
  %247 = vmatpush1.msra.mxu0 0.0
  %248 = vmatprep.subr.mxu0 0.0
  %249 = vmatpush1.msra.mxu0 0.0
  %250 = vmatprep.subr.mxu0 0.0
  %251 = vmatpush1.msra.mxu0 0.0
  %252 = vmatprep.subr.mxu0 0.0
  %253 = vmatpush1.msra.mxu0 0.0
  %254 = vmatprep.subr.mxu0 0.0
  %255 = vmatpush1.msra.mxu0 0.0
  %256 = vmatprep.subr.mxu0 0.0
  %257 = vmatpush1.msra.mxu0 0.0
  %258 = vmatprep.subr.mxu0 %v120
  %259 = vmatpush1.msra.mxu0 %v119
  %260 = vmatprep.subr.mxu0 %v112
  %261 = vmatpush1.msra.mxu0 %v111
  %262 = vmatprep.subr.mxu0 %v104
  %263 = vmatpush1.msra.mxu0 %v103
  %264 = vmatprep.subr.mxu0 %v96
  %265 = vmatpush1.msra.mxu0 %v95
  %266 = vmatprep.subr.mxu0 %v88
  %267 = vmatpush1.msra.mxu0 %v87
  %268 = vmatprep.subr.mxu0 %v80
  %269 = vmatpush1.msra.mxu0 %v79
  %270 = vmatprep.subr.mxu0 %v72
  %271 = vmatpush1.msra.mxu0 %v71
  %272 = vmatprep.subr.mxu0 %v64
  %273 = vmatpush1.msra.mxu0 %v63
  %274 = vmatprep.subr.mxu0 0.0
  %275 = vmatpush2.msra.mxu0 0.0
  %276 = vmatprep.subr.mxu0 0.0
  %277 = vmatpush2.msra.mxu0 0.0
  %278 = vmatprep.subr.mxu0 0.0
  %279 = vmatpush2.msra.mxu0 0.0
  %280 = vmatprep.subr.mxu0 0.0
  %281 = vmatpush2.msra.mxu0 0.0
  %282 = vmatprep.subr.mxu0 0.0
  %283 = vmatpush2.msra.mxu0 0.0
  %284 = vmatprep.subr.mxu0 0.0
  %285 = vmatpush2.msra.mxu0 0.0
  %286 = vmatprep.subr.mxu0 0.0
  %287 = vmatpush2.msra.mxu0 0.0
  %288 = vmatprep.subr.mxu0 0.0
  %289 = vmatpush2.msra.mxu0 0.0
  %290 = vmatprep.subr.mxu0 0.0
  %291 = vmatpush2.msra.mxu0 0.0
  %292 = vmatprep.subr.mxu0 0.0
  %293 = vmatpush2.msra.mxu0 0.0
  %294 = vmatprep.subr.mxu0 0.0
  %295 = vmatpush2.msra.mxu0 0.0
  %296 = vmatprep.subr.mxu0 0.0
  %297 = vmatpush2.msra.mxu0 0.0
  %298 = vmatprep.subr.mxu0 0.0
  %299 = vmatpush2.msra.mxu0 0.0
  %300 = vmatprep.subr.mxu0 0.0
  %301 = vmatpush2.msra.mxu0 0.0
  %302 = vmatprep.subr.mxu0 0.0
  %303 = vmatpush2.msra.mxu0 0.0
  %304 = vmatprep.subr.mxu0 0.0
  %305 = vmatpush2.msra.mxu0 0.0
  %306 = vmatprep.mubr.f32.mxu0 0.0
  %307 = vmatmul.mubr.f32.gmra.mxu0 %v169
  %v308 = vpop.f32.mrf.mxu0
  %v309 = vadd.f32 %v138, %v308
  %v310 = vpop.f32.mrf.mxu0
  %v311 = vadd.f32 %v142, %v310
  %312 = vdwg.mxu0
  %313 = vmatprep.subr.mxu0 0.0
  %314 = vmatpush1.msra.mxu0 0.0
  %315 = vmatprep.subr.mxu0 0.0
  %316 = vmatpush1.msra.mxu0 0.0
  %317 = vmatprep.subr.mxu0 0.0
  %318 = vmatpush1.msra.mxu0 0.0
  %319 = vmatprep.subr.mxu0 0.0
  %320 = vmatpush1.msra.mxu0 0.0
  %321 = vmatprep.subr.mxu0 0.0
  %322 = vmatpush1.msra.mxu0 0.0
  %323 = vmatprep.subr.mxu0 0.0
  %324 = vmatpush1.msra.mxu0 0.0
  %325 = vmatprep.subr.mxu0 0.0
  %326 = vmatpush1.msra.mxu0 0.0
  %327 = vmatprep.subr.mxu0 0.0
  %328 = vmatpush1.msra.mxu0 0.0
  %329 = vmatprep.subr.mxu0 %v122
  %330 = vmatpush1.msra.mxu0 %v121
  %331 = vmatprep.subr.mxu0 %v114
  %332 = vmatpush1.msra.mxu0 %v113
  %333 = vmatprep.subr.mxu0 %v106
  %334 = vmatpush1.msra.mxu0 %v105
  %335 = vmatprep.subr.mxu0 %v98
  %336 = vmatpush1.msra.mxu0 %v97
  %337 = vmatprep.subr.mxu0 %v90
  %338 = vmatpush1.msra.mxu0 %v89
  %339 = vmatprep.subr.mxu0 %v82
  %340 = vmatpush1.msra.mxu0 %v81
  %341 = vmatprep.subr.mxu0 %v74
  %342 = vmatpush1.msra.mxu0 %v73
  %343 = vmatprep.subr.mxu0 %v66
  %344 = vmatpush1.msra.mxu0 %v65
  %345 = vmatprep.subr.mxu0 0.0
  %346 = vmatpush2.msra.mxu0 0.0
  %347 = vmatprep.subr.mxu0 0.0
  %348 = vmatpush2.msra.mxu0 0.0
  %349 = vmatprep.subr.mxu0 0.0
  %350 = vmatpush2.msra.mxu0 0.0
  %351 = vmatprep.subr.mxu0 0.0
  %352 = vmatpush2.msra.mxu0 0.0
  %353 = vmatprep.subr.mxu0 0.0
  %354 = vmatpush2.msra.mxu0 0.0
  %355 = vmatprep.subr.mxu0 0.0
  %356 = vmatpush2.msra.mxu0 0.0
  %357 = vmatprep.subr.mxu0 0.0
  %358 = vmatpush2.msra.mxu0 0.0
  %359 = vmatprep.subr.mxu0 0.0
  %360 = vmatpush2.msra.mxu0 0.0
  %361 = vmatprep.subr.mxu0 0.0
  %362 = vmatpush2.msra.mxu0 0.0
  %363 = vmatprep.subr.mxu0 0.0
  %364 = vmatpush2.msra.mxu0 0.0
  %365 = vmatprep.subr.mxu0 0.0
  %366 = vmatpush2.msra.mxu0 0.0
  %367 = vmatprep.subr.mxu0 0.0
  %368 = vmatpush2.msra.mxu0 0.0
  %369 = vmatprep.subr.mxu0 0.0
  %370 = vmatpush2.msra.mxu0 0.0
  %371 = vmatprep.subr.mxu0 0.0
  %372 = vmatpush2.msra.mxu0 0.0
  %373 = vmatprep.subr.mxu0 0.0
  %374 = vmatpush2.msra.mxu0 0.0
  %375 = vmatprep.subr.mxu0 0.0
  %376 = vmatpush2.msra.mxu0 0.0
  %377 = vmatprep.mubr.f32.mxu0 0.0
  %378 = vmatmul.mubr.f32.gmra.mxu0 %v169
  %v379 = vpop.f32.mrf.mxu0
  %v380 = vadd.f32 %v146, %v379
  %v381 = vpop.f32.mrf.mxu0
  %v382 = vadd.f32 %v150, %v381
  %383 = vdwg.mxu0
  %384 = vmatprep.subr.mxu0 0.0
  %385 = vmatpush1.msra.mxu0 0.0
  %386 = vmatprep.subr.mxu0 0.0
  %387 = vmatpush1.msra.mxu0 0.0
  %388 = vmatprep.subr.mxu0 0.0
  %389 = vmatpush1.msra.mxu0 0.0
  %390 = vmatprep.subr.mxu0 0.0
  %391 = vmatpush1.msra.mxu0 0.0
  %392 = vmatprep.subr.mxu0 0.0
  %393 = vmatpush1.msra.mxu0 0.0
  %394 = vmatprep.subr.mxu0 0.0
  %395 = vmatpush1.msra.mxu0 0.0
  %396 = vmatprep.subr.mxu0 0.0
  %397 = vmatpush1.msra.mxu0 0.0
  %398 = vmatprep.subr.mxu0 0.0
  %399 = vmatpush1.msra.mxu0 0.0
  %400 = vmatprep.subr.mxu0 %v124
  %401 = vmatpush1.msra.mxu0 %v123
  %402 = vmatprep.subr.mxu0 %v116
  %403 = vmatpush1.msra.mxu0 %v115
  %404 = vmatprep.subr.mxu0 %v108
  %405 = vmatpush1.msra.mxu0 %v107
  %406 = vmatprep.subr.mxu0 %v100
  %407 = vmatpush1.msra.mxu0 %v99
  %408 = vmatprep.subr.mxu0 %v92
  %409 = vmatpush1.msra.mxu0 %v91
  %410 = vmatprep.subr.mxu0 %v84
  %411 = vmatpush1.msra.mxu0 %v83
  %412 = vmatprep.subr.mxu0 %v76
  %413 = vmatpush1.msra.mxu0 %v75
  %414 = vmatprep.subr.mxu0 %v68
  %415 = vmatpush1.msra.mxu0 %v67
  %416 = vmatprep.subr.mxu0 0.0
  %417 = vmatpush2.msra.mxu0 0.0
  %418 = vmatprep.subr.mxu0 0.0
  %419 = vmatpush2.msra.mxu0 0.0
  %420 = vmatprep.subr.mxu0 0.0
  %421 = vmatpush2.msra.mxu0 0.0
  %422 = vmatprep.subr.mxu0 0.0
  %423 = vmatpush2.msra.mxu0 0.0
  %424 = vmatprep.subr.mxu0 0.0
  %425 = vmatpush2.msra.mxu0 0.0
  %426 = vmatprep.subr.mxu0 0.0
  %427 = vmatpush2.msra.mxu0 0.0
  %428 = vmatprep.subr.mxu0 0.0
  %429 = vmatpush2.msra.mxu0 0.0
  %430 = vmatprep.subr.mxu0 0.0
  %431 = vmatpush2.msra.mxu0 0.0
  %432 = vmatprep.subr.mxu0 0.0
  %433 = vmatpush2.msra.mxu0 0.0
  %434 = vmatprep.subr.mxu0 0.0
  %435 = vmatpush2.msra.mxu0 0.0
  %436 = vmatprep.subr.mxu0 0.0
  %437 = vmatpush2.msra.mxu0 0.0
  %438 = vmatprep.subr.mxu0 0.0
  %439 = vmatpush2.msra.mxu0 0.0
  %440 = vmatprep.subr.mxu0 0.0
  %441 = vmatpush2.msra.mxu0 0.0
  %442 = vmatprep.subr.mxu0 0.0
  %443 = vmatpush2.msra.mxu0 0.0
  %444 = vmatprep.subr.mxu0 0.0
  %445 = vmatpush2.msra.mxu0 0.0
  %446 = vmatprep.subr.mxu0 0.0
  %447 = vmatpush2.msra.mxu0 0.0
  %448 = vmatprep.mubr.f32.mxu0 0.0
  %449 = vmatmul.mubr.f32.gmra.mxu0 %v169
  %v450 = vpop.f32.mrf.mxu0
  %v451 = vadd.f32 %v154, %v450
  %v452 = vpop.f32.mrf.mxu0
  %v453 = vadd.f32 %v158, %v452
  %454 = vdwg.mxu0
  %v463 = vcombine.low %v238, %v240
  %v464 = vcombine.low %v309, %v311
  %v465 = vcombine.low %v380, %v382
  %v466 = vcombine.low %v451, %v453
  %471 = vst [vmem:[%s7] sm:$0xff] %v463
  %472 = vst [vmem:[%s7 + $0x8] sm:$0xff] %v464
  %473 = vst [vmem:[%s7 + $0x10] sm:$0xff] %v465
  %474 = vst [vmem:[%s7 + $0x18] sm:$0xff] %v466
  %v475 = vld [vmem:[%s5] sm:$0xff]
  %v476 = vld [vmem:[%s5 + $0x8] sm:$0xff]
  %v477 = vld [vmem:[%s5 + $0x10] sm:$0xff]
  %v478 = vld [vmem:[%s5 + $0x18] sm:$0xff]
  %v479 = vld [vmem:[%s5 + $0x20] sm:$0xff]
  %v480 = vld [vmem:[%s5 + $0x28] sm:$0xff]
  %v481 = vld [vmem:[%s5 + $0x30] sm:$0xff]
  %v482 = vld [vmem:[%s5 + $0x38] sm:$0xff]
  %v483 = vld [vmem:[%s5 + $0x40] sm:$0xff]
  %v484 = vld [vmem:[%s5 + $0x48] sm:$0xff]
  %v485 = vld [vmem:[%s5 + $0x50] sm:$0xff]
  %v486 = vld [vmem:[%s5 + $0x58] sm:$0xff]
  %v487 = vld [vmem:[%s5 + $0x60] sm:$0xff]
  %v488 = vld [vmem:[%s5 + $0x68] sm:$0xff]
  %v489 = vld [vmem:[%s5 + $0x70] sm:$0xff]
  %v490 = vld [vmem:[%s5 + $0x78] sm:$0xff]
  %v491 = vld [vmem:[%s5 + $0x80] sm:$0xff]
  %v492 = vld [vmem:[%s5 + $0x88] sm:$0xff]
  %v493 = vld [vmem:[%s5 + $0x90] sm:$0xff]
  %v494 = vld [vmem:[%s5 + $0x98] sm:$0xff]
  %v495 = vld [vmem:[%s5 + $0xa0] sm:$0xff]
  %v496 = vld [vmem:[%s5 + $0xa8] sm:$0xff]
  %v497 = vld [vmem:[%s5 + $0xb0] sm:$0xff]
  %v498 = vld [vmem:[%s5 + $0xb8] sm:$0xff]
  %v499 = vld [vmem:[%s5 + $0xc0] sm:$0xff]
  %v500 = vld [vmem:[%s5 + $0xc8] sm:$0xff]
  %v501 = vld [vmem:[%s5 + $0xd0] sm:$0xff]
  %v502 = vld [vmem:[%s5 + $0xd8] sm:$0xff]
  %v503 = vld [vmem:[%s5 + $0xe0] sm:$0xff]
  %v504 = vld [vmem:[%s5 + $0xe8] sm:$0xff]
  %v505 = vld [vmem:[%s5 + $0xf0] sm:$0xff]
  %v506 = vld [vmem:[%s5 + $0xf8] sm:$0xff]
  %v507 = vld [vmem:[%s5 + $0x100] sm:$0xff]
  %v508 = vld [vmem:[%s5 + $0x108] sm:$0xff]
  %v509 = vld [vmem:[%s5 + $0x110] sm:$0xff]
  %v510 = vld [vmem:[%s5 + $0x118] sm:$0xff]
  %v511 = vld [vmem:[%s5 + $0x120] sm:$0xff]
  %v512 = vld [vmem:[%s5 + $0x128] sm:$0xff]
  %v513 = vld [vmem:[%s5 + $0x130] sm:$0xff]
  %v514 = vld [vmem:[%s5 + $0x138] sm:$0xff]
  %v515 = vld [vmem:[%s5 + $0x140] sm:$0xff]
  %v516 = vld [vmem:[%s5 + $0x148] sm:$0xff]
  %v517 = vld [vmem:[%s5 + $0x150] sm:$0xff]
  %v518 = vld [vmem:[%s5 + $0x158] sm:$0xff]
  %v519 = vld [vmem:[%s5 + $0x160] sm:$0xff]
  %v520 = vld [vmem:[%s5 + $0x168] sm:$0xff]
  %v521 = vld [vmem:[%s5 + $0x170] sm:$0xff]
  %v522 = vld [vmem:[%s5 + $0x178] sm:$0xff]
  %v523 = vld [vmem:[%s5 + $0x180] sm:$0xff]
  %v524 = vld [vmem:[%s5 + $0x188] sm:$0xff]
  %v525 = vld [vmem:[%s5 + $0x190] sm:$0xff]
  %v526 = vld [vmem:[%s5 + $0x198] sm:$0xff]
  %v527 = vld [vmem:[%s5 + $0x1a0] sm:$0xff]
  %v528 = vld [vmem:[%s5 + $0x1a8] sm:$0xff]
  %v529 = vld [vmem:[%s5 + $0x1b0] sm:$0xff]
  %v530 = vld [vmem:[%s5 + $0x1b8] sm:$0xff]
  %v531 = vld [vmem:[%s5 + $0x1c0] sm:$0xff]
  %v532 = vld [vmem:[%s5 + $0x1c8] sm:$0xff]
  %v533 = vld [vmem:[%s5 + $0x1d0] sm:$0xff]
  %v534 = vld [vmem:[%s5 + $0x1d8] sm:$0xff]
  %v535 = vld [vmem:[%s5 + $0x1e0] sm:$0xff]
  %v536 = vld [vmem:[%s5 + $0x1e8] sm:$0xff]
  %v537 = vld [vmem:[%s5 + $0x1f0] sm:$0xff]
  %v538 = vld [vmem:[%s5 + $0x1f8] sm:$0xff]
  %v539 = vld [vmem:[%s5 + $0x200] sm:$0xff]
  %v540 = vld [vmem:[%s5 + $0x208] sm:$0xff]
  %v541 = vld [vmem:[%s5 + $0x210] sm:$0xff]
  %v542 = vld [vmem:[%s5 + $0x218] sm:$0xff]
  %v543 = vld [vmem:[%s5 + $0x220] sm:$0xff]
  %v544 = vld [vmem:[%s5 + $0x228] sm:$0xff]
  %v545 = vld [vmem:[%s5 + $0x230] sm:$0xff]
  %v546 = vld [vmem:[%s5 + $0x238] sm:$0xff]
  %v547 = vld [vmem:[%s5 + $0x240] sm:$0xff]
  %v548 = vld [vmem:[%s5 + $0x248] sm:$0xff]
  %v549 = vld [vmem:[%s5 + $0x250] sm:$0xff]
  %v550 = vld [vmem:[%s5 + $0x258] sm:$0xff]
  %v551 = vld [vmem:[%s5 + $0x260] sm:$0xff]
  %v552 = vld [vmem:[%s5 + $0x268] sm:$0xff]
  %v553 = vld [vmem:[%s5 + $0x270] sm:$0xff]
  %v554 = vld [vmem:[%s5 + $0x278] sm:$0xff]
  %v555 = vld [vmem:[%s5 + $0x280] sm:$0xff]
  %v556 = vld [vmem:[%s5 + $0x288] sm:$0xff]
  %v557 = vld [vmem:[%s5 + $0x290] sm:$0xff]
  %v558 = vld [vmem:[%s5 + $0x298] sm:$0xff]
  %v559 = vld [vmem:[%s5 + $0x2a0] sm:$0xff]
  %v560 = vld [vmem:[%s5 + $0x2a8] sm:$0xff]
  %v561 = vld [vmem:[%s5 + $0x2b0] sm:$0xff]
  %v562 = vld [vmem:[%s5 + $0x2b8] sm:$0xff]
  %v563 = vld [vmem:[%s5 + $0x2c0] sm:$0xff]
  %v564 = vld [vmem:[%s5 + $0x2c8] sm:$0xff]
  %v565 = vld [vmem:[%s5 + $0x2d0] sm:$0xff]
  %v566 = vld [vmem:[%s5 + $0x2d8] sm:$0xff]
  %v567 = vld [vmem:[%s5 + $0x2e0] sm:$0xff]
  %v568 = vld [vmem:[%s5 + $0x2e8] sm:$0xff]
  %v569 = vld [vmem:[%s5 + $0x2f0] sm:$0xff]
  %v570 = vld [vmem:[%s5 + $0x2f8] sm:$0xff]
  %v571 = vld [vmem:[%s5 + $0x300] sm:$0xff]
  %v572 = vld [vmem:[%s5 + $0x308] sm:$0xff]
  %v573 = vld [vmem:[%s5 + $0x310] sm:$0xff]
  %v574 = vld [vmem:[%s5 + $0x318] sm:$0xff]
  %v575 = vld [vmem:[%s5 + $0x320] sm:$0xff]
  %v576 = vld [vmem:[%s5 + $0x328] sm:$0xff]
  %v577 = vld [vmem:[%s5 + $0x330] sm:$0xff]
  %v578 = vld [vmem:[%s5 + $0x338] sm:$0xff]
  %v579 = vld [vmem:[%s5 + $0x340] sm:$0xff]
  %v580 = vld [vmem:[%s5 + $0x348] sm:$0xff]
  %v581 = vld [vmem:[%s5 + $0x350] sm:$0xff]
  %v582 = vld [vmem:[%s5 + $0x358] sm:$0xff]
  %v583 = vld [vmem:[%s5 + $0x360] sm:$0xff]
  %v584 = vld [vmem:[%s5 + $0x368] sm:$0xff]
  %v585 = vld [vmem:[%s5 + $0x370] sm:$0xff]
  %v586 = vld [vmem:[%s5 + $0x378] sm:$0xff]
  %v587 = vld [vmem:[%s5 + $0x380] sm:$0xff]
  %v588 = vld [vmem:[%s5 + $0x388] sm:$0xff]
  %v589 = vld [vmem:[%s5 + $0x390] sm:$0xff]
  %v590 = vld [vmem:[%s5 + $0x398] sm:$0xff]
  %v591 = vld [vmem:[%s5 + $0x3a0] sm:$0xff]
  %v592 = vld [vmem:[%s5 + $0x3a8] sm:$0xff]
  %v593 = vld [vmem:[%s5 + $0x3b0] sm:$0xff]
  %v594 = vld [vmem:[%s5 + $0x3b8] sm:$0xff]
  %v595 = vld [vmem:[%s5 + $0x3c0] sm:$0xff]
  %v596 = vld [vmem:[%s5 + $0x3c8] sm:$0xff]
  %v597 = vld [vmem:[%s5 + $0x3d0] sm:$0xff]
  %v598 = vld [vmem:[%s5 + $0x3d8] sm:$0xff]
  %v599 = vld [vmem:[%s5 + $0x3e0] sm:$0xff]
  %v600 = vld [vmem:[%s5 + $0x3e8] sm:$0xff]
  %v601 = vld [vmem:[%s5 + $0x3f0] sm:$0xff]
  %v602 = vld [vmem:[%s5 + $0x3f8] sm:$0xff]
  %v603 = vld [vmem:[%s6] sm:$0x1]
  %v605 = vlaneseq
  %v606 = vshrl.u32 %v605, 7
  %v607 = vsub.s32 0, %v606
  %v608 = vrot.slane %v603, %v607
  %610 = vmatprep.subr.mxu0 0.0
  %611 = vmatpush1.msra.mxu0 %v490
  %612 = vmatprep.subr.mxu0 0.0
  %613 = vmatpush1.msra.mxu0 %v489
  %614 = vmatprep.subr.mxu0 0.0
  %615 = vmatpush1.msra.mxu0 %v488
  %616 = vmatprep.subr.mxu0 0.0
  %617 = vmatpush1.msra.mxu0 %v487
  %618 = vmatprep.subr.mxu0 0.0
  %619 = vmatpush1.msra.mxu0 %v486
  %620 = vmatprep.subr.mxu0 0.0
  %621 = vmatpush1.msra.mxu0 %v485
  %622 = vmatprep.subr.mxu0 0.0
  %623 = vmatpush1.msra.mxu0 %v484
  %624 = vmatprep.subr.mxu0 0.0
  %625 = vmatpush1.msra.mxu0 %v483
  %626 = vmatprep.subr.mxu0 0.0
  %627 = vmatpush1.msra.mxu0 %v482
  %628 = vmatprep.subr.mxu0 0.0
  %629 = vmatpush1.msra.mxu0 %v481
  %630 = vmatprep.subr.mxu0 0.0
  %631 = vmatpush1.msra.mxu0 %v480
  %632 = vmatprep.subr.mxu0 0.0
  %633 = vmatpush1.msra.mxu0 %v479
  %634 = vmatprep.subr.mxu0 0.0
  %635 = vmatpush1.msra.mxu0 %v478
  %636 = vmatprep.subr.mxu0 0.0
  %637 = vmatpush1.msra.mxu0 %v477
  %638 = vmatprep.subr.mxu0 0.0
  %639 = vmatpush1.msra.mxu0 %v476
  %640 = vmatprep.subr.mxu0 0.0
  %641 = vmatpush1.msra.mxu0 %v475
  %642 = vmatprep.subr.mxu0 0.0
  %643 = vmatpush2.msra.mxu0 %v506
  %644 = vmatprep.subr.mxu0 0.0
  %645 = vmatpush2.msra.mxu0 %v505
  %646 = vmatprep.subr.mxu0 0.0
  %647 = vmatpush2.msra.mxu0 %v504
  %648 = vmatprep.subr.mxu0 0.0
  %649 = vmatpush2.msra.mxu0 %v503
  %650 = vmatprep.subr.mxu0 0.0
  %651 = vmatpush2.msra.mxu0 %v502
  %652 = vmatprep.subr.mxu0 0.0
  %653 = vmatpush2.msra.mxu0 %v501
  %654 = vmatprep.subr.mxu0 0.0
  %655 = vmatpush2.msra.mxu0 %v500
  %656 = vmatprep.subr.mxu0 0.0
  %657 = vmatpush2.msra.mxu0 %v499
  %658 = vmatprep.subr.mxu0 0.0
  %659 = vmatpush2.msra.mxu0 %v498
  %660 = vmatprep.subr.mxu0 0.0
  %661 = vmatpush2.msra.mxu0 %v497
  %662 = vmatprep.subr.mxu0 0.0
  %663 = vmatpush2.msra.mxu0 %v496
  %664 = vmatprep.subr.mxu0 0.0
  %665 = vmatpush2.msra.mxu0 %v495
  %666 = vmatprep.subr.mxu0 0.0
  %667 = vmatpush2.msra.mxu0 %v494
  %668 = vmatprep.subr.mxu0 0.0
  %669 = vmatpush2.msra.mxu0 %v493
  %670 = vmatprep.subr.mxu0 0.0
  %671 = vmatpush2.msra.mxu0 %v492
  %672 = vmatprep.subr.mxu0 0.0
  %673 = vmatpush2.msra.mxu0 %v491
  %674 = vmatprep.mubr.f32.mxu0 %v240
  %675 = vmatmul.mubr.f32.gmra.mxu0 %v238
  %v676 = vpop.f32.mrf.mxu0
  %v677 = vadd.f32 %v608, %v676
  %v678 = vpop.f32.mrf.mxu0
  %679 = vdwg.mxu0
  %680 = vmatprep.subr.mxu0 0.0
  %681 = vmatpush1.msra.mxu0 %v522
  %682 = vmatprep.subr.mxu0 0.0
  %683 = vmatpush1.msra.mxu0 %v521
  %684 = vmatprep.subr.mxu0 0.0
  %685 = vmatpush1.msra.mxu0 %v520
  %686 = vmatprep.subr.mxu0 0.0
  %687 = vmatpush1.msra.mxu0 %v519
  %688 = vmatprep.subr.mxu0 0.0
  %689 = vmatpush1.msra.mxu0 %v518
  %690 = vmatprep.subr.mxu0 0.0
  %691 = vmatpush1.msra.mxu0 %v517
  %692 = vmatprep.subr.mxu0 0.0
  %693 = vmatpush1.msra.mxu0 %v516
  %694 = vmatprep.subr.mxu0 0.0
  %695 = vmatpush1.msra.mxu0 %v515
  %696 = vmatprep.subr.mxu0 0.0
  %697 = vmatpush1.msra.mxu0 %v514
  %698 = vmatprep.subr.mxu0 0.0
  %699 = vmatpush1.msra.mxu0 %v513
  %700 = vmatprep.subr.mxu0 0.0
  %701 = vmatpush1.msra.mxu0 %v512
  %702 = vmatprep.subr.mxu0 0.0
  %703 = vmatpush1.msra.mxu0 %v511
  %704 = vmatprep.subr.mxu0 0.0
  %705 = vmatpush1.msra.mxu0 %v510
  %706 = vmatprep.subr.mxu0 0.0
  %707 = vmatpush1.msra.mxu0 %v509
  %708 = vmatprep.subr.mxu0 0.0
  %709 = vmatpush1.msra.mxu0 %v508
  %710 = vmatprep.subr.mxu0 0.0
  %711 = vmatpush1.msra.mxu0 %v507
  %712 = vmatprep.subr.mxu0 0.0
  %713 = vmatpush2.msra.mxu0 %v538
  %714 = vmatprep.subr.mxu0 0.0
  %715 = vmatpush2.msra.mxu0 %v537
  %716 = vmatprep.subr.mxu0 0.0
  %717 = vmatpush2.msra.mxu0 %v536
  %718 = vmatprep.subr.mxu0 0.0
  %719 = vmatpush2.msra.mxu0 %v535
  %720 = vmatprep.subr.mxu0 0.0
  %721 = vmatpush2.msra.mxu0 %v534
  %722 = vmatprep.subr.mxu0 0.0
  %723 = vmatpush2.msra.mxu0 %v533
  %724 = vmatprep.subr.mxu0 0.0
  %725 = vmatpush2.msra.mxu0 %v532
  %726 = vmatprep.subr.mxu0 0.0
  %727 = vmatpush2.msra.mxu0 %v531
  %728 = vmatprep.subr.mxu0 0.0
  %729 = vmatpush2.msra.mxu0 %v530
  %730 = vmatprep.subr.mxu0 0.0
  %731 = vmatpush2.msra.mxu0 %v529
  %732 = vmatprep.subr.mxu0 0.0
  %733 = vmatpush2.msra.mxu0 %v528
  %734 = vmatprep.subr.mxu0 0.0
  %735 = vmatpush2.msra.mxu0 %v527
  %736 = vmatprep.subr.mxu0 0.0
  %737 = vmatpush2.msra.mxu0 %v526
  %738 = vmatprep.subr.mxu0 0.0
  %739 = vmatpush2.msra.mxu0 %v525
  %740 = vmatprep.subr.mxu0 0.0
  %741 = vmatpush2.msra.mxu0 %v524
  %742 = vmatprep.subr.mxu0 0.0
  %743 = vmatpush2.msra.mxu0 %v523
  %744 = vmatprep.mubr.f32.mxu0 %v311
  %745 = vmatmul.mubr.f32.gmra.mxu0 %v309
  %v746 = vpop.f32.mrf.mxu0
  %v747 = vadd.f32 %v677, %v746
  %v748 = vpop.f32.mrf.mxu0
  %749 = vdwg.mxu0
  %750 = vmatprep.subr.mxu0 0.0
  %751 = vmatpush1.msra.mxu0 %v554
  %752 = vmatprep.subr.mxu0 0.0
  %753 = vmatpush1.msra.mxu0 %v553
  %754 = vmatprep.subr.mxu0 0.0
  %755 = vmatpush1.msra.mxu0 %v552
  %756 = vmatprep.subr.mxu0 0.0
  %757 = vmatpush1.msra.mxu0 %v551
  %758 = vmatprep.subr.mxu0 0.0
  %759 = vmatpush1.msra.mxu0 %v550
  %760 = vmatprep.subr.mxu0 0.0
  %761 = vmatpush1.msra.mxu0 %v549
  %762 = vmatprep.subr.mxu0 0.0
  %763 = vmatpush1.msra.mxu0 %v548
  %764 = vmatprep.subr.mxu0 0.0
  %765 = vmatpush1.msra.mxu0 %v547
  %766 = vmatprep.subr.mxu0 0.0
  %767 = vmatpush1.msra.mxu0 %v546
  %768 = vmatprep.subr.mxu0 0.0
  %769 = vmatpush1.msra.mxu0 %v545
  %770 = vmatprep.subr.mxu0 0.0
  %771 = vmatpush1.msra.mxu0 %v544
  %772 = vmatprep.subr.mxu0 0.0
  %773 = vmatpush1.msra.mxu0 %v543
  %774 = vmatprep.subr.mxu0 0.0
  %775 = vmatpush1.msra.mxu0 %v542
  %776 = vmatprep.subr.mxu0 0.0
  %777 = vmatpush1.msra.mxu0 %v541
  %778 = vmatprep.subr.mxu0 0.0
  %779 = vmatpush1.msra.mxu0 %v540
  %780 = vmatprep.subr.mxu0 0.0
  %781 = vmatpush1.msra.mxu0 %v539
  %782 = vmatprep.subr.mxu0 0.0
  %783 = vmatpush2.msra.mxu0 %v570
  %784 = vmatprep.subr.mxu0 0.0
  %785 = vmatpush2.msra.mxu0 %v569
  %786 = vmatprep.subr.mxu0 0.0
  %787 = vmatpush2.msra.mxu0 %v568
  %788 = vmatprep.subr.mxu0 0.0
  %789 = vmatpush2.msra.mxu0 %v567
  %790 = vmatprep.subr.mxu0 0.0
  %791 = vmatpush2.msra.mxu0 %v566
  %792 = vmatprep.subr.mxu0 0.0
  %793 = vmatpush2.msra.mxu0 %v565
  %794 = vmatprep.subr.mxu0 0.0
  %795 = vmatpush2.msra.mxu0 %v564
  %796 = vmatprep.subr.mxu0 0.0
  %797 = vmatpush2.msra.mxu0 %v563
  %798 = vmatprep.subr.mxu0 0.0
  %799 = vmatpush2.msra.mxu0 %v562
  %800 = vmatprep.subr.mxu0 0.0
  %801 = vmatpush2.msra.mxu0 %v561
  %802 = vmatprep.subr.mxu0 0.0
  %803 = vmatpush2.msra.mxu0 %v560
  %804 = vmatprep.subr.mxu0 0.0
  %805 = vmatpush2.msra.mxu0 %v559
  %806 = vmatprep.subr.mxu0 0.0
  %807 = vmatpush2.msra.mxu0 %v558
  %808 = vmatprep.subr.mxu0 0.0
  %809 = vmatpush2.msra.mxu0 %v557
  %810 = vmatprep.subr.mxu0 0.0
  %811 = vmatpush2.msra.mxu0 %v556
  %812 = vmatprep.subr.mxu0 0.0
  %813 = vmatpush2.msra.mxu0 %v555
  %814 = vmatprep.mubr.f32.mxu0 %v382
  %815 = vmatmul.mubr.f32.gmra.mxu0 %v380
  %v816 = vpop.f32.mrf.mxu0
  %v817 = vadd.f32 %v747, %v816
  %v818 = vpop.f32.mrf.mxu0
  %819 = vdwg.mxu0
  %820 = vmatprep.subr.mxu0 0.0
  %821 = vmatpush1.msra.mxu0 %v586
  %822 = vmatprep.subr.mxu0 0.0
  %823 = vmatpush1.msra.mxu0 %v585
  %824 = vmatprep.subr.mxu0 0.0
  %825 = vmatpush1.msra.mxu0 %v584
  %826 = vmatprep.subr.mxu0 0.0
  %827 = vmatpush1.msra.mxu0 %v583
  %828 = vmatprep.subr.mxu0 0.0
  %829 = vmatpush1.msra.mxu0 %v582
  %830 = vmatprep.subr.mxu0 0.0
  %831 = vmatpush1.msra.mxu0 %v581
  %832 = vmatprep.subr.mxu0 0.0
  %833 = vmatpush1.msra.mxu0 %v580
  %834 = vmatprep.subr.mxu0 0.0
  %835 = vmatpush1.msra.mxu0 %v579
  %836 = vmatprep.subr.mxu0 0.0
  %837 = vmatpush1.msra.mxu0 %v578
  %838 = vmatprep.subr.mxu0 0.0
  %839 = vmatpush1.msra.mxu0 %v577
  %840 = vmatprep.subr.mxu0 0.0
  %841 = vmatpush1.msra.mxu0 %v576
  %842 = vmatprep.subr.mxu0 0.0
  %843 = vmatpush1.msra.mxu0 %v575
  %844 = vmatprep.subr.mxu0 0.0
  %845 = vmatpush1.msra.mxu0 %v574
  %846 = vmatprep.subr.mxu0 0.0
  %847 = vmatpush1.msra.mxu0 %v573
  %848 = vmatprep.subr.mxu0 0.0
  %849 = vmatpush1.msra.mxu0 %v572
  %850 = vmatprep.subr.mxu0 0.0
  %851 = vmatpush1.msra.mxu0 %v571
  %852 = vmatprep.subr.mxu0 0.0
  %853 = vmatpush2.msra.mxu0 %v602
  %854 = vmatprep.subr.mxu0 0.0
  %855 = vmatpush2.msra.mxu0 %v601
  %856 = vmatprep.subr.mxu0 0.0
  %857 = vmatpush2.msra.mxu0 %v600
  %858 = vmatprep.subr.mxu0 0.0
  %859 = vmatpush2.msra.mxu0 %v599
  %860 = vmatprep.subr.mxu0 0.0
  %861 = vmatpush2.msra.mxu0 %v598
  %862 = vmatprep.subr.mxu0 0.0
  %863 = vmatpush2.msra.mxu0 %v597
  %864 = vmatprep.subr.mxu0 0.0
  %865 = vmatpush2.msra.mxu0 %v596
  %866 = vmatprep.subr.mxu0 0.0
  %867 = vmatpush2.msra.mxu0 %v595
  %868 = vmatprep.subr.mxu0 0.0
  %869 = vmatpush2.msra.mxu0 %v594
  %870 = vmatprep.subr.mxu0 0.0
  %871 = vmatpush2.msra.mxu0 %v593
  %872 = vmatprep.subr.mxu0 0.0
  %873 = vmatpush2.msra.mxu0 %v592
  %874 = vmatprep.subr.mxu0 0.0
  %875 = vmatpush2.msra.mxu0 %v591
  %876 = vmatprep.subr.mxu0 0.0
  %877 = vmatpush2.msra.mxu0 %v590
  %878 = vmatprep.subr.mxu0 0.0
  %879 = vmatpush2.msra.mxu0 %v589
  %880 = vmatprep.subr.mxu0 0.0
  %881 = vmatpush2.msra.mxu0 %v588
  %882 = vmatprep.subr.mxu0 0.0
  %883 = vmatpush2.msra.mxu0 %v587
  %884 = vmatprep.mubr.f32.mxu0 %v453
  %885 = vmatmul.mubr.f32.gmra.mxu0 %v451
  %v886 = vpop.f32.mrf.mxu0
  %v887 = vadd.f32 %v817, %v886
  %v888 = vpop.f32.mrf.mxu0
  %889 = vdwg.mxu0
  %890 = vst [vmem:[%s8] sm:$0xf] %v887
  %v891 = vlaneseq
  %v892 = vand.u32 %v891, 127
  %vm893 = vcmp.lt.s32.totalorder %v892, 31
  %v894 = vsel %vm893, %v887, -1e+30
  %vm895 = vcmask 1043456
  %v896 = vsel %vm895, %v894, -inf
  %897 = vmax.xlane.f32.xlu0 %v896
  %v898 = vpop.xlane.xlu0 %897
  %v899 = vsub.f32 %v894, %v898
  %v900 = vmul.f32 %v899, 1.442695
  %v901 = vpow.pop %v900
  %v902 = vsel %vm895, %v901, 0.0
  %903 = vadd.xlane.f32.xlu0 %v902
  %v904 = vpop.xlane.xlu0 %903
  %v905 = vrcp.pop %v904
  %v906 = vmul.f32 %v901, %v905
  %907 = vst [vmem:[%s9] sm:$0xf] %v906
  // Predicated region
  $region30: #{dsan_forward.8} parent=0 // pred_check
    _
  $region31: #{dsan_forward.8} parent=0 // pred_check_branch
    %909 = sbr.rel (0) target = $region33
  $region32: #{dsan_forward.8} parent=0 // pred_region
    _
  $region33: #{dsan_forward.8} parent=0 // pred_fallthru
    _
  // Predicated region
  $region34: #{dsan_forward.8} parent=0 // pred_check
    _
  $region35: #{dsan_forward.8} parent=0 // pred_check_branch
    %911 = sbr.rel (0) target = $region37
  $region36: #{dsan_forward.8} parent=0 // pred_region
    _
  $region37: #{dsan_forward.8} parent=0 // pred_fallthru
    _
  // Predicated region
  $region38: #{dsan_forward.8} parent=0 // pred_check
    _
  $region39: #{dsan_forward.8} parent=0 // pred_check_branch
    %913 = sbr.rel (0) target = $region41
  $region40: #{dsan_forward.8} parent=0 // pred_region
    _
  $region41: #{dsan_forward.8} parent=0 // pred_fallthru
    _
  // Predicated region
  $region42: #{dsan_forward.8} parent=0 // pred_check
    _
  $region43: #{dsan_forward.8} parent=0 // pred_check_branch
    %915 = sbr.rel (0) target = $region45
  $region44: #{dsan_forward.8} parent=0 // pred_region
    _
  $region45: #{dsan_forward.8} parent=0 // pred_fallthru
    _
  // Predicated region
  $region46: #{dsan_forward.8} parent=0 // pred_check
    _
  $region47: #{dsan_forward.8} parent=0 // pred_check_branch
    %917 = sbr.rel (0) target = $region49
  $region48: #{dsan_forward.8} parent=0 // pred_region
    _
  $region49: #{dsan_forward.8} parent=0 // pred_fallthru
    _
  // Predicated region
  $region50: #{dsan_forward.8} parent=0 // pred_check
    _
  $region51: #{dsan_forward.8} parent=0 // pred_check_branch
    %919 = sbr.rel (0) target = $region53
  $region52: #{dsan_forward.8} parent=0 // pred_region
    _
  $region53: #{dsan_forward.8} parent=0 // pred_fallthru
    _

// kernel: dsan_forward.6
$region0: #{dsan_forward.6}
  #allocation0 [shape = 'u32[]', space=smem, size = 0x4, offset = 0x4, fixed_abs, tag = 'smem constant byte address 0x4 - core index']
  #allocation1 [shape = 'u32[144,128]{1,0:T(1,128)}', space=vmem, size = 0x12000, scoped, tag = 'internal scratch']
  %s0 = inlined_call_operand.vmem [shape: f32[20,64], index: 0, kind: input, shape index: {}]
  %s1 = inlined_call_operand.vmem [shape: f32[20,20], index: 1, kind: input, shape index: {}]
  %s2 = inlined_call_operand.vmem [shape: f32[1,64], index: 2, kind: input, shape index: {}]
  %s3 = inlined_call_operand.vmem [shape: f32[1,64], index: 3, kind: input, shape index: {}]
  %s4 = inlined_call_operand.vmem [shape: f32[64,64], index: 4, kind: input, shape index: {}]
  %s5 = inlined_call_operand.vmem [shape: f32[1,64], index: 5, kind: input, shape index: {}]
  %s6 = inlined_call_operand.vmem [shape: f32[64,64], index: 6, kind: input, shape index: {}]
  %s7 = inlined_call_operand.vmem [shape: f32[1,64], index: 7, kind: input, shape index: {}]
  %s8 = inlined_call_operand.vmem [shape: f32[64,64], index: 8, kind: input, shape index: {}]
  %s9 = inlined_call_operand.vmem [shape: f32[1,64], index: 9, kind: input, shape index: {}]
  %s10 = inlined_call_operand.vmem [shape: f32[64,64], index: 10, kind: input, shape index: {}]
  %s11 = inlined_call_operand.vmem [shape: f32[1,64], index: 11, kind: input, shape index: {}]
  %s12 = inlined_call_operand.vmem [shape: f32[1,64], index: 12, kind: input, shape index: {}]
  %s13 = inlined_call_operand.vmem [shape: f32[1,64], index: 13, kind: input, shape index: {}]
  %s14 = inlined_call_operand.vmem [shape: f32[64,256], index: 14, kind: input, shape index: {}]
  %s15 = inlined_call_operand.vmem [shape: f32[1,256], index: 15, kind: input, shape index: {}]
  %s16 = inlined_call_operand.vmem [shape: f32[256,64], index: 16, kind: input, shape index: {}]
  %s17 = inlined_call_operand.vmem [shape: f32[1,64], index: 17, kind: input, shape index: {}]
  %s18 = inlined_call_operand.vmem [shape: f32[20,64], index: 18, kind: output, shape index: {}]
  %s19 = sld [smem:[#allocation0]]
  $region82: #{dsan_forward.6} parent=0
    _
  %s21 = ssub.s32 1, %s19
  %s22 = scalar_select 0, %s21, %s19
  // Predicated region
  $region2: #{dsan_forward.6} parent=0 // pred_check
    _
  $region3: #{dsan_forward.6} parent=0 // pred_check_branch
    %24 = sbr.rel (0) target = $region5
  $region4: #{dsan_forward.6} parent=0 // pred_region
    _
  $region5: #{dsan_forward.6} parent=0 // pred_fallthru
    _
  // Predicated region
  $region6: #{dsan_forward.6} parent=0 // pred_check
    _
  $region7: #{dsan_forward.6} parent=0 // pred_check_branch
    %26 = sbr.rel (0) target = $region9
  $region8: #{dsan_forward.6} parent=0 // pred_region
    _
  $region9: #{dsan_forward.6} parent=0 // pred_fallthru
    _
  // Predicated region
  $region10: #{dsan_forward.6} parent=0 // pred_check
    _
  $region11: #{dsan_forward.6} parent=0 // pred_check_branch
    %28 = sbr.rel (0) target = $region13
  $region12: #{dsan_forward.6} parent=0 // pred_region
    _
  $region13: #{dsan_forward.6} parent=0 // pred_fallthru
    _
  // Predicated region
  $region14: #{dsan_forward.6} parent=0 // pred_check
    _
  $region15: #{dsan_forward.6} parent=0 // pred_check_branch
    %30 = sbr.rel (0) target = $region17
  $region16: #{dsan_forward.6} parent=0 // pred_region
    _
  $region17: #{dsan_forward.6} parent=0 // pred_fallthru
    _
  // Predicated region
  $region18: #{dsan_forward.6} parent=0 // pred_check
    _
  $region19: #{dsan_forward.6} parent=0 // pred_check_branch
    %32 = sbr.rel (0) target = $region21
  $region20: #{dsan_forward.6} parent=0 // pred_region
    _
  $region21: #{dsan_forward.6} parent=0 // pred_fallthru
    _
  // Predicated region
  $region22: #{dsan_forward.6} parent=0 // pred_check
    _
  $region23: #{dsan_forward.6} parent=0 // pred_check_branch
    %34 = sbr.rel (0) target = $region25
  $region24: #{dsan_forward.6} parent=0 // pred_region
    _
  $region25: #{dsan_forward.6} parent=0 // pred_fallthru
    _
  // Predicated region
  $region26: #{dsan_forward.6} parent=0 // pred_check
    _
  $region27: #{dsan_forward.6} parent=0 // pred_check_branch
    %36 = sbr.rel (0) target = $region29
  $region28: #{dsan_forward.6} parent=0 // pred_region
    _
  $region29: #{dsan_forward.6} parent=0 // pred_fallthru
    _
  // Predicated region
  $region30: #{dsan_forward.6} parent=0 // pred_check
    _
  $region31: #{dsan_forward.6} parent=0 // pred_check_branch
    %38 = sbr.rel (0) target = $region33
  $region32: #{dsan_forward.6} parent=0 // pred_region
    _
  $region33: #{dsan_forward.6} parent=0 // pred_fallthru
    _
  // Predicated region
  $region34: #{dsan_forward.6} parent=0 // pred_check
    _
  $region35: #{dsan_forward.6} parent=0 // pred_check_branch
    %40 = sbr.rel (0) target = $region37
  $region36: #{dsan_forward.6} parent=0 // pred_region
    _
  $region37: #{dsan_forward.6} parent=0 // pred_fallthru
    _
  // Predicated region
  $region38: #{dsan_forward.6} parent=0 // pred_check
    _
  $region39: #{dsan_forward.6} parent=0 // pred_check_branch
    %42 = sbr.rel (0) target = $region41
  $region40: #{dsan_forward.6} parent=0 // pred_region
    _
  $region41: #{dsan_forward.6} parent=0 // pred_fallthru
    _
  // Predicated region
  $region42: #{dsan_forward.6} parent=0 // pred_check
    _
  $region43: #{dsan_forward.6} parent=0 // pred_check_branch
    %44 = sbr.rel (0) target = $region45
  $region44: #{dsan_forward.6} parent=0 // pred_region
    _
  $region45: #{dsan_forward.6} parent=0 // pred_fallthru
    _
  // Predicated region
  $region46: #{dsan_forward.6} parent=0 // pred_check
    _
  $region47: #{dsan_forward.6} parent=0 // pred_check_branch
    %46 = sbr.rel (0) target = $region49
  $region48: #{dsan_forward.6} parent=0 // pred_region
    _
  $region49: #{dsan_forward.6} parent=0 // pred_fallthru
    _
  // Predicated region
  $region50: #{dsan_forward.6} parent=0 // pred_check
    _
  $region51: #{dsan_forward.6} parent=0 // pred_check_branch
    %48 = sbr.rel (0) target = $region53
  $region52: #{dsan_forward.6} parent=0 // pred_region
    _
  $region53: #{dsan_forward.6} parent=0 // pred_fallthru
    _
  // Predicated region
  $region54: #{dsan_forward.6} parent=0 // pred_check
    _
  $region55: #{dsan_forward.6} parent=0 // pred_check_branch
    %50 = sbr.rel (0) target = $region57
  $region56: #{dsan_forward.6} parent=0 // pred_region
    _
  $region57: #{dsan_forward.6} parent=0 // pred_fallthru
    _
  // Predicated region
  $region58: #{dsan_forward.6} parent=0 // pred_check
    _
  $region59: #{dsan_forward.6} parent=0 // pred_check_branch
    %52 = sbr.rel (0) target = $region61
  $region60: #{dsan_forward.6} parent=0 // pred_region
    _
  $region61: #{dsan_forward.6} parent=0 // pred_fallthru
    _
  // Predicated region
  $region62: #{dsan_forward.6} parent=0 // pred_check
    _
  $region63: #{dsan_forward.6} parent=0 // pred_check_branch
    %54 = sbr.rel (0) target = $region65
  $region64: #{dsan_forward.6} parent=0 // pred_region
    _
  $region65: #{dsan_forward.6} parent=0 // pred_fallthru
    _
  // Predicated region
  $region66: #{dsan_forward.6} parent=0 // pred_check
    _
  $region67: #{dsan_forward.6} parent=0 // pred_check_branch
    %56 = sbr.rel (0) target = $region69
  $region68: #{dsan_forward.6} parent=0 // pred_region
    _
  $region69: #{dsan_forward.6} parent=0 // pred_fallthru
    _
  // Predicated region
  $region70: #{dsan_forward.6} parent=0 // pred_check
    _
  $region71: #{dsan_forward.6} parent=0 // pred_check_branch
    %58 = sbr.rel (0) target = $region73
  $region72: #{dsan_forward.6} parent=0 // pred_region
    _
  $region73: #{dsan_forward.6} parent=0 // pred_fallthru
    _
  %v59 = vld [vmem:[%s0] sm:$0xff]
  %v60 = vld [vmem:[%s0 + $0x8] sm:$0xff]
  %v61 = vld [vmem:[%s0 + $0x10] sm:$0xf]
  %v62 = vld [vmem:[%s1] sm:$0xff]
  %v63 = vld [vmem:[%s1 + $0x8] sm:$0xff]
  %v64 = vld [vmem:[%s1 + $0x10] sm:$0xf]
  %v65 = vld [vmem:[%s2] sm:$0x1]
  %v66 = vld [vmem:[%s3] sm:$0x1]
  %vm67 = vcmask 523264
  %v68 = vsel %vm67, %v59, 0.0
  %69 = vadd.xlane.f32.xlu0 %v68
  %v70 = vpop.xlane.xlu0 %69
  %v71 = vsel %vm67, %v60, 0.0
  %72 = vadd.xlane.f32.xlu0 %v71
  %v73 = vpop.xlane.xlu0 %72
  %vm74 = vcmask 519168
  %v75 = vsel %vm74, %v61, 0.0
  %76 = vadd.xlane.f32.xlu0 %v75
  %v77 = vpop.xlane.xlu0 %76
  %v78 = vrcp.pop 64.0
  %v79 = vmul.f32 %v70, %v78
  %v80 = vmul.f32 %v73, %v78
  %v81 = vmul.f32 %v77, %v78
  %v82 = vsub.f32 %v59, %v79
  %v83 = vsub.f32 %v60, %v80
  %v84 = vsub.f32 %v61, %v81
  %v85 = vmul.f32 %v82, %v82
  %v86 = vmul.f32 %v83, %v83
  %v87 = vmul.f32 %v84, %v84
  %v88 = vsel %vm67, %v85, 0.0
  %89 = vadd.xlane.f32.xlu0 %v88
  %v90 = vpop.xlane.xlu0 %89
  %v91 = vsel %vm67, %v86, 0.0
  %92 = vadd.xlane.f32.xlu0 %v91
  %v93 = vpop.xlane.xlu0 %92
  %v94 = vsel %vm74, %v87, 0.0
  %95 = vadd.xlane.f32.xlu0 %v94
  %v96 = vpop.xlane.xlu0 %95
  %v97 = vmul.f32 %v90, %v78
  %v98 = vmul.f32 %v93, %v78
  %v99 = vmul.f32 %v96, %v78
  %v100 = vadd.f32 %v97, 1e-06
  %v101 = vadd.f32 %v98, 1e-06
  %v102 = vadd.f32 %v99, 1e-06
  %v103 = vrsqrt.pop %v100
  %v104 = vrsqrt.pop %v101
  %v105 = vrsqrt.pop %v102
  %v106 = vmul.f32 %v82, %v103
  %v107 = vmul.f32 %v83, %v104
  %v108 = vmul.f32 %v84, %v105
  %v110 = vlaneseq
  %v111 = vshrl.u32 %v110, 7
  %v112 = vsub.s32 0, %v111
  %v113 = vrot.slane %v65, %v112
  %v115 = vmul.f32 %v106, %v113
  %v116 = vmul.f32 %v107, %v113
  %v117 = vmul.f32 %v108, %v113
  %v119 = vlaneseq
  %v120 = vshrl.u32 %v119, 7
  %v121 = vsub.s32 0, %v120
  %v122 = vrot.slane %v66, %v121
  %v124 = vadd.f32 %v115, %v122
  %v125 = vadd.f32 %v116, %v122
  %v126 = vadd.f32 %v117, %v122
  %v127 = vld [vmem:[%s4] sm:$0xff]
  %v128 = vld [vmem:[%s4 + $0x8] sm:$0xff]
  %v129 = vld [vmem:[%s4 + $0x10] sm:$0xff]
  %v130 = vld [vmem:[%s4 + $0x18] sm:$0xff]
  %v131 = vld [vmem:[%s4 + $0x20] sm:$0xff]
  %v132 = vld [vmem:[%s4 + $0x28] sm:$0xff]
  %v133 = vld [vmem:[%s4 + $0x30] sm:$0xff]
  %v134 = vld [vmem:[%s4 + $0x38] sm:$0xff]
  %v135 = vld [vmem:[%s5] sm:$0x1]
  %v137 = vlaneseq
  %v138 = vshrl.u32 %v137, 7
  %v139 = vsub.s32 0, %v138
  %v140 = vrot.slane %v135, %v139
  %v143 = vsel %vm67, %v124, 0
  %v146 = vsel %vm67, %v125, 0
  %v149 = vsel %vm67, %v126, 0
  %151 = vmatprep.subr.mxu0 0.0
  %152 = vmatpush1.msra.mxu0 0.0
  %153 = vmatprep.subr.mxu0 0.0
  %154 = vmatpush1.msra.mxu0 0.0
  %155 = vmatprep.subr.mxu0 0.0
  %156 = vmatpush1.msra.mxu0 0.0
  %157 = vmatprep.subr.mxu0 0.0
  %158 = vmatpush1.msra.mxu0 0.0
  %159 = vmatprep.subr.mxu0 0.0
  %160 = vmatpush1.msra.mxu0 0.0
  %161 = vmatprep.subr.mxu0 0.0
  %162 = vmatpush1.msra.mxu0 0.0
  %163 = vmatprep.subr.mxu0 0.0
  %164 = vmatpush1.msra.mxu0 0.0
  %165 = vmatprep.subr.mxu0 0.0
  %166 = vmatpush1.msra.mxu0 0.0
  %167 = vmatprep.subr.mxu0 0.0
  %168 = vmatpush1.msra.mxu0 %v134
  %169 = vmatprep.subr.mxu0 0.0
  %170 = vmatpush1.msra.mxu0 %v133
  %171 = vmatprep.subr.mxu0 0.0
  %172 = vmatpush1.msra.mxu0 %v132
  %173 = vmatprep.subr.mxu0 0.0
  %174 = vmatpush1.msra.mxu0 %v131
  %175 = vmatprep.subr.mxu0 0.0
  %176 = vmatpush1.msra.mxu0 %v130
  %177 = vmatprep.subr.mxu0 0.0
  %178 = vmatpush1.msra.mxu0 %v129
  %179 = vmatprep.subr.mxu0 0.0
  %180 = vmatpush1.msra.mxu0 %v128
  %181 = vmatprep.subr.mxu0 0.0
  %182 = vmatpush1.msra.mxu0 %v127
  %183 = vmatprep.subr.mxu0 0.0
  %184 = vmatpush2.msra.mxu0 0.0
  %185 = vmatprep.subr.mxu0 0.0
  %186 = vmatpush2.msra.mxu0 0.0
  %187 = vmatprep.subr.mxu0 0.0
  %188 = vmatpush2.msra.mxu0 0.0
  %189 = vmatprep.subr.mxu0 0.0
  %190 = vmatpush2.msra.mxu0 0.0
  %191 = vmatprep.subr.mxu0 0.0
  %192 = vmatpush2.msra.mxu0 0.0
  %193 = vmatprep.subr.mxu0 0.0
  %194 = vmatpush2.msra.mxu0 0.0
  %195 = vmatprep.subr.mxu0 0.0
  %196 = vmatpush2.msra.mxu0 0.0
  %197 = vmatprep.subr.mxu0 0.0
  %198 = vmatpush2.msra.mxu0 0.0
  %199 = vmatprep.subr.mxu0 0.0
  %200 = vmatpush2.msra.mxu0 0.0
  %201 = vmatprep.subr.mxu0 0.0
  %202 = vmatpush2.msra.mxu0 0.0
  %203 = vmatprep.subr.mxu0 0.0
  %204 = vmatpush2.msra.mxu0 0.0
  %205 = vmatprep.subr.mxu0 0.0
  %206 = vmatpush2.msra.mxu0 0.0
  %207 = vmatprep.subr.mxu0 0.0
  %208 = vmatpush2.msra.mxu0 0.0
  %209 = vmatprep.subr.mxu0 0.0
  %210 = vmatpush2.msra.mxu0 0.0
  %211 = vmatprep.subr.mxu0 0.0
  %212 = vmatpush2.msra.mxu0 0.0
  %213 = vmatprep.subr.mxu0 0.0
  %214 = vmatpush2.msra.mxu0 0.0
  %215 = vmatprep.mubr.f32.mxu0 0.0
  %216 = vmatmul.mubr.f32.gmra.mxu0 %v143
  %v217 = vpop.f32.mrf.mxu0
  %v218 = vadd.f32 %v140, %v217
  %v219 = vpop.f32.mrf.mxu0
  %220 = vmatprep.mubr.f32.mxu0 0.0
  %221 = vmatmul.mubr.f32.gmra.mxu0 %v146
  %v222 = vpop.f32.mrf.mxu0
  %v223 = vadd.f32 %v140, %v222
  %v224 = vpop.f32.mrf.mxu0
  %225 = vmatprep.mubr.f32.mxu0 0.0
  %226 = vmatmul.mubr.f32.gmra.mxu0 %v149
  %v227 = vpop.f32.mrf.mxu0
  %v228 = vadd.f32 %v140, %v227
  %v229 = vpop.f32.mrf.mxu0
  %230 = vdwg.mxu0
  %v231 = vld [vmem:[%s6] sm:$0xff]
  %v232 = vld [vmem:[%s6 + $0x8] sm:$0xff]
  %v233 = vld [vmem:[%s6 + $0x10] sm:$0xff]
  %v234 = vld [vmem:[%s6 + $0x18] sm:$0xff]
  %v235 = vld [vmem:[%s6 + $0x20] sm:$0xff]
  %v236 = vld [vmem:[%s6 + $0x28] sm:$0xff]
  %v237 = vld [vmem:[%s6 + $0x30] sm:$0xff]
  %v238 = vld [vmem:[%s6 + $0x38] sm:$0xff]
  %v239 = vld [vmem:[%s7] sm:$0x1]
  %v241 = vlaneseq
  %v242 = vshrl.u32 %v241, 7
  %v243 = vsub.s32 0, %v242
  %v244 = vrot.slane %v239, %v243
  %246 = vmatprep.subr.mxu0 0.0
  %247 = vmatpush1.msra.mxu0 0.0
  %248 = vmatprep.subr.mxu0 0.0
  %249 = vmatpush1.msra.mxu0 0.0
  %250 = vmatprep.subr.mxu0 0.0
  %251 = vmatpush1.msra.mxu0 0.0
  %252 = vmatprep.subr.mxu0 0.0
  %253 = vmatpush1.msra.mxu0 0.0
  %254 = vmatprep.subr.mxu0 0.0
  %255 = vmatpush1.msra.mxu0 0.0
  %256 = vmatprep.subr.mxu0 0.0
  %257 = vmatpush1.msra.mxu0 0.0
  %258 = vmatprep.subr.mxu0 0.0
  %259 = vmatpush1.msra.mxu0 0.0
  %260 = vmatprep.subr.mxu0 0.0
  %261 = vmatpush1.msra.mxu0 0.0
  %262 = vmatprep.subr.mxu0 0.0
  %263 = vmatpush1.msra.mxu0 %v238
  %264 = vmatprep.subr.mxu0 0.0
  %265 = vmatpush1.msra.mxu0 %v237
  %266 = vmatprep.subr.mxu0 0.0
  %267 = vmatpush1.msra.mxu0 %v236
  %268 = vmatprep.subr.mxu0 0.0
  %269 = vmatpush1.msra.mxu0 %v235
  %270 = vmatprep.subr.mxu0 0.0
  %271 = vmatpush1.msra.mxu0 %v234
  %272 = vmatprep.subr.mxu0 0.0
  %273 = vmatpush1.msra.mxu0 %v233
  %274 = vmatprep.subr.mxu0 0.0
  %275 = vmatpush1.msra.mxu0 %v232
  %276 = vmatprep.subr.mxu0 0.0
  %277 = vmatpush1.msra.mxu0 %v231
  %278 = vmatprep.subr.mxu0 0.0
  %279 = vmatpush2.msra.mxu0 0.0
  %280 = vmatprep.subr.mxu0 0.0
  %281 = vmatpush2.msra.mxu0 0.0
  %282 = vmatprep.subr.mxu0 0.0
  %283 = vmatpush2.msra.mxu0 0.0
  %284 = vmatprep.subr.mxu0 0.0
  %285 = vmatpush2.msra.mxu0 0.0
  %286 = vmatprep.subr.mxu0 0.0
  %287 = vmatpush2.msra.mxu0 0.0
  %288 = vmatprep.subr.mxu0 0.0
  %289 = vmatpush2.msra.mxu0 0.0
  %290 = vmatprep.subr.mxu0 0.0
  %291 = vmatpush2.msra.mxu0 0.0
  %292 = vmatprep.subr.mxu0 0.0
  %293 = vmatpush2.msra.mxu0 0.0
  %294 = vmatprep.subr.mxu0 0.0
  %295 = vmatpush2.msra.mxu0 0.0
  %296 = vmatprep.subr.mxu0 0.0
  %297 = vmatpush2.msra.mxu0 0.0
  %298 = vmatprep.subr.mxu0 0.0
  %299 = vmatpush2.msra.mxu0 0.0
  %300 = vmatprep.subr.mxu0 0.0
  %301 = vmatpush2.msra.mxu0 0.0
  %302 = vmatprep.subr.mxu0 0.0
  %303 = vmatpush2.msra.mxu0 0.0
  %304 = vmatprep.subr.mxu0 0.0
  %305 = vmatpush2.msra.mxu0 0.0
  %306 = vmatprep.subr.mxu0 0.0
  %307 = vmatpush2.msra.mxu0 0.0
  %308 = vmatprep.subr.mxu0 0.0
  %309 = vmatpush2.msra.mxu0 0.0
  %310 = vmatprep.mubr.f32.mxu0 0.0
  %311 = vmatmul.mubr.f32.gmra.mxu0 %v143
  %v312 = vpop.f32.mrf.mxu0
  %v313 = vadd.f32 %v244, %v312
  %v314 = vpop.f32.mrf.mxu0
  %315 = vmatprep.mubr.f32.mxu0 0.0
  %316 = vmatmul.mubr.f32.gmra.mxu0 %v146
  %v317 = vpop.f32.mrf.mxu0
  %v318 = vadd.f32 %v244, %v317
  %v319 = vpop.f32.mrf.mxu0
  %320 = vmatprep.mubr.f32.mxu0 0.0
  %321 = vmatmul.mubr.f32.gmra.mxu0 %v149
  %v322 = vpop.f32.mrf.mxu0
  %v323 = vadd.f32 %v244, %v322
  %v324 = vpop.f32.mrf.mxu0
  %325 = vdwg.mxu0
  %v326 = vld [vmem:[%s8] sm:$0xff]
  %v327 = vld [vmem:[%s8 + $0x8] sm:$0xff]
  %v328 = vld [vmem:[%s8 + $0x10] sm:$0xff]
  %v329 = vld [vmem:[%s8 + $0x18] sm:$0xff]
  %v330 = vld [vmem:[%s8 + $0x20] sm:$0xff]
  %v331 = vld [vmem:[%s8 + $0x28] sm:$0xff]
  %v332 = vld [vmem:[%s8 + $0x30] sm:$0xff]
  %v333 = vld [vmem:[%s8 + $0x38] sm:$0xff]
  %v334 = vld [vmem:[%s9] sm:$0x1]
  %v336 = vlaneseq
  %v337 = vshrl.u32 %v336, 7
  %v338 = vsub.s32 0, %v337
  %v339 = vrot.slane %v334, %v338
  %341 = vmatprep.subr.mxu0 0.0
  %342 = vmatpush1.msra.mxu0 0.0
  %343 = vmatprep.subr.mxu0 0.0
  %344 = vmatpush1.msra.mxu0 0.0
  %345 = vmatprep.subr.mxu0 0.0
  %346 = vmatpush1.msra.mxu0 0.0
  %347 = vmatprep.subr.mxu0 0.0
  %348 = vmatpush1.msra.mxu0 0.0
  %349 = vmatprep.subr.mxu0 0.0
  %350 = vmatpush1.msra.mxu0 0.0
  %351 = vmatprep.subr.mxu0 0.0
  %352 = vmatpush1.msra.mxu0 0.0
  %353 = vmatprep.subr.mxu0 0.0
  %354 = vmatpush1.msra.mxu0 0.0
  %355 = vmatprep.subr.mxu0 0.0
  %356 = vmatpush1.msra.mxu0 0.0
  %357 = vmatprep.subr.mxu0 0.0
  %358 = vmatpush1.msra.mxu0 %v333
  %359 = vmatprep.subr.mxu0 0.0
  %360 = vmatpush1.msra.mxu0 %v332
  %361 = vmatprep.subr.mxu0 0.0
  %362 = vmatpush1.msra.mxu0 %v331
  %363 = vmatprep.subr.mxu0 0.0
  %364 = vmatpush1.msra.mxu0 %v330
  %365 = vmatprep.subr.mxu0 0.0
  %366 = vmatpush1.msra.mxu0 %v329
  %367 = vmatprep.subr.mxu0 0.0
  %368 = vmatpush1.msra.mxu0 %v328
  %369 = vmatprep.subr.mxu0 0.0
  %370 = vmatpush1.msra.mxu0 %v327
  %371 = vmatprep.subr.mxu0 0.0
  %372 = vmatpush1.msra.mxu0 %v326
  %373 = vmatprep.subr.mxu0 0.0
  %374 = vmatpush2.msra.mxu0 0.0
  %375 = vmatprep.subr.mxu0 0.0
  %376 = vmatpush2.msra.mxu0 0.0
  %377 = vmatprep.subr.mxu0 0.0
  %378 = vmatpush2.msra.mxu0 0.0
  %379 = vmatprep.subr.mxu0 0.0
  %380 = vmatpush2.msra.mxu0 0.0
  %381 = vmatprep.subr.mxu0 0.0
  %382 = vmatpush2.msra.mxu0 0.0
  %383 = vmatprep.subr.mxu0 0.0
  %384 = vmatpush2.msra.mxu0 0.0
  %385 = vmatprep.subr.mxu0 0.0
  %386 = vmatpush2.msra.mxu0 0.0
  %387 = vmatprep.subr.mxu0 0.0
  %388 = vmatpush2.msra.mxu0 0.0
  %389 = vmatprep.subr.mxu0 0.0
  %390 = vmatpush2.msra.mxu0 0.0
  %391 = vmatprep.subr.mxu0 0.0
  %392 = vmatpush2.msra.mxu0 0.0
  %393 = vmatprep.subr.mxu0 0.0
  %394 = vmatpush2.msra.mxu0 0.0
  %395 = vmatprep.subr.mxu0 0.0
  %396 = vmatpush2.msra.mxu0 0.0
  %397 = vmatprep.subr.mxu0 0.0
  %398 = vmatpush2.msra.mxu0 0.0
  %399 = vmatprep.subr.mxu0 0.0
  %400 = vmatpush2.msra.mxu0 0.0
  %401 = vmatprep.subr.mxu0 0.0
  %402 = vmatpush2.msra.mxu0 0.0
  %403 = vmatprep.subr.mxu0 0.0
  %404 = vmatpush2.msra.mxu0 0.0
  %405 = vmatprep.mubr.f32.mxu0 0.0
  %406 = vmatmul.mubr.f32.gmra.mxu0 %v143
  %v407 = vpop.f32.mrf.mxu0
  %v408 = vadd.f32 %v339, %v407
  %v409 = vpop.f32.mrf.mxu0
  %410 = vmatprep.mubr.f32.mxu0 0.0
  %411 = vmatmul.mubr.f32.gmra.mxu0 %v146
  %v412 = vpop.f32.mrf.mxu0
  %v413 = vadd.f32 %v339, %v412
  %v414 = vpop.f32.mrf.mxu0
  %415 = vmatprep.mubr.f32.mxu0 0.0
  %416 = vmatmul.mubr.f32.gmra.mxu0 %v149
  %v417 = vpop.f32.mrf.mxu0
  %v418 = vadd.f32 %v339, %v417
  %v419 = vpop.f32.mrf.mxu0
  %420 = vdwg.mxu0
  %v421 = vld [vmem:[%s10] sm:$0xff]
  %v422 = vld [vmem:[%s10 + $0x8] sm:$0xff]
  %v423 = vld [vmem:[%s10 + $0x10] sm:$0xff]
  %v424 = vld [vmem:[%s10 + $0x18] sm:$0xff]
  %v425 = vld [vmem:[%s10 + $0x20] sm:$0xff]
  %v426 = vld [vmem:[%s10 + $0x28] sm:$0xff]
  %v427 = vld [vmem:[%s10 + $0x30] sm:$0xff]
  %v428 = vld [vmem:[%s10 + $0x38] sm:$0xff]
  %v429 = vlaneseq
  %v430 = vand.u32 %v429, 127
  %vm431 = vcmp.ge.s32.totalorder %v430, 0
  %vm432 = vcmp.lt.s32.totalorder %v430, 16
  %vm433 = vmand %vm431, %vm432
  %v434 = vsel %vm433, 1, 0
  %v435 = vcvt.s32.f32 %v434
  %v436 = vmul.f32 %v218, %v435
  %v437 = vmul.f32 %v223, %v435
  %v438 = vmul.f32 %v228, %v435
  %v440 = vsel %vm67, %v436, 0
  %v443 = vsel %vm67, %v437, 0
  %v446 = vsel %vm67, %v438, 0
  %v449 = vsel %vm67, %v313, 0
  %v452 = vsel %vm67, %v318, 0
  %v455 = vsel %vm67, %v323, 0
  %457 = vmatprep.subr.mxu0 0.0
  %458 = vmatpush1.xpose.msra.mxu0 0.0
  %459 = vmatprep.subr.mxu0 0.0
  %460 = vmatpush1.xpose.msra.mxu0 0.0
  %461 = vmatprep.subr.mxu0 0.0
  %462 = vmatpush1.xpose.msra.mxu0 0.0
  %463 = vmatprep.subr.mxu0 0.0
  %464 = vmatpush1.xpose.msra.mxu0 0.0
  %465 = vmatprep.subr.mxu0 0.0
  %466 = vmatpush1.xpose.msra.mxu0 0.0
  %467 = vmatprep.subr.mxu0 0.0
  %468 = vmatpush1.xpose.msra.mxu0 0.0
  %469 = vmatprep.subr.mxu0 0.0
  %470 = vmatpush1.xpose.msra.mxu0 0.0
  %471 = vmatprep.subr.mxu0 0.0
  %472 = vmatpush1.xpose.msra.mxu0 0.0
  %473 = vmatprep.subr.mxu0 0.0
  %474 = vmatpush1.xpose.msra.mxu0 0.0
  %475 = vmatprep.subr.mxu0 0.0
  %476 = vmatpush1.xpose.msra.mxu0 0.0
  %477 = vmatprep.subr.mxu0 0.0
  %478 = vmatpush1.xpose.msra.mxu0 0.0
  %479 = vmatprep.subr.mxu0 0.0
  %480 = vmatpush1.xpose.msra.mxu0 0.0
  %481 = vmatprep.subr.mxu0 0.0
  %482 = vmatpush1.xpose.msra.mxu0 0.0
  %483 = vmatprep.subr.mxu0 0.0
  %484 = vmatpush1.xpose.msra.mxu0 %v455
  %485 = vmatprep.subr.mxu0 0.0
  %486 = vmatpush1.xpose.msra.mxu0 %v452
  %487 = vmatprep.subr.mxu0 0.0
  %488 = vmatpush1.xpose.msra.mxu0 %v449
  %489 = vmatprep.subr.mxu0 0.0
  %490 = vmatpush2.xpose.msra.mxu0 0.0
  %491 = vmatprep.subr.mxu0 0.0
  %492 = vmatpush2.xpose.msra.mxu0 0.0
  %493 = vmatprep.subr.mxu0 0.0
  %494 = vmatpush2.xpose.msra.mxu0 0.0
  %495 = vmatprep.subr.mxu0 0.0
  %496 = vmatpush2.xpose.msra.mxu0 0.0
  %497 = vmatprep.subr.mxu0 0.0
  %498 = vmatpush2.xpose.msra.mxu0 0.0
  %499 = vmatprep.subr.mxu0 0.0
  %500 = vmatpush2.xpose.msra.mxu0 0.0
  %501 = vmatprep.subr.mxu0 0.0
  %502 = vmatpush2.xpose.msra.mxu0 0.0
  %503 = vmatprep.subr.mxu0 0.0
  %504 = vmatpush2.xpose.msra.mxu0 0.0
  %505 = vmatprep.subr.mxu0 0.0
  %506 = vmatpush2.xpose.msra.mxu0 0.0
  %507 = vmatprep.subr.mxu0 0.0
  %508 = vmatpush2.xpose.msra.mxu0 0.0
  %509 = vmatprep.subr.mxu0 0.0
  %510 = vmatpush2.xpose.msra.mxu0 0.0
  %511 = vmatprep.subr.mxu0 0.0
  %512 = vmatpush2.xpose.msra.mxu0 0.0
  %513 = vmatprep.subr.mxu0 0.0
  %514 = vmatpush2.xpose.msra.mxu0 0.0
  %515 = vmatprep.subr.mxu0 0.0
  %516 = vmatpush2.xpose.msra.mxu0 0.0
  %517 = vmatprep.subr.mxu0 0.0
  %518 = vmatpush2.xpose.msra.mxu0 0.0
  %519 = vmatprep.subr.mxu0 0.0
  %520 = vmatpush2.xpose.msra.mxu0 0.0
  %521 = vmatprep.mubr.f32.mxu0 0.0
  %522 = vmatmul.mubr.f32.gmra.mxu0 %v440
  %v523 = vpop.f32.mrf.mxu0
  %v524 = vadd.f32 0.0, %v523
  %v525 = vpop.f32.mrf.mxu0
  %526 = vmatprep.mubr.f32.mxu0 0.0
  %527 = vmatmul.mubr.f32.gmra.mxu0 %v443
  %v528 = vpop.f32.mrf.mxu0
  %v529 = vadd.f32 0.0, %v528
  %v530 = vpop.f32.mrf.mxu0
  %531 = vmatprep.mubr.f32.mxu0 0.0
  %532 = vmatmul.mubr.f32.gmra.mxu0 %v446
  %v533 = vpop.f32.mrf.mxu0
  %v534 = vadd.f32 0.0, %v533
  %v535 = vpop.f32.mrf.mxu0
  %536 = vdwg.mxu0
  %v537 = vmul.f32 %v524, 0.25
  %v538 = vmul.f32 %v529, 0.25
  %v539 = vmul.f32 %v534, 0.25
  %v540 = vadd.f32 %v537, %v62
  %v541 = vadd.f32 %v538, %v63
  %v542 = vadd.f32 %v539, %v64
  %vm543 = vcmask 162816
  %v544 = vsel %vm543, %v540, -inf
  %545 = vmax.xlane.f32.xlu0 %v544
  %v546 = vpop.xlane.xlu0 %545
  %v547 = vsel %vm543, %v541, -inf
  %548 = vmax.xlane.f32.xlu0 %v547
  %v549 = vpop.xlane.xlu0 %548
  %vm550 = vcmask 158720
  %v551 = vsel %vm550, %v542, -inf
  %552 = vmax.xlane.f32.xlu0 %v551
  %v553 = vpop.xlane.xlu0 %552
  %v554 = vsub.f32 %v540, %v546
  %v555 = vsub.f32 %v541, %v549
  %v556 = vsub.f32 %v542, %v553
  %v557 = vmul.f32 %v554, 1.442695
  %v558 = vpow.pop %v557
  %v559 = vmul.f32 %v555, 1.442695
  %v560 = vpow.pop %v559
  %v561 = vmul.f32 %v556, 1.442695
  %v562 = vpow.pop %v561
  %v563 = vsel %vm543, %v558, 0.0
  %564 = vadd.xlane.f32.xlu0 %v563
  %v565 = vpop.xlane.xlu0 %564
  %v566 = vsel %vm543, %v560, 0.0
  %567 = vadd.xlane.f32.xlu0 %v566
  %v568 = vpop.xlane.xlu0 %567
  %v569 = vsel %vm550, %v562, 0.0
  %570 = vadd.xlane.f32.xlu0 %v569
  %v571 = vpop.xlane.xlu0 %570
  %v572 = vrcp.pop %v565
  %v573 = vrcp.pop %v568
  %v574 = vrcp.pop %v571
  %v575 = vmul.f32 %v558, %v572
  %v576 = vmul.f32 %v560, %v573
  %v577 = vmul.f32 %v562, %v574
  %v578 = vmul.f32 %v408, %v435
  %v579 = vmul.f32 %v413, %v435
  %v580 = vmul.f32 %v418, %v435
  %v582 = vsel %vm543, %v575, 0
  %v585 = vsel %vm543, %v576, 0
  %v588 = vsel %vm543, %v577, 0
  %vm590 = vcmask 1043456
  %v592 = vsel %vm590, %v580, 0
  %594 = vmatprep.subr.mxu0 0.0
  %595 = vmatpush1.msra.mxu0 0.0
  %596 = vmatprep.subr.mxu0 0.0
  %597 = vmatpush1.msra.mxu0 0.0
  %598 = vmatprep.subr.mxu0 0.0
  %599 = vmatpush1.msra.mxu0 0.0
  %600 = vmatprep.subr.mxu0 0.0
  %601 = vmatpush1.msra.mxu0 0.0
  %602 = vmatprep.subr.mxu0 0.0
  %603 = vmatpush1.msra.mxu0 0.0
  %604 = vmatprep.subr.mxu0 0.0
  %605 = vmatpush1.msra.mxu0 0.0
  %606 = vmatprep.subr.mxu0 0.0
  %607 = vmatpush1.msra.mxu0 0.0
  %608 = vmatprep.subr.mxu0 0.0
  %609 = vmatpush1.msra.mxu0 0.0
  %610 = vmatprep.subr.mxu0 0.0
  %611 = vmatpush1.msra.mxu0 0.0
  %612 = vmatprep.subr.mxu0 0.0
  %613 = vmatpush1.msra.mxu0 0.0
  %614 = vmatprep.subr.mxu0 0.0
  %615 = vmatpush1.msra.mxu0 0.0
  %616 = vmatprep.subr.mxu0 0.0
  %617 = vmatpush1.msra.mxu0 0.0
  %618 = vmatprep.subr.mxu0 0.0
  %619 = vmatpush1.msra.mxu0 0.0
  %620 = vmatprep.subr.mxu0 0.0
  %621 = vmatpush1.msra.mxu0 %v592
  %622 = vmatprep.subr.mxu0 0.0
  %623 = vmatpush1.msra.mxu0 %v579
  %624 = vmatprep.subr.mxu0 0.0
  %625 = vmatpush1.msra.mxu0 %v578
  %626 = vmatprep.subr.mxu0 0.0
  %627 = vmatpush2.msra.mxu0 0.0
  %628 = vmatprep.subr.mxu0 0.0
  %629 = vmatpush2.msra.mxu0 0.0
  %630 = vmatprep.subr.mxu0 0.0
  %631 = vmatpush2.msra.mxu0 0.0
  %632 = vmatprep.subr.mxu0 0.0
  %633 = vmatpush2.msra.mxu0 0.0
  %634 = vmatprep.subr.mxu0 0.0
  %635 = vmatpush2.msra.mxu0 0.0
  %636 = vmatprep.subr.mxu0 0.0
  %637 = vmatpush2.msra.mxu0 0.0
  %638 = vmatprep.subr.mxu0 0.0
  %639 = vmatpush2.msra.mxu0 0.0
  %640 = vmatprep.subr.mxu0 0.0
  %641 = vmatpush2.msra.mxu0 0.0
  %642 = vmatprep.subr.mxu0 0.0
  %643 = vmatpush2.msra.mxu0 0.0
  %644 = vmatprep.subr.mxu0 0.0
  %645 = vmatpush2.msra.mxu0 0.0
  %646 = vmatprep.subr.mxu0 0.0
  %647 = vmatpush2.msra.mxu0 0.0
  %648 = vmatprep.subr.mxu0 0.0
  %649 = vmatpush2.msra.mxu0 0.0
  %650 = vmatprep.subr.mxu0 0.0
  %651 = vmatpush2.msra.mxu0 0.0
  %652 = vmatprep.subr.mxu0 0.0
  %653 = vmatpush2.msra.mxu0 0.0
  %654 = vmatprep.subr.mxu0 0.0
  %655 = vmatpush2.msra.mxu0 0.0
  %656 = vmatprep.subr.mxu0 0.0
  %657 = vmatpush2.msra.mxu0 0.0
  %658 = vmatprep.mubr.f32.mxu0 0.0
  %659 = vmatmul.mubr.f32.gmra.mxu0 %v582
  %v660 = vpop.f32.mrf.mxu0
  %v661 = vadd.f32 0.0, %v660
  %v662 = vpop.f32.mrf.mxu0
  %663 = vmatprep.mubr.f32.mxu0 0.0
  %664 = vmatmul.mubr.f32.gmra.mxu0 %v585
  %v665 = vpop.f32.mrf.mxu0
  %v666 = vadd.f32 0.0, %v665
  %v667 = vpop.f32.mrf.mxu0
  %668 = vmatprep.mubr.f32.mxu0 0.0
  %669 = vmatmul.mubr.f32.gmra.mxu0 %v588
  %v670 = vpop.f32.mrf.mxu0
  %v671 = vadd.f32 0.0, %v670
  %v672 = vpop.f32.mrf.mxu0
  %673 = vdwg.mxu0
  %vm674 = vcmp.ge.s32.totalorder %v430, 16
  %vm675 = vcmp.lt.s32.totalorder %v430, 32
  %vm676 = vmand %vm674, %vm675
  %v677 = vsel %vm676, 1, 0
  %v678 = vcvt.s32.f32 %v677
  %v679 = vmul.f32 %v218, %v678
  %v680 = vmul.f32 %v223, %v678
  %v681 = vmul.f32 %v228, %v678
  %v683 = vsel %vm67, %v679, 0
  %v686 = vsel %vm67, %v680, 0
  %v689 = vsel %vm67, %v681, 0
  %691 = vmatprep.subr.mxu0 0.0
  %692 = vmatpush1.xpose.msra.mxu0 0.0
  %693 = vmatprep.subr.mxu0 0.0
  %694 = vmatpush1.xpose.msra.mxu0 0.0
  %695 = vmatprep.subr.mxu0 0.0
  %696 = vmatpush1.xpose.msra.mxu0 0.0
  %697 = vmatprep.subr.mxu0 0.0
  %698 = vmatpush1.xpose.msra.mxu0 0.0
  %699 = vmatprep.subr.mxu0 0.0
  %700 = vmatpush1.xpose.msra.mxu0 0.0
  %701 = vmatprep.subr.mxu0 0.0
  %702 = vmatpush1.xpose.msra.mxu0 0.0
  %703 = vmatprep.subr.mxu0 0.0
  %704 = vmatpush1.xpose.msra.mxu0 0.0
  %705 = vmatprep.subr.mxu0 0.0
  %706 = vmatpush1.xpose.msra.mxu0 0.0
  %707 = vmatprep.subr.mxu0 0.0
  %708 = vmatpush1.xpose.msra.mxu0 0.0
  %709 = vmatprep.subr.mxu0 0.0
  %710 = vmatpush1.xpose.msra.mxu0 0.0
  %711 = vmatprep.subr.mxu0 0.0
  %712 = vmatpush1.xpose.msra.mxu0 0.0
  %713 = vmatprep.subr.mxu0 0.0
  %714 = vmatpush1.xpose.msra.mxu0 0.0
  %715 = vmatprep.subr.mxu0 0.0
  %716 = vmatpush1.xpose.msra.mxu0 0.0
  %717 = vmatprep.subr.mxu0 0.0
  %718 = vmatpush1.xpose.msra.mxu0 %v455
  %719 = vmatprep.subr.mxu0 0.0
  %720 = vmatpush1.xpose.msra.mxu0 %v452
  %721 = vmatprep.subr.mxu0 0.0
  %722 = vmatpush1.xpose.msra.mxu0 %v449
  %723 = vmatprep.subr.mxu0 0.0
  %724 = vmatpush2.xpose.msra.mxu0 0.0
  %725 = vmatprep.subr.mxu0 0.0
  %726 = vmatpush2.xpose.msra.mxu0 0.0
  %727 = vmatprep.subr.mxu0 0.0
  %728 = vmatpush2.xpose.msra.mxu0 0.0
  %729 = vmatprep.subr.mxu0 0.0
  %730 = vmatpush2.xpose.msra.mxu0 0.0
  %731 = vmatprep.subr.mxu0 0.0
  %732 = vmatpush2.xpose.msra.mxu0 0.0
  %733 = vmatprep.subr.mxu0 0.0
  %734 = vmatpush2.xpose.msra.mxu0 0.0
  %735 = vmatprep.subr.mxu0 0.0
  %736 = vmatpush2.xpose.msra.mxu0 0.0
  %737 = vmatprep.subr.mxu0 0.0
  %738 = vmatpush2.xpose.msra.mxu0 0.0
  %739 = vmatprep.subr.mxu0 0.0
  %740 = vmatpush2.xpose.msra.mxu0 0.0
  %741 = vmatprep.subr.mxu0 0.0
  %742 = vmatpush2.xpose.msra.mxu0 0.0
  %743 = vmatprep.subr.mxu0 0.0
  %744 = vmatpush2.xpose.msra.mxu0 0.0
  %745 = vmatprep.subr.mxu0 0.0
  %746 = vmatpush2.xpose.msra.mxu0 0.0
  %747 = vmatprep.subr.mxu0 0.0
  %748 = vmatpush2.xpose.msra.mxu0 0.0
  %749 = vmatprep.subr.mxu0 0.0
  %750 = vmatpush2.xpose.msra.mxu0 0.0
  %751 = vmatprep.subr.mxu0 0.0
  %752 = vmatpush2.xpose.msra.mxu0 0.0
  %753 = vmatprep.subr.mxu0 0.0
  %754 = vmatpush2.xpose.msra.mxu0 0.0
  %755 = vmatprep.mubr.f32.mxu0 0.0
  %756 = vmatmul.mubr.f32.gmra.mxu0 %v683
  %v757 = vpop.f32.mrf.mxu0
  %v758 = vadd.f32 0.0, %v757
  %v759 = vpop.f32.mrf.mxu0
  %760 = vmatprep.mubr.f32.mxu0 0.0
  %761 = vmatmul.mubr.f32.gmra.mxu0 %v686
  %v762 = vpop.f32.mrf.mxu0
  %v763 = vadd.f32 0.0, %v762
  %v764 = vpop.f32.mrf.mxu0
  %765 = vmatprep.mubr.f32.mxu0 0.0
  %766 = vmatmul.mubr.f32.gmra.mxu0 %v689
  %v767 = vpop.f32.mrf.mxu0
  %v768 = vadd.f32 0.0, %v767
  %v769 = vpop.f32.mrf.mxu0
  %770 = vdwg.mxu0
  %v771 = vmul.f32 %v758, 0.25
  %v772 = vmul.f32 %v763, 0.25
  %v773 = vmul.f32 %v768, 0.25
  %v774 = vadd.f32 %v771, %v62
  %v775 = vadd.f32 %v772, %v63
  %v776 = vadd.f32 %v773, %v64
  %v777 = vsel %vm543, %v774, -inf
  %778 = vmax.xlane.f32.xlu0 %v777
  %v779 = vpop.xlane.xlu0 %778
  %v780 = vsel %vm543, %v775, -inf
  %781 = vmax.xlane.f32.xlu0 %v780
  %v782 = vpop.xlane.xlu0 %781
  %v783 = vsel %vm550, %v776, -inf
  %784 = vmax.xlane.f32.xlu0 %v783
  %v785 = vpop.xlane.xlu0 %784
  %v786 = vsub.f32 %v774, %v779
  %v787 = vsub.f32 %v775, %v782
  %v788 = vsub.f32 %v776, %v785
  %v789 = vmul.f32 %v786, 1.442695
  %v790 = vpow.pop %v789
  %v791 = vmul.f32 %v787, 1.442695
  %v792 = vpow.pop %v791
  %v793 = vmul.f32 %v788, 1.442695
  %v794 = vpow.pop %v793
  %v795 = vsel %vm543, %v790, 0.0
  %796 = vadd.xlane.f32.xlu0 %v795
  %v797 = vpop.xlane.xlu0 %796
  %v798 = vsel %vm543, %v792, 0.0
  %799 = vadd.xlane.f32.xlu0 %v798
  %v800 = vpop.xlane.xlu0 %799
  %v801 = vsel %vm550, %v794, 0.0
  %802 = vadd.xlane.f32.xlu0 %v801
  %v803 = vpop.xlane.xlu0 %802
  %v804 = vrcp.pop %v797
  %v805 = vrcp.pop %v800
  %v806 = vrcp.pop %v803
  %v807 = vmul.f32 %v790, %v804
  %v808 = vmul.f32 %v792, %v805
  %v809 = vmul.f32 %v794, %v806
  %v810 = vmul.f32 %v408, %v678
  %v811 = vmul.f32 %v413, %v678
  %v812 = vmul.f32 %v418, %v678
  %v814 = vsel %vm543, %v807, 0
  %v817 = vsel %vm543, %v808, 0
  %v820 = vsel %vm543, %v809, 0
  %v823 = vsel %vm590, %v812, 0
  %825 = vmatprep.subr.mxu0 0.0
  %826 = vmatpush1.msra.mxu0 0.0
  %827 = vmatprep.subr.mxu0 0.0
  %828 = vmatpush1.msra.mxu0 0.0
  %829 = vmatprep.subr.mxu0 0.0
  %830 = vmatpush1.msra.mxu0 0.0
  %831 = vmatprep.subr.mxu0 0.0
  %832 = vmatpush1.msra.mxu0 0.0
  %833 = vmatprep.subr.mxu0 0.0
  %834 = vmatpush1.msra.mxu0 0.0
  %835 = vmatprep.subr.mxu0 0.0
  %836 = vmatpush1.msra.mxu0 0.0
  %837 = vmatprep.subr.mxu0 0.0
  %838 = vmatpush1.msra.mxu0 0.0
  %839 = vmatprep.subr.mxu0 0.0
  %840 = vmatpush1.msra.mxu0 0.0
  %841 = vmatprep.subr.mxu0 0.0
  %842 = vmatpush1.msra.mxu0 0.0
  %843 = vmatprep.subr.mxu0 0.0
  %844 = vmatpush1.msra.mxu0 0.0
  %845 = vmatprep.subr.mxu0 0.0
  %846 = vmatpush1.msra.mxu0 0.0
  %847 = vmatprep.subr.mxu0 0.0
  %848 = vmatpush1.msra.mxu0 0.0
  %849 = vmatprep.subr.mxu0 0.0
  %850 = vmatpush1.msra.mxu0 0.0
  %851 = vmatprep.subr.mxu0 0.0
  %852 = vmatpush1.msra.mxu0 %v823
  %853 = vmatprep.subr.mxu0 0.0
  %854 = vmatpush1.msra.mxu0 %v811
  %855 = vmatprep.subr.mxu0 0.0
  %856 = vmatpush1.msra.mxu0 %v810
  %857 = vmatprep.subr.mxu0 0.0
  %858 = vmatpush2.msra.mxu0 0.0
  %859 = vmatprep.subr.mxu0 0.0
  %860 = vmatpush2.msra.mxu0 0.0
  %861 = vmatprep.subr.mxu0 0.0
  %862 = vmatpush2.msra.mxu0 0.0
  %863 = vmatprep.subr.mxu0 0.0
  %864 = vmatpush2.msra.mxu0 0.0
  %865 = vmatprep.subr.mxu0 0.0
  %866 = vmatpush2.msra.mxu0 0.0
  %867 = vmatprep.subr.mxu0 0.0
  %868 = vmatpush2.msra.mxu0 0.0
  %869 = vmatprep.subr.mxu0 0.0
  %870 = vmatpush2.msra.mxu0 0.0
  %871 = vmatprep.subr.mxu0 0.0
  %872 = vmatpush2.msra.mxu0 0.0
  %873 = vmatprep.subr.mxu0 0.0
  %874 = vmatpush2.msra.mxu0 0.0
  %875 = vmatprep.subr.mxu0 0.0
  %876 = vmatpush2.msra.mxu0 0.0
  %877 = vmatprep.subr.mxu0 0.0
  %878 = vmatpush2.msra.mxu0 0.0
  %879 = vmatprep.subr.mxu0 0.0
  %880 = vmatpush2.msra.mxu0 0.0
  %881 = vmatprep.subr.mxu0 0.0
  %882 = vmatpush2.msra.mxu0 0.0
  %883 = vmatprep.subr.mxu0 0.0
  %884 = vmatpush2.msra.mxu0 0.0
  %885 = vmatprep.subr.mxu0 0.0
  %886 = vmatpush2.msra.mxu0 0.0
  %887 = vmatprep.subr.mxu0 0.0
  %888 = vmatpush2.msra.mxu0 0.0
  %889 = vmatprep.mubr.f32.mxu0 0.0
  %890 = vmatmul.mubr.f32.gmra.mxu0 %v814
  %v891 = vpop.f32.mrf.mxu0
  %v892 = vadd.f32 0.0, %v891
  %v893 = vpop.f32.mrf.mxu0
  %894 = vmatprep.mubr.f32.mxu0 0.0
  %895 = vmatmul.mubr.f32.gmra.mxu0 %v817
  %v896 = vpop.f32.mrf.mxu0
  %v897 = vadd.f32 0.0, %v896
  %v898 = vpop.f32.mrf.mxu0
  %899 = vmatprep.mubr.f32.mxu0 0.0
  %900 = vmatmul.mubr.f32.gmra.mxu0 %v820
  %v901 = vpop.f32.mrf.mxu0
  %v902 = vadd.f32 0.0, %v901
  %v903 = vpop.f32.mrf.mxu0
  %904 = vdwg.mxu0
  %v906 = vsel %vm67, %v892, 0
  %v909 = vsel %vm67, %v897, 0
  %v912 = vsel %vm67, %v902, 0
  %914 = vmatprep.subr.mxu0 0.0
  %915 = vmatpush1.msra.mxu0 0.0
  %916 = vmatprep.subr.mxu0 0.0
  %917 = vmatpush1.msra.mxu0 0.0
  %918 = vmatprep.subr.mxu0 0.0
  %919 = vmatpush1.msra.mxu0 0.0
  %920 = vmatprep.subr.mxu0 0.0
  %921 = vmatpush1.msra.mxu0 0.0
  %922 = vmatprep.subr.mxu0 0.0
  %923 = vmatpush1.msra.mxu0 0.0
  %924 = vmatprep.subr.mxu0 0.0
  %925 = vmatpush1.msra.mxu0 0.0
  %926 = vmatprep.subr.mxu0 0.0
  %927 = vmatpush1.msra.mxu0 0.0
  %928 = vmatprep.subr.mxu0 0.0
  %929 = vmatpush1.msra.mxu0 0.0
  %930 = vmatprep.subr.mxu0 0.0
  %931 = vmatpush1.msra.mxu0 %v428
  %932 = vmatprep.subr.mxu0 0.0
  %933 = vmatpush1.msra.mxu0 %v427
  %934 = vmatprep.subr.mxu0 0.0
  %935 = vmatpush1.msra.mxu0 %v426
  %936 = vmatprep.subr.mxu0 0.0
  %937 = vmatpush1.msra.mxu0 %v425
  %938 = vmatprep.subr.mxu0 0.0
  %939 = vmatpush1.msra.mxu0 %v424
  %940 = vmatprep.subr.mxu0 0.0
  %941 = vmatpush1.msra.mxu0 %v423
  %942 = vmatprep.subr.mxu0 0.0
  %943 = vmatpush1.msra.mxu0 %v422
  %944 = vmatprep.subr.mxu0 0.0
  %945 = vmatpush1.msra.mxu0 %v421
  %946 = vmatprep.subr.mxu0 0.0
  %947 = vmatpush2.msra.mxu0 0.0
  %948 = vmatprep.subr.mxu0 0.0
  %949 = vmatpush2.msra.mxu0 0.0
  %950 = vmatprep.subr.mxu0 0.0
  %951 = vmatpush2.msra.mxu0 0.0
  %952 = vmatprep.subr.mxu0 0.0
  %953 = vmatpush2.msra.mxu0 0.0
  %954 = vmatprep.subr.mxu0 0.0
  %955 = vmatpush2.msra.mxu0 0.0
  %956 = vmatprep.subr.mxu0 0.0
  %957 = vmatpush2.msra.mxu0 0.0
  %958 = vmatprep.subr.mxu0 0.0
  %959 = vmatpush2.msra.mxu0 0.0
  %960 = vmatprep.subr.mxu0 0.0
  %961 = vmatpush2.msra.mxu0 0.0
  %962 = vmatprep.subr.mxu0 0.0
  %963 = vmatpush2.msra.mxu0 0.0
  %964 = vmatprep.subr.mxu0 0.0
  %965 = vmatpush2.msra.mxu0 0.0
  %966 = vmatprep.subr.mxu0 0.0
  %967 = vmatpush2.msra.mxu0 0.0
  %968 = vmatprep.subr.mxu0 0.0
  %969 = vmatpush2.msra.mxu0 0.0
  %970 = vmatprep.subr.mxu0 0.0
  %971 = vmatpush2.msra.mxu0 0.0
  %972 = vmatprep.subr.mxu0 0.0
  %973 = vmatpush2.msra.mxu0 0.0
  %974 = vmatprep.subr.mxu0 0.0
  %975 = vmatpush2.msra.mxu0 0.0
  %976 = vmatprep.subr.mxu0 0.0
  %977 = vmatpush2.msra.mxu0 0.0
  %978 = vmatprep.mubr.f32.mxu0 0.0
  %979 = vmatmul.mubr.f32.gmra.mxu0 %v906
  %v980 = vpop.f32.mrf.mxu0
  %v981 = vadd.f32 0.0, %v980
  %v982 = vpop.f32.mrf.mxu0
  %983 = vmatprep.mubr.f32.mxu0 0.0
  %984 = vmatmul.mubr.f32.gmra.mxu0 %v909
  %v985 = vpop.f32.mrf.mxu0
  %v986 = vadd.f32 0.0, %v985
  %v987 = vpop.f32.mrf.mxu0
  %988 = vmatprep.mubr.f32.mxu0 0.0
  %989 = vmatmul.mubr.f32.gmra.mxu0 %v912
  %v990 = vpop.f32.mrf.mxu0
  %v991 = vadd.f32 0.0, %v990
  %v992 = vpop.f32.mrf.mxu0
  %993 = vdwg.mxu0
  %v995 = vsel %vm67, %v661, 0
  %v998 = vsel %vm67, %v666, 0
  %v1001 = vsel %vm67, %v671, 0
  %1003 = vmatprep.subr.mxu0 0.0
  %1004 = vmatpush1.msra.mxu0 0.0
  %1005 = vmatprep.subr.mxu0 0.0
  %1006 = vmatpush1.msra.mxu0 0.0
  %1007 = vmatprep.subr.mxu0 0.0
  %1008 = vmatpush1.msra.mxu0 0.0
  %1009 = vmatprep.subr.mxu0 0.0
  %1010 = vmatpush1.msra.mxu0 0.0
  %1011 = vmatprep.subr.mxu0 0.0
  %1012 = vmatpush1.msra.mxu0 0.0
  %1013 = vmatprep.subr.mxu0 0.0
  %1014 = vmatpush1.msra.mxu0 0.0
  %1015 = vmatprep.subr.mxu0 0.0
  %1016 = vmatpush1.msra.mxu0 0.0
  %1017 = vmatprep.subr.mxu0 0.0
  %1018 = vmatpush1.msra.mxu0 0.0
  %1019 = vmatprep.subr.mxu0 0.0
  %1020 = vmatpush1.msra.mxu0 %v428
  %1021 = vmatprep.subr.mxu0 0.0
  %1022 = vmatpush1.msra.mxu0 %v427
  %1023 = vmatprep.subr.mxu0 0.0
  %1024 = vmatpush1.msra.mxu0 %v426
  %1025 = vmatprep.subr.mxu0 0.0
  %1026 = vmatpush1.msra.mxu0 %v425
  %1027 = vmatprep.subr.mxu0 0.0
  %1028 = vmatpush1.msra.mxu0 %v424
  %1029 = vmatprep.subr.mxu0 0.0
  %1030 = vmatpush1.msra.mxu0 %v423
  %1031 = vmatprep.subr.mxu0 0.0
  %1032 = vmatpush1.msra.mxu0 %v422
  %1033 = vmatprep.subr.mxu0 0.0
  %1034 = vmatpush1.msra.mxu0 %v421
  %1035 = vmatprep.subr.mxu0 0.0
  %1036 = vmatpush2.msra.mxu0 0.0
  %1037 = vmatprep.subr.mxu0 0.0
  %1038 = vmatpush2.msra.mxu0 0.0
  %1039 = vmatprep.subr.mxu0 0.0
  %1040 = vmatpush2.msra.mxu0 0.0
  %1041 = vmatprep.subr.mxu0 0.0
  %1042 = vmatpush2.msra.mxu0 0.0
  %1043 = vmatprep.subr.mxu0 0.0
  %1044 = vmatpush2.msra.mxu0 0.0
  %1045 = vmatprep.subr.mxu0 0.0
  %1046 = vmatpush2.msra.mxu0 0.0
  %1047 = vmatprep.subr.mxu0 0.0
  %1048 = vmatpush2.msra.mxu0 0.0
  %1049 = vmatprep.subr.mxu0 0.0
  %1050 = vmatpush2.msra.mxu0 0.0
  %1051 = vmatprep.subr.mxu0 0.0
  %1052 = vmatpush2.msra.mxu0 0.0
  %1053 = vmatprep.subr.mxu0 0.0
  %1054 = vmatpush2.msra.mxu0 0.0
  %1055 = vmatprep.subr.mxu0 0.0
  %1056 = vmatpush2.msra.mxu0 0.0
  %1057 = vmatprep.subr.mxu0 0.0
  %1058 = vmatpush2.msra.mxu0 0.0
  %1059 = vmatprep.subr.mxu0 0.0
  %1060 = vmatpush2.msra.mxu0 0.0
  %1061 = vmatprep.subr.mxu0 0.0
  %1062 = vmatpush2.msra.mxu0 0.0
  %1063 = vmatprep.subr.mxu0 0.0
  %1064 = vmatpush2.msra.mxu0 0.0
  %1065 = vmatprep.subr.mxu0 0.0
  %1066 = vmatpush2.msra.mxu0 0.0
  %1067 = vmatprep.mubr.f32.mxu0 0.0
  %1068 = vmatmul.mubr.f32.gmra.mxu0 %v995
  %v1069 = vpop.f32.mrf.mxu0
  %v1070 = vadd.f32 %v981, %v1069
  %v1071 = vpop.f32.mrf.mxu0
  %1072 = vmatprep.mubr.f32.mxu0 0.0
  %1073 = vmatmul.mubr.f32.gmra.mxu0 %v998
  %v1074 = vpop.f32.mrf.mxu0
  %v1075 = vadd.f32 %v986, %v1074
  %v1076 = vpop.f32.mrf.mxu0
  %1077 = vmatprep.mubr.f32.mxu0 0.0
  %1078 = vmatmul.mubr.f32.gmra.mxu0 %v1001
  %v1079 = vpop.f32.mrf.mxu0
  %v1080 = vadd.f32 %v991, %v1079
  %v1081 = vpop.f32.mrf.mxu0
  %1082 = vdwg.mxu0
  %vm1083 = vcmp.ge.s32.totalorder %v430, 32
  %vm1084 = vcmp.lt.s32.totalorder %v430, 48
  %vm1085 = vmand %vm1083, %vm1084
  %v1086 = vsel %vm1085, 1, 0
  %v1087 = vcvt.s32.f32 %v1086
  %v1088 = vmul.f32 %v218, %v1087
  %v1089 = vmul.f32 %v223, %v1087
  %v1090 = vmul.f32 %v228, %v1087
  %v1092 = vsel %vm67, %v1088, 0
  %v1095 = vsel %vm67, %v1089, 0
  %v1098 = vsel %vm67, %v1090, 0
  %1100 = vmatprep.subr.mxu0 0.0
  %1101 = vmatpush1.xpose.msra.mxu0 0.0
  %1102 = vmatprep.subr.mxu0 0.0
  %1103 = vmatpush1.xpose.msra.mxu0 0.0
  %1104 = vmatprep.subr.mxu0 0.0
  %1105 = vmatpush1.xpose.msra.mxu0 0.0
  %1106 = vmatprep.subr.mxu0 0.0
  %1107 = vmatpush1.xpose.msra.mxu0 0.0
  %1108 = vmatprep.subr.mxu0 0.0
  %1109 = vmatpush1.xpose.msra.mxu0 0.0
  %1110 = vmatprep.subr.mxu0 0.0
  %1111 = vmatpush1.xpose.msra.mxu0 0.0
  %1112 = vmatprep.subr.mxu0 0.0
  %1113 = vmatpush1.xpose.msra.mxu0 0.0
  %1114 = vmatprep.subr.mxu0 0.0
  %1115 = vmatpush1.xpose.msra.mxu0 0.0
  %1116 = vmatprep.subr.mxu0 0.0
  %1117 = vmatpush1.xpose.msra.mxu0 0.0
  %1118 = vmatprep.subr.mxu0 0.0
  %1119 = vmatpush1.xpose.msra.mxu0 0.0
  %1120 = vmatprep.subr.mxu0 0.0
  %1121 = vmatpush1.xpose.msra.mxu0 0.0
  %1122 = vmatprep.subr.mxu0 0.0
  %1123 = vmatpush1.xpose.msra.mxu0 0.0
  %1124 = vmatprep.subr.mxu0 0.0
  %1125 = vmatpush1.xpose.msra.mxu0 0.0
  %1126 = vmatprep.subr.mxu0 0.0
  %1127 = vmatpush1.xpose.msra.mxu0 %v455
  %1128 = vmatprep.subr.mxu0 0.0
  %1129 = vmatpush1.xpose.msra.mxu0 %v452
  %1130 = vmatprep.subr.mxu0 0.0
  %1131 = vmatpush1.xpose.msra.mxu0 %v449
  %1132 = vmatprep.subr.mxu0 0.0
  %1133 = vmatpush2.xpose.msra.mxu0 0.0
  %1134 = vmatprep.subr.mxu0 0.0
  %1135 = vmatpush2.xpose.msra.mxu0 0.0
  %1136 = vmatprep.subr.mxu0 0.0
  %1137 = vmatpush2.xpose.msra.mxu0 0.0
  %1138 = vmatprep.subr.mxu0 0.0
  %1139 = vmatpush2.xpose.msra.mxu0 0.0
  %1140 = vmatprep.subr.mxu0 0.0
  %1141 = vmatpush2.xpose.msra.mxu0 0.0
  %1142 = vmatprep.subr.mxu0 0.0
  %1143 = vmatpush2.xpose.msra.mxu0 0.0
  %1144 = vmatprep.subr.mxu0 0.0
  %1145 = vmatpush2.xpose.msra.mxu0 0.0
  %1146 = vmatprep.subr.mxu0 0.0
  %1147 = vmatpush2.xpose.msra.mxu0 0.0
  %1148 = vmatprep.subr.mxu0 0.0
  %1149 = vmatpush2.xpose.msra.mxu0 0.0
  %1150 = vmatprep.subr.mxu0 0.0
  %1151 = vmatpush2.xpose.msra.mxu0 0.0
  %1152 = vmatprep.subr.mxu0 0.0
  %1153 = vmatpush2.xpose.msra.mxu0 0.0
  %1154 = vmatprep.subr.mxu0 0.0
  %1155 = vmatpush2.xpose.msra.mxu0 0.0
  %1156 = vmatprep.subr.mxu0 0.0
  %1157 = vmatpush2.xpose.msra.mxu0 0.0
  %1158 = vmatprep.subr.mxu0 0.0
  %1159 = vmatpush2.xpose.msra.mxu0 0.0
  %1160 = vmatprep.subr.mxu0 0.0
  %1161 = vmatpush2.xpose.msra.mxu0 0.0
  %1162 = vmatprep.subr.mxu0 0.0
  %1163 = vmatpush2.xpose.msra.mxu0 0.0
  %1164 = vmatprep.mubr.f32.mxu0 0.0
  %1165 = vmatmul.mubr.f32.gmra.mxu0 %v1092
  %v1166 = vpop.f32.mrf.mxu0
  %v1167 = vadd.f32 0.0, %v1166
  %v1168 = vpop.f32.mrf.mxu0
  %1169 = vmatprep.mubr.f32.mxu0 0.0
  %1170 = vmatmul.mubr.f32.gmra.mxu0 %v1095
  %v1171 = vpop.f32.mrf.mxu0
  %v1172 = vadd.f32 0.0, %v1171
  %v1173 = vpop.f32.mrf.mxu0
  %1174 = vmatprep.mubr.f32.mxu0 0.0
  %1175 = vmatmul.mubr.f32.gmra.mxu0 %v1098
  %v1176 = vpop.f32.mrf.mxu0
  %v1177 = vadd.f32 0.0, %v1176
  %v1178 = vpop.f32.mrf.mxu0
  %1179 = vdwg.mxu0
  %v1180 = vmul.f32 %v1167, 0.25
  %v1181 = vmul.f32 %v1172, 0.25
  %v1182 = vmul.f32 %v1177, 0.25
  %v1183 = vadd.f32 %v1180, %v62
  %v1184 = vadd.f32 %v1181, %v63
  %v1185 = vadd.f32 %v1182, %v64
  %v1186 = vsel %vm543, %v1183, -inf
  %1187 = vmax.xlane.f32.xlu0 %v1186
  %v1188 = vpop.xlane.xlu0 %1187
  %v1189 = vsel %vm543, %v1184, -inf
  %1190 = vmax.xlane.f32.xlu0 %v1189
  %v1191 = vpop.xlane.xlu0 %1190
  %v1192 = vsel %vm550, %v1185, -inf
  %1193 = vmax.xlane.f32.xlu0 %v1192
  %v1194 = vpop.xlane.xlu0 %1193
  %v1195 = vsub.f32 %v1183, %v1188
  %v1196 = vsub.f32 %v1184, %v1191
  %v1197 = vsub.f32 %v1185, %v1194
  %v1198 = vmul.f32 %v1195, 1.442695
  %v1199 = vpow.pop %v1198
  %v1200 = vmul.f32 %v1196, 1.442695
  %v1201 = vpow.pop %v1200
  %v1202 = vmul.f32 %v1197, 1.442695
  %v1203 = vpow.pop %v1202
  %v1204 = vsel %vm543, %v1199, 0.0
  %1205 = vadd.xlane.f32.xlu0 %v1204
  %v1206 = vpop.xlane.xlu0 %1205
  %v1207 = vsel %vm543, %v1201, 0.0
  %1208 = vadd.xlane.f32.xlu0 %v1207
  %v1209 = vpop.xlane.xlu0 %1208
  %v1210 = vsel %vm550, %v1203, 0.0
  %1211 = vadd.xlane.f32.xlu0 %v1210
  %v1212 = vpop.xlane.xlu0 %1211
  %v1213 = vrcp.pop %v1206
  %v1214 = vrcp.pop %v1209
  %v1215 = vrcp.pop %v1212
  %v1216 = vmul.f32 %v1199, %v1213
  %v1217 = vmul.f32 %v1201, %v1214
  %v1218 = vmul.f32 %v1203, %v1215
  %v1219 = vmul.f32 %v408, %v1087
  %v1220 = vmul.f32 %v413, %v1087
  %v1221 = vmul.f32 %v418, %v1087
  %v1223 = vsel %vm543, %v1216, 0
  %v1226 = vsel %vm543, %v1217, 0
  %v1229 = vsel %vm543, %v1218, 0
  %v1232 = vsel %vm590, %v1221, 0
  %1234 = vmatprep.subr.mxu0 0.0
  %1235 = vmatpush1.msra.mxu0 0.0
  %1236 = vmatprep.subr.mxu0 0.0
  %1237 = vmatpush1.msra.mxu0 0.0
  %1238 = vmatprep.subr.mxu0 0.0
  %1239 = vmatpush1.msra.mxu0 0.0
  %1240 = vmatprep.subr.mxu0 0.0
  %1241 = vmatpush1.msra.mxu0 0.0
  %1242 = vmatprep.subr.mxu0 0.0
  %1243 = vmatpush1.msra.mxu0 0.0
  %1244 = vmatprep.subr.mxu0 0.0
  %1245 = vmatpush1.msra.mxu0 0.0
  %1246 = vmatprep.subr.mxu0 0.0
  %1247 = vmatpush1.msra.mxu0 0.0
  %1248 = vmatprep.subr.mxu0 0.0
  %1249 = vmatpush1.msra.mxu0 0.0
  %1250 = vmatprep.subr.mxu0 0.0
  %1251 = vmatpush1.msra.mxu0 0.0
  %1252 = vmatprep.subr.mxu0 0.0
  %1253 = vmatpush1.msra.mxu0 0.0
  %1254 = vmatprep.subr.mxu0 0.0
  %1255 = vmatpush1.msra.mxu0 0.0
  %1256 = vmatprep.subr.mxu0 0.0
  %1257 = vmatpush1.msra.mxu0 0.0
  %1258 = vmatprep.subr.mxu0 0.0
  %1259 = vmatpush1.msra.mxu0 0.0
  %1260 = vmatprep.subr.mxu0 0.0
  %1261 = vmatpush1.msra.mxu0 %v1232
  %1262 = vmatprep.subr.mxu0 0.0
  %1263 = vmatpush1.msra.mxu0 %v1220
  %1264 = vmatprep.subr.mxu0 0.0
  %1265 = vmatpush1.msra.mxu0 %v1219
  %1266 = vmatprep.subr.mxu0 0.0
  %1267 = vmatpush2.msra.mxu0 0.0
  %1268 = vmatprep.subr.mxu0 0.0
  %1269 = vmatpush2.msra.mxu0 0.0
  %1270 = vmatprep.subr.mxu0 0.0
  %1271 = vmatpush2.msra.mxu0 0.0
  %1272 = vmatprep.subr.mxu0 0.0
  %1273 = vmatpush2.msra.mxu0 0.0
  %1274 = vmatprep.subr.mxu0 0.0
  %1275 = vmatpush2.msra.mxu0 0.0
  %1276 = vmatprep.subr.mxu0 0.0
  %1277 = vmatpush2.msra.mxu0 0.0
  %1278 = vmatprep.subr.mxu0 0.0
  %1279 = vmatpush2.msra.mxu0 0.0
  %1280 = vmatprep.subr.mxu0 0.0
  %1281 = vmatpush2.msra.mxu0 0.0
  %1282 = vmatprep.subr.mxu0 0.0
  %1283 = vmatpush2.msra.mxu0 0.0
  %1284 = vmatprep.subr.mxu0 0.0
  %1285 = vmatpush2.msra.mxu0 0.0
  %1286 = vmatprep.subr.mxu0 0.0
  %1287 = vmatpush2.msra.mxu0 0.0
  %1288 = vmatprep.subr.mxu0 0.0
  %1289 = vmatpush2.msra.mxu0 0.0
  %1290 = vmatprep.subr.mxu0 0.0
  %1291 = vmatpush2.msra.mxu0 0.0
  %1292 = vmatprep.subr.mxu0 0.0
  %1293 = vmatpush2.msra.mxu0 0.0
  %1294 = vmatprep.subr.mxu0 0.0
  %1295 = vmatpush2.msra.mxu0 0.0
  %1296 = vmatprep.subr.mxu0 0.0
  %1297 = vmatpush2.msra.mxu0 0.0
  %1298 = vmatprep.mubr.f32.mxu0 0.0
  %1299 = vmatmul.mubr.f32.gmra.mxu0 %v1223
  %v1300 = vpop.f32.mrf.mxu0
  %v1301 = vadd.f32 0.0, %v1300
  %v1302 = vpop.f32.mrf.mxu0
  %1303 = vmatprep.mubr.f32.mxu0 0.0
  %1304 = vmatmul.mubr.f32.gmra.mxu0 %v1226
  %v1305 = vpop.f32.mrf.mxu0
  %v1306 = vadd.f32 0.0, %v1305
  %v1307 = vpop.f32.mrf.mxu0
  %1308 = vmatprep.mubr.f32.mxu0 0.0
  %1309 = vmatmul.mubr.f32.gmra.mxu0 %v1229
  %v1310 = vpop.f32.mrf.mxu0
  %v1311 = vadd.f32 0.0, %v1310
  %v1312 = vpop.f32.mrf.mxu0
  %1313 = vdwg.mxu0
  %v1315 = vsel %vm67, %v1301, 0
  %v1318 = vsel %vm67, %v1306, 0
  %v1321 = vsel %vm67, %v1311, 0
  %1323 = vmatprep.subr.mxu0 0.0
  %1324 = vmatpush1.msra.mxu0 0.0
  %1325 = vmatprep.subr.mxu0 0.0
  %1326 = vmatpush1.msra.mxu0 0.0
  %1327 = vmatprep.subr.mxu0 0.0
  %1328 = vmatpush1.msra.mxu0 0.0
  %1329 = vmatprep.subr.mxu0 0.0
  %1330 = vmatpush1.msra.mxu0 0.0
  %1331 = vmatprep.subr.mxu0 0.0
  %1332 = vmatpush1.msra.mxu0 0.0
  %1333 = vmatprep.subr.mxu0 0.0
  %1334 = vmatpush1.msra.mxu0 0.0
  %1335 = vmatprep.subr.mxu0 0.0
  %1336 = vmatpush1.msra.mxu0 0.0
  %1337 = vmatprep.subr.mxu0 0.0
  %1338 = vmatpush1.msra.mxu0 0.0
  %1339 = vmatprep.subr.mxu0 0.0
  %1340 = vmatpush1.msra.mxu0 %v428
  %1341 = vmatprep.subr.mxu0 0.0
  %1342 = vmatpush1.msra.mxu0 %v427
  %1343 = vmatprep.subr.mxu0 0.0
  %1344 = vmatpush1.msra.mxu0 %v426
  %1345 = vmatprep.subr.mxu0 0.0
  %1346 = vmatpush1.msra.mxu0 %v425
  %1347 = vmatprep.subr.mxu0 0.0
  %1348 = vmatpush1.msra.mxu0 %v424
  %1349 = vmatprep.subr.mxu0 0.0
  %1350 = vmatpush1.msra.mxu0 %v423
  %1351 = vmatprep.subr.mxu0 0.0
  %1352 = vmatpush1.msra.mxu0 %v422
  %1353 = vmatprep.subr.mxu0 0.0
  %1354 = vmatpush1.msra.mxu0 %v421
  %1355 = vmatprep.subr.mxu0 0.0
  %1356 = vmatpush2.msra.mxu0 0.0
  %1357 = vmatprep.subr.mxu0 0.0
  %1358 = vmatpush2.msra.mxu0 0.0
  %1359 = vmatprep.subr.mxu0 0.0
  %1360 = vmatpush2.msra.mxu0 0.0
  %1361 = vmatprep.subr.mxu0 0.0
  %1362 = vmatpush2.msra.mxu0 0.0
  %1363 = vmatprep.subr.mxu0 0.0
  %1364 = vmatpush2.msra.mxu0 0.0
  %1365 = vmatprep.subr.mxu0 0.0
  %1366 = vmatpush2.msra.mxu0 0.0
  %1367 = vmatprep.subr.mxu0 0.0
  %1368 = vmatpush2.msra.mxu0 0.0
  %1369 = vmatprep.subr.mxu0 0.0
  %1370 = vmatpush2.msra.mxu0 0.0
  %1371 = vmatprep.subr.mxu0 0.0
  %1372 = vmatpush2.msra.mxu0 0.0
  %1373 = vmatprep.subr.mxu0 0.0
  %1374 = vmatpush2.msra.mxu0 0.0
  %1375 = vmatprep.subr.mxu0 0.0
  %1376 = vmatpush2.msra.mxu0 0.0
  %1377 = vmatprep.subr.mxu0 0.0
  %1378 = vmatpush2.msra.mxu0 0.0
  %1379 = vmatprep.subr.mxu0 0.0
  %1380 = vmatpush2.msra.mxu0 0.0
  %1381 = vmatprep.subr.mxu0 0.0
  %1382 = vmatpush2.msra.mxu0 0.0
  %1383 = vmatprep.subr.mxu0 0.0
  %1384 = vmatpush2.msra.mxu0 0.0
  %1385 = vmatprep.subr.mxu0 0.0
  %1386 = vmatpush2.msra.mxu0 0.0
  %1387 = vmatprep.mubr.f32.mxu0 0.0
  %1388 = vmatmul.mubr.f32.gmra.mxu0 %v1315
  %v1389 = vpop.f32.mrf.mxu0
  %v1390 = vadd.f32 0.0, %v1389
  %v1391 = vpop.f32.mrf.mxu0
  %1392 = vmatprep.mubr.f32.mxu0 0.0
  %1393 = vmatmul.mubr.f32.gmra.mxu0 %v1318
  %v1394 = vpop.f32.mrf.mxu0
  %v1395 = vadd.f32 0.0, %v1394
  %v1396 = vpop.f32.mrf.mxu0
  %1397 = vmatprep.mubr.f32.mxu0 0.0
  %1398 = vmatmul.mubr.f32.gmra.mxu0 %v1321
  %v1399 = vpop.f32.mrf.mxu0
  %v1400 = vadd.f32 0.0, %v1399
  %v1401 = vpop.f32.mrf.mxu0
  %1402 = vdwg.mxu0
  %v1403 = vadd.f32 %v1070, %v1390
  %v1404 = vadd.f32 %v1075, %v1395
  %v1405 = vadd.f32 %v1080, %v1400
  %vm1406 = vcmp.ge.s32.totalorder %v430, 48
  %vm1407 = vcmp.lt.s32.totalorder %v430, 64
  %vm1408 = vmand %vm1406, %vm1407
  %v1409 = vsel %vm1408, 1, 0
  %v1410 = vcvt.s32.f32 %v1409
  %v1411 = vmul.f32 %v218, %v1410
  %v1412 = vmul.f32 %v223, %v1410
  %v1413 = vmul.f32 %v228, %v1410
  %v1415 = vsel %vm67, %v1411, 0
  %v1418 = vsel %vm67, %v1412, 0
  %v1421 = vsel %vm67, %v1413, 0
  %1423 = vmatprep.subr.mxu0 0.0
  %1424 = vmatpush1.xpose.msra.mxu0 0.0
  %1425 = vmatprep.subr.mxu0 0.0
  %1426 = vmatpush1.xpose.msra.mxu0 0.0
  %1427 = vmatprep.subr.mxu0 0.0
  %1428 = vmatpush1.xpose.msra.mxu0 0.0
  %1429 = vmatprep.subr.mxu0 0.0
  %1430 = vmatpush1.xpose.msra.mxu0 0.0
  %1431 = vmatprep.subr.mxu0 0.0
  %1432 = vmatpush1.xpose.msra.mxu0 0.0
  %1433 = vmatprep.subr.mxu0 0.0
  %1434 = vmatpush1.xpose.msra.mxu0 0.0
  %1435 = vmatprep.subr.mxu0 0.0
  %1436 = vmatpush1.xpose.msra.mxu0 0.0
  %1437 = vmatprep.subr.mxu0 0.0
  %1438 = vmatpush1.xpose.msra.mxu0 0.0
  %1439 = vmatprep.subr.mxu0 0.0
  %1440 = vmatpush1.xpose.msra.mxu0 0.0
  %1441 = vmatprep.subr.mxu0 0.0
  %1442 = vmatpush1.xpose.msra.mxu0 0.0
  %1443 = vmatprep.subr.mxu0 0.0
  %1444 = vmatpush1.xpose.msra.mxu0 0.0
  %1445 = vmatprep.subr.mxu0 0.0
  %1446 = vmatpush1.xpose.msra.mxu0 0.0
  %1447 = vmatprep.subr.mxu0 0.0
  %1448 = vmatpush1.xpose.msra.mxu0 0.0
  %1449 = vmatprep.subr.mxu0 0.0
  %1450 = vmatpush1.xpose.msra.mxu0 %v455
  %1451 = vmatprep.subr.mxu0 0.0
  %1452 = vmatpush1.xpose.msra.mxu0 %v452
  %1453 = vmatprep.subr.mxu0 0.0
  %1454 = vmatpush1.xpose.msra.mxu0 %v449
  %1455 = vmatprep.subr.mxu0 0.0
  %1456 = vmatpush2.xpose.msra.mxu0 0.0
  %1457 = vmatprep.subr.mxu0 0.0
  %1458 = vmatpush2.xpose.msra.mxu0 0.0
  %1459 = vmatprep.subr.mxu0 0.0
  %1460 = vmatpush2.xpose.msra.mxu0 0.0
  %1461 = vmatprep.subr.mxu0 0.0
  %1462 = vmatpush2.xpose.msra.mxu0 0.0
  %1463 = vmatprep.subr.mxu0 0.0
  %1464 = vmatpush2.xpose.msra.mxu0 0.0
  %1465 = vmatprep.subr.mxu0 0.0
  %1466 = vmatpush2.xpose.msra.mxu0 0.0
  %1467 = vmatprep.subr.mxu0 0.0
  %1468 = vmatpush2.xpose.msra.mxu0 0.0
  %1469 = vmatprep.subr.mxu0 0.0
  %1470 = vmatpush2.xpose.msra.mxu0 0.0
  %1471 = vmatprep.subr.mxu0 0.0
  %1472 = vmatpush2.xpose.msra.mxu0 0.0
  %1473 = vmatprep.subr.mxu0 0.0
  %1474 = vmatpush2.xpose.msra.mxu0 0.0
  %1475 = vmatprep.subr.mxu0 0.0
  %1476 = vmatpush2.xpose.msra.mxu0 0.0
  %1477 = vmatprep.subr.mxu0 0.0
  %1478 = vmatpush2.xpose.msra.mxu0 0.0
  %1479 = vmatprep.subr.mxu0 0.0
  %1480 = vmatpush2.xpose.msra.mxu0 0.0
  %1481 = vmatprep.subr.mxu0 0.0
  %1482 = vmatpush2.xpose.msra.mxu0 0.0
  %1483 = vmatprep.subr.mxu0 0.0
  %1484 = vmatpush2.xpose.msra.mxu0 0.0
  %1485 = vmatprep.subr.mxu0 0.0
  %1486 = vmatpush2.xpose.msra.mxu0 0.0
  %1487 = vmatprep.mubr.f32.mxu0 0.0
  %1488 = vmatmul.mubr.f32.gmra.mxu0 %v1415
  %v1489 = vpop.f32.mrf.mxu0
  %v1490 = vadd.f32 0.0, %v1489
  %v1491 = vpop.f32.mrf.mxu0
  %1492 = vmatprep.mubr.f32.mxu0 0.0
  %1493 = vmatmul.mubr.f32.gmra.mxu0 %v1418
  %v1494 = vpop.f32.mrf.mxu0
  %v1495 = vadd.f32 0.0, %v1494
  %v1496 = vpop.f32.mrf.mxu0
  %1497 = vmatprep.mubr.f32.mxu0 0.0
  %1498 = vmatmul.mubr.f32.gmra.mxu0 %v1421
  %v1499 = vpop.f32.mrf.mxu0
  %v1500 = vadd.f32 0.0, %v1499
  %v1501 = vpop.f32.mrf.mxu0
  %1502 = vdwg.mxu0
  %v1503 = vmul.f32 %v1490, 0.25
  %v1504 = vmul.f32 %v1495, 0.25
  %v1505 = vmul.f32 %v1500, 0.25
  %v1506 = vadd.f32 %v1503, %v62
  %v1507 = vadd.f32 %v1504, %v63
  %v1508 = vadd.f32 %v1505, %v64
  %v1509 = vsel %vm543, %v1506, -inf
  %1510 = vmax.xlane.f32.xlu0 %v1509
  %v1511 = vpop.xlane.xlu0 %1510
  %v1512 = vsel %vm543, %v1507, -inf
  %1513 = vmax.xlane.f32.xlu0 %v1512
  %v1514 = vpop.xlane.xlu0 %1513
  %v1515 = vsel %vm550, %v1508, -inf
  %1516 = vmax.xlane.f32.xlu0 %v1515
  %v1517 = vpop.xlane.xlu0 %1516
  %v1518 = vsub.f32 %v1506, %v1511
  %v1519 = vsub.f32 %v1507, %v1514
  %v1520 = vsub.f32 %v1508, %v1517
  %v1521 = vmul.f32 %v1518, 1.442695
  %v1522 = vpow.pop %v1521
  %v1523 = vmul.f32 %v1519, 1.442695
  %v1524 = vpow.pop %v1523
  %v1525 = vmul.f32 %v1520, 1.442695
  %v1526 = vpow.pop %v1525
  %v1527 = vsel %vm543, %v1522, 0.0
  %1528 = vadd.xlane.f32.xlu0 %v1527
  %v1529 = vpop.xlane.xlu0 %1528
  %v1530 = vsel %vm543, %v1524, 0.0
  %1531 = vadd.xlane.f32.xlu0 %v1530
  %v1532 = vpop.xlane.xlu0 %1531
  %v1533 = vsel %vm550, %v1526, 0.0
  %1534 = vadd.xlane.f32.xlu0 %v1533
  %v1535 = vpop.xlane.xlu0 %1534
  %v1536 = vrcp.pop %v1529
  %v1537 = vrcp.pop %v1532
  %v1538 = vrcp.pop %v1535
  %v1539 = vmul.f32 %v1522, %v1536
  %v1540 = vmul.f32 %v1524, %v1537
  %v1541 = vmul.f32 %v1526, %v1538
  %v1542 = vmul.f32 %v408, %v1410
  %v1543 = vmul.f32 %v413, %v1410
  %v1544 = vmul.f32 %v418, %v1410
  %v1546 = vsel %vm543, %v1539, 0
  %v1549 = vsel %vm543, %v1540, 0
  %v1552 = vsel %vm543, %v1541, 0
  %v1555 = vsel %vm590, %v1544, 0
  %1557 = vmatprep.subr.mxu0 0.0
  %1558 = vmatpush1.msra.mxu0 0.0
  %1559 = vmatprep.subr.mxu0 0.0
  %1560 = vmatpush1.msra.mxu0 0.0
  %1561 = vmatprep.subr.mxu0 0.0
  %1562 = vmatpush1.msra.mxu0 0.0
  %1563 = vmatprep.subr.mxu0 0.0
  %1564 = vmatpush1.msra.mxu0 0.0
  %1565 = vmatprep.subr.mxu0 0.0
  %1566 = vmatpush1.msra.mxu0 0.0
  %1567 = vmatprep.subr.mxu0 0.0
  %1568 = vmatpush1.msra.mxu0 0.0
  %1569 = vmatprep.subr.mxu0 0.0
  %1570 = vmatpush1.msra.mxu0 0.0
  %1571 = vmatprep.subr.mxu0 0.0
  %1572 = vmatpush1.msra.mxu0 0.0
  %1573 = vmatprep.subr.mxu0 0.0
  %1574 = vmatpush1.msra.mxu0 0.0
  %1575 = vmatprep.subr.mxu0 0.0
  %1576 = vmatpush1.msra.mxu0 0.0
  %1577 = vmatprep.subr.mxu0 0.0
  %1578 = vmatpush1.msra.mxu0 0.0
  %1579 = vmatprep.subr.mxu0 0.0
  %1580 = vmatpush1.msra.mxu0 0.0
  %1581 = vmatprep.subr.mxu0 0.0
  %1582 = vmatpush1.msra.mxu0 0.0
  %1583 = vmatprep.subr.mxu0 0.0
  %1584 = vmatpush1.msra.mxu0 %v1555
  %1585 = vmatprep.subr.mxu0 0.0
  %1586 = vmatpush1.msra.mxu0 %v1543
  %1587 = vmatprep.subr.mxu0 0.0
  %1588 = vmatpush1.msra.mxu0 %v1542
  %1589 = vmatprep.subr.mxu0 0.0
  %1590 = vmatpush2.msra.mxu0 0.0
  %1591 = vmatprep.subr.mxu0 0.0
  %1592 = vmatpush2.msra.mxu0 0.0
  %1593 = vmatprep.subr.mxu0 0.0
  %1594 = vmatpush2.msra.mxu0 0.0
  %1595 = vmatprep.subr.mxu0 0.0
  %1596 = vmatpush2.msra.mxu0 0.0
  %1597 = vmatprep.subr.mxu0 0.0
  %1598 = vmatpush2.msra.mxu0 0.0
  %1599 = vmatprep.subr.mxu0 0.0
  %1600 = vmatpush2.msra.mxu0 0.0
  %1601 = vmatprep.subr.mxu0 0.0
  %1602 = vmatpush2.msra.mxu0 0.0
  %1603 = vmatprep.subr.mxu0 0.0
  %1604 = vmatpush2.msra.mxu0 0.0
  %1605 = vmatprep.subr.mxu0 0.0
  %1606 = vmatpush2.msra.mxu0 0.0
  %1607 = vmatprep.subr.mxu0 0.0
  %1608 = vmatpush2.msra.mxu0 0.0
  %1609 = vmatprep.subr.mxu0 0.0
  %1610 = vmatpush2.msra.mxu0 0.0
  %1611 = vmatprep.subr.mxu0 0.0
  %1612 = vmatpush2.msra.mxu0 0.0
  %1613 = vmatprep.subr.mxu0 0.0
  %1614 = vmatpush2.msra.mxu0 0.0
  %1615 = vmatprep.subr.mxu0 0.0
  %1616 = vmatpush2.msra.mxu0 0.0
  %1617 = vmatprep.subr.mxu0 0.0
  %1618 = vmatpush2.msra.mxu0 0.0
  %1619 = vmatprep.subr.mxu0 0.0
  %1620 = vmatpush2.msra.mxu0 0.0
  %1621 = vmatprep.mubr.f32.mxu0 0.0
  %1622 = vmatmul.mubr.f32.gmra.mxu0 %v1546
  %v1623 = vpop.f32.mrf.mxu0
  %v1624 = vadd.f32 0.0, %v1623
  %v1625 = vpop.f32.mrf.mxu0
  %1626 = vmatprep.mubr.f32.mxu0 0.0
  %1627 = vmatmul.mubr.f32.gmra.mxu0 %v1549
  %v1628 = vpop.f32.mrf.mxu0
  %v1629 = vadd.f32 0.0, %v1628
  %v1630 = vpop.f32.mrf.mxu0
  %1631 = vmatprep.mubr.f32.mxu0 0.0
  %1632 = vmatmul.mubr.f32.gmra.mxu0 %v1552
  %v1633 = vpop.f32.mrf.mxu0
  %v1634 = vadd.f32 0.0, %v1633
  %v1635 = vpop.f32.mrf.mxu0
  %1636 = vdwg.mxu0
  %v1638 = vsel %vm67, %v1624, 0
  %v1641 = vsel %vm67, %v1629, 0
  %v1644 = vsel %vm67, %v1634, 0
  %1646 = vmatprep.subr.mxu0 0.0
  %1647 = vmatpush1.msra.mxu0 0.0
  %1648 = vmatprep.subr.mxu0 0.0
  %1649 = vmatpush1.msra.mxu0 0.0
  %1650 = vmatprep.subr.mxu0 0.0
  %1651 = vmatpush1.msra.mxu0 0.0
  %1652 = vmatprep.subr.mxu0 0.0
  %1653 = vmatpush1.msra.mxu0 0.0
  %1654 = vmatprep.subr.mxu0 0.0
  %1655 = vmatpush1.msra.mxu0 0.0
  %1656 = vmatprep.subr.mxu0 0.0
  %1657 = vmatpush1.msra.mxu0 0.0
  %1658 = vmatprep.subr.mxu0 0.0
  %1659 = vmatpush1.msra.mxu0 0.0
  %1660 = vmatprep.subr.mxu0 0.0
  %1661 = vmatpush1.msra.mxu0 0.0
  %1662 = vmatprep.subr.mxu0 0.0
  %1663 = vmatpush1.msra.mxu0 %v428
  %1664 = vmatprep.subr.mxu0 0.0
  %1665 = vmatpush1.msra.mxu0 %v427
  %1666 = vmatprep.subr.mxu0 0.0
  %1667 = vmatpush1.msra.mxu0 %v426
  %1668 = vmatprep.subr.mxu0 0.0
  %1669 = vmatpush1.msra.mxu0 %v425
  %1670 = vmatprep.subr.mxu0 0.0
  %1671 = vmatpush1.msra.mxu0 %v424
  %1672 = vmatprep.subr.mxu0 0.0
  %1673 = vmatpush1.msra.mxu0 %v423
  %1674 = vmatprep.subr.mxu0 0.0
  %1675 = vmatpush1.msra.mxu0 %v422
  %1676 = vmatprep.subr.mxu0 0.0
  %1677 = vmatpush1.msra.mxu0 %v421
  %1678 = vmatprep.subr.mxu0 0.0
  %1679 = vmatpush2.msra.mxu0 0.0
  %1680 = vmatprep.subr.mxu0 0.0
  %1681 = vmatpush2.msra.mxu0 0.0
  %1682 = vmatprep.subr.mxu0 0.0
  %1683 = vmatpush2.msra.mxu0 0.0
  %1684 = vmatprep.subr.mxu0 0.0
  %1685 = vmatpush2.msra.mxu0 0.0
  %1686 = vmatprep.subr.mxu0 0.0
  %1687 = vmatpush2.msra.mxu0 0.0
  %1688 = vmatprep.subr.mxu0 0.0
  %1689 = vmatpush2.msra.mxu0 0.0
  %1690 = vmatprep.subr.mxu0 0.0
  %1691 = vmatpush2.msra.mxu0 0.0
  %1692 = vmatprep.subr.mxu0 0.0
  %1693 = vmatpush2.msra.mxu0 0.0
  %1694 = vmatprep.subr.mxu0 0.0
  %1695 = vmatpush2.msra.mxu0 0.0
  %1696 = vmatprep.subr.mxu0 0.0
  %1697 = vmatpush2.msra.mxu0 0.0
  %1698 = vmatprep.subr.mxu0 0.0
  %1699 = vmatpush2.msra.mxu0 0.0
  %1700 = vmatprep.subr.mxu0 0.0
  %1701 = vmatpush2.msra.mxu0 0.0
  %1702 = vmatprep.subr.mxu0 0.0
  %1703 = vmatpush2.msra.mxu0 0.0
  %1704 = vmatprep.subr.mxu0 0.0
  %1705 = vmatpush2.msra.mxu0 0.0
  %1706 = vmatprep.subr.mxu0 0.0
  %1707 = vmatpush2.msra.mxu0 0.0
  %1708 = vmatprep.subr.mxu0 0.0
  %1709 = vmatpush2.msra.mxu0 0.0
  %1710 = vmatprep.mubr.f32.mxu0 0.0
  %1711 = vmatmul.mubr.f32.gmra.mxu0 %v1638
  %v1712 = vpop.f32.mrf.mxu0
  %v1713 = vadd.f32 0.0, %v1712
  %v1714 = vpop.f32.mrf.mxu0
  %1715 = vmatprep.mubr.f32.mxu0 0.0
  %1716 = vmatmul.mubr.f32.gmra.mxu0 %v1641
  %v1717 = vpop.f32.mrf.mxu0
  %v1718 = vadd.f32 0.0, %v1717
  %v1719 = vpop.f32.mrf.mxu0
  %1720 = vmatprep.mubr.f32.mxu0 0.0
  %1721 = vmatmul.mubr.f32.gmra.mxu0 %v1644
  %v1722 = vpop.f32.mrf.mxu0
  %v1723 = vadd.f32 0.0, %v1722
  %v1724 = vpop.f32.mrf.mxu0
  %1725 = vdwg.mxu0
  %v1726 = vadd.f32 %v1403, %v1713
  %v1727 = vadd.f32 %v1404, %v1718
  %v1728 = vadd.f32 %v1405, %v1723
  %v1729 = vadd.f32 %v59, %v1726
  %v1730 = vadd.f32 %v60, %v1727
  %v1731 = vadd.f32 %v61, %v1728
  %v1732 = vld [vmem:[%s11] sm:$0x1]
  %v1734 = vlaneseq
  %v1735 = vshrl.u32 %v1734, 7
  %v1736 = vsub.s32 0, %v1735
  %v1737 = vrot.slane %v1732, %v1736
  %v1739 = vadd.f32 %v1729, %v1737
  %v1740 = vadd.f32 %v1730, %v1737
  %v1741 = vadd.f32 %v1731, %v1737
  %v1742 = vld [vmem:[%s12] sm:$0x1]
  %v1743 = vld [vmem:[%s13] sm:$0x1]
  %v1744 = vsel %vm67, %v1739, 0.0
  %1745 = vadd.xlane.f32.xlu0 %v1744
  %v1746 = vpop.xlane.xlu0 %1745
  %v1747 = vsel %vm67, %v1740, 0.0
  %1748 = vadd.xlane.f32.xlu0 %v1747
  %v1749 = vpop.xlane.xlu0 %1748
  %v1750 = vsel %vm74, %v1741, 0.0
  %1751 = vadd.xlane.f32.xlu0 %v1750
  %v1752 = vpop.xlane.xlu0 %1751
  %v1753 = vmul.f32 %v1746, %v78
  %v1754 = vmul.f32 %v1749, %v78
  %v1755 = vmul.f32 %v1752, %v78
  %v1756 = vsub.f32 %v1739, %v1753
  %v1757 = vsub.f32 %v1740, %v1754
  %v1758 = vsub.f32 %v1741, %v1755
  %v1759 = vmul.f32 %v1756, %v1756
  %v1760 = vmul.f32 %v1757, %v1757
  %v1761 = vmul.f32 %v1758, %v1758
  %v1762 = vsel %vm67, %v1759, 0.0
  %1763 = vadd.xlane.f32.xlu0 %v1762
  %v1764 = vpop.xlane.xlu0 %1763
  %v1765 = vsel %vm67, %v1760, 0.0
  %1766 = vadd.xlane.f32.xlu0 %v1765
  %v1767 = vpop.xlane.xlu0 %1766
  %v1768 = vsel %vm74, %v1761, 0.0
  %1769 = vadd.xlane.f32.xlu0 %v1768
  %v1770 = vpop.xlane.xlu0 %1769
  %v1771 = vmul.f32 %v1764, %v78
  %v1772 = vmul.f32 %v1767, %v78
  %v1773 = vmul.f32 %v1770, %v78
  %v1774 = vadd.f32 %v1771, 1e-06
  %v1775 = vadd.f32 %v1772, 1e-06
  %v1776 = vadd.f32 %v1773, 1e-06
  %v1777 = vrsqrt.pop %v1774
  %v1778 = vrsqrt.pop %v1775
  %v1779 = vrsqrt.pop %v1776
  %v1780 = vmul.f32 %v1756, %v1777
  %v1781 = vmul.f32 %v1757, %v1778
  %v1782 = vmul.f32 %v1758, %v1779
  %v1784 = vlaneseq
  %v1785 = vshrl.u32 %v1784, 7
  %v1786 = vsub.s32 0, %v1785
  %v1787 = vrot.slane %v1742, %v1786
  %v1789 = vmul.f32 %v1780, %v1787
  %v1790 = vmul.f32 %v1781, %v1787
  %v1791 = vmul.f32 %v1782, %v1787
  %v1793 = vlaneseq
  %v1794 = vshrl.u32 %v1793, 7
  %v1795 = vsub.s32 0, %v1794
  %v1796 = vrot.slane %v1743, %v1795
  %v1798 = vadd.f32 %v1789, %v1796
  %v1799 = vadd.f32 %v1790, %v1796
  %v1800 = vadd.f32 %v1791, %v1796
  %v1801 = vld [vmem:[%s14] sm:$0xff]
  %v1802 = vld [vmem:[%s14 + $0x8] sm:$0xff]
  %v1803 = vld [vmem:[%s14 + $0x10] sm:$0xff]
  %v1804 = vld [vmem:[%s14 + $0x18] sm:$0xff]
  %v1805 = vld [vmem:[%s14 + $0x20] sm:$0xff]
  %v1806 = vld [vmem:[%s14 + $0x28] sm:$0xff]
  %v1807 = vld [vmem:[%s14 + $0x30] sm:$0xff]
  %v1808 = vld [vmem:[%s14 + $0x38] sm:$0xff]
  %v1809 = vld [vmem:[%s14 + $0x40] sm:$0xff]
  %v1810 = vld [vmem:[%s14 + $0x48] sm:$0xff]
  %v1811 = vld [vmem:[%s14 + $0x50] sm:$0xff]
  %v1812 = vld [vmem:[%s14 + $0x58] sm:$0xff]
  %v1813 = vld [vmem:[%s14 + $0x60] sm:$0xff]
  %v1814 = vld [vmem:[%s14 + $0x68] sm:$0xff]
  %v1815 = vld [vmem:[%s14 + $0x70] sm:$0xff]
  %v1816 = vld [vmem:[%s14 + $0x78] sm:$0xff]
  %v1817 = vld [vmem:[%s15] sm:$0x3]
  %v1819 = vlaneseq
  %v1820 = vshrl.u32 %v1819, 7
  %v1821 = vsub.s32 0, %v1820
  %v1822 = vrot.slane %v1817, %v1821
  %v1823 = vlaneseq
  %v1824 = vshrl.u32 %v1823, 7
  %v1825 = vsub.s32 1, %v1824
  %v1826 = vrot.slane %v1817, %v1825
  %v1830 = vsel %vm67, %v1798, 0
  %v1833 = vsel %vm67, %v1799, 0
  %v1836 = vsel %vm67, %v1800, 0
  %1838 = vmatprep.subr.mxu0 0.0
  %1839 = vmatpush1.msra.mxu0 0.0
  %1840 = vmatprep.subr.mxu0 0.0
  %1841 = vmatpush1.msra.mxu0 0.0
  %1842 = vmatprep.subr.mxu0 0.0
  %1843 = vmatpush1.msra.mxu0 0.0
  %1844 = vmatprep.subr.mxu0 0.0
  %1845 = vmatpush1.msra.mxu0 0.0
  %1846 = vmatprep.subr.mxu0 0.0
  %1847 = vmatpush1.msra.mxu0 0.0
  %1848 = vmatprep.subr.mxu0 0.0
  %1849 = vmatpush1.msra.mxu0 0.0
  %1850 = vmatprep.subr.mxu0 0.0
  %1851 = vmatpush1.msra.mxu0 0.0
  %1852 = vmatprep.subr.mxu0 0.0
  %1853 = vmatpush1.msra.mxu0 0.0
  %1854 = vmatprep.subr.mxu0 %v1816
  %1855 = vmatpush1.msra.mxu0 %v1815
  %1856 = vmatprep.subr.mxu0 %v1814
  %1857 = vmatpush1.msra.mxu0 %v1813
  %1858 = vmatprep.subr.mxu0 %v1812
  %1859 = vmatpush1.msra.mxu0 %v1811
  %1860 = vmatprep.subr.mxu0 %v1810
  %1861 = vmatpush1.msra.mxu0 %v1809
  %1862 = vmatprep.subr.mxu0 %v1808
  %1863 = vmatpush1.msra.mxu0 %v1807
  %1864 = vmatprep.subr.mxu0 %v1806
  %1865 = vmatpush1.msra.mxu0 %v1805
  %1866 = vmatprep.subr.mxu0 %v1804
  %1867 = vmatpush1.msra.mxu0 %v1803
  %1868 = vmatprep.subr.mxu0 %v1802
  %1869 = vmatpush1.msra.mxu0 %v1801
  %1870 = vmatprep.subr.mxu0 0.0
  %1871 = vmatpush2.msra.mxu0 0.0
  %1872 = vmatprep.subr.mxu0 0.0
  %1873 = vmatpush2.msra.mxu0 0.0
  %1874 = vmatprep.subr.mxu0 0.0
  %1875 = vmatpush2.msra.mxu0 0.0
  %1876 = vmatprep.subr.mxu0 0.0
  %1877 = vmatpush2.msra.mxu0 0.0
  %1878 = vmatprep.subr.mxu0 0.0
  %1879 = vmatpush2.msra.mxu0 0.0
  %1880 = vmatprep.subr.mxu0 0.0
  %1881 = vmatpush2.msra.mxu0 0.0
  %1882 = vmatprep.subr.mxu0 0.0
  %1883 = vmatpush2.msra.mxu0 0.0
  %1884 = vmatprep.subr.mxu0 0.0
  %1885 = vmatpush2.msra.mxu0 0.0
  %1886 = vmatprep.subr.mxu0 0.0
  %1887 = vmatpush2.msra.mxu0 0.0
  %1888 = vmatprep.subr.mxu0 0.0
  %1889 = vmatpush2.msra.mxu0 0.0
  %1890 = vmatprep.subr.mxu0 0.0
  %1891 = vmatpush2.msra.mxu0 0.0
  %1892 = vmatprep.subr.mxu0 0.0
  %1893 = vmatpush2.msra.mxu0 0.0
  %1894 = vmatprep.subr.mxu0 0.0
  %1895 = vmatpush2.msra.mxu0 0.0
  %1896 = vmatprep.subr.mxu0 0.0
  %1897 = vmatpush2.msra.mxu0 0.0
  %1898 = vmatprep.subr.mxu0 0.0
  %1899 = vmatpush2.msra.mxu0 0.0
  %1900 = vmatprep.subr.mxu0 0.0
  %1901 = vmatpush2.msra.mxu0 0.0
  %1902 = vmatprep.mubr.f32.mxu0 0.0
  %1903 = vmatmul.mubr.f32.gmra.mxu0 %v1830
  %v1904 = vpop.f32.mrf.mxu0
  %v1905 = vadd.f32 %v1822, %v1904
  %v1906 = vpop.f32.mrf.mxu0
  %v1907 = vadd.f32 %v1826, %v1906
  %1908 = vmatprep.mubr.f32.mxu0 0.0
  %1909 = vmatmul.mubr.f32.gmra.mxu0 %v1833
  %v1910 = vpop.f32.mrf.mxu0
  %v1911 = vadd.f32 %v1822, %v1910
  %v1912 = vpop.f32.mrf.mxu0
  %v1913 = vadd.f32 %v1826, %v1912
  %1914 = vmatprep.mubr.f32.mxu0 0.0
  %1915 = vmatmul.mubr.f32.gmra.mxu0 %v1836
  %v1916 = vpop.f32.mrf.mxu0
  %v1917 = vadd.f32 %v1822, %v1916
  %v1918 = vpop.f32.mrf.mxu0
  %v1919 = vadd.f32 %v1826, %v1918
  %1920 = vdwg.mxu0
  %v1921 = vmul.f32 %v1905, %v1905
  %v1922 = vmul.f32 %v1907, %v1907
  %v1923 = vmul.f32 %v1911, %v1911
  %v1924 = vmul.f32 %v1913, %v1913
  %v1925 = vmul.f32 %v1917, %v1917
  %v1926 = vmul.f32 %v1919, %v1919
  %v1927 = vmul.f32 %v1905, %v1921
  %v1928 = vmul.f32 %v1907, %v1922
  %v1929 = vmul.f32 %v1911, %v1923
  %v1930 = vmul.f32 %v1913, %v1924
  %v1931 = vmul.f32 %v1917, %v1925
  %v1932 = vmul.f32 %v1919, %v1926
  %v1933 = vmul.f32 %v1927, 0.044715
  %v1934 = vmul.f32 %v1928, 0.044715
  %v1935 = vmul.f32 %v1929, 0.044715
  %v1936 = vmul.f32 %v1930, 0.044715
  %v1937 = vmul.f32 %v1931, 0.044715
  %v1938 = vmul.f32 %v1932, 0.044715
  %v1939 = vadd.f32 %v1905, %v1933
  %v1940 = vadd.f32 %v1907, %v1934
  %v1941 = vadd.f32 %v1911, %v1935
  %v1942 = vadd.f32 %v1913, %v1936
  %v1943 = vadd.f32 %v1917, %v1937
  %v1944 = vadd.f32 %v1919, %v1938
  %v1945 = vmul.f32 %v1939, 0.7978846
  %v1946 = vmul.f32 %v1940, 0.7978846
  %v1947 = vmul.f32 %v1941, 0.7978846
  %v1948 = vmul.f32 %v1942, 0.7978846
  %v1949 = vmul.f32 %v1943, 0.7978846
  %v1950 = vmul.f32 %v1944, 0.7978846
  %v1951 = vtanh.pop %v1945
  %v1952 = vtanh.pop %v1946
  %v1953 = vtanh.pop %v1947
  %v1954 = vtanh.pop %v1948
  %v1955 = vtanh.pop %v1949
  %v1956 = vtanh.pop %v1950
  %v1957 = vadd.f32 %v1951, 1.0
  %v1958 = vadd.f32 %v1952, 1.0
  %v1959 = vadd.f32 %v1953, 1.0
  %v1960 = vadd.f32 %v1954, 1.0
  %v1961 = vadd.f32 %v1955, 1.0
  %v1962 = vadd.f32 %v1956, 1.0
  %v1963 = vmul.f32 %v1957, 0.5
  %v1964 = vmul.f32 %v1958, 0.5
  %v1965 = vmul.f32 %v1959, 0.5
  %v1966 = vmul.f32 %v1960, 0.5
  %v1967 = vmul.f32 %v1961, 0.5
  %v1968 = vmul.f32 %v1962, 0.5
  %v1969 = vmul.f32 %v1905, %v1963
  %v1970 = vmul.f32 %v1907, %v1964
  %v1971 = vmul.f32 %v1911, %v1965
  %v1972 = vmul.f32 %v1913, %v1966
  %v1973 = vmul.f32 %v1917, %v1967
  %v1974 = vmul.f32 %v1919, %v1968
  %v1975 = vld [vmem:[%s16] sm:$0xff]
  %v1976 = vld [vmem:[%s16 + $0x8] sm:$0xff]
  %v1977 = vld [vmem:[%s16 + $0x10] sm:$0xff]
  %v1978 = vld [vmem:[%s16 + $0x18] sm:$0xff]
  %v1979 = vld [vmem:[%s16 + $0x20] sm:$0xff]
  %v1980 = vld [vmem:[%s16 + $0x28] sm:$0xff]
  %v1981 = vld [vmem:[%s16 + $0x30] sm:$0xff]
  %v1982 = vld [vmem:[%s16 + $0x38] sm:$0xff]
  %v1983 = vld [vmem:[%s16 + $0x40] sm:$0xff]
  %v1984 = vld [vmem:[%s16 + $0x48] sm:$0xff]
  %v1985 = vld [vmem:[%s16 + $0x50] sm:$0xff]
  %v1986 = vld [vmem:[%s16 + $0x58] sm:$0xff]
  %v1987 = vld [vmem:[%s16 + $0x60] sm:$0xff]
  %v1988 = vld [vmem:[%s16 + $0x68] sm:$0xff]
  %v1989 = vld [vmem:[%s16 + $0x70] sm:$0xff]
  %v1990 = vld [vmem:[%s16 + $0x78] sm:$0xff]
  %v1991 = vld [vmem:[%s16 + $0x80] sm:$0xff]
  %v1992 = vld [vmem:[%s16 + $0x88] sm:$0xff]
  %v1993 = vld [vmem:[%s16 + $0x90] sm:$0xff]
  %v1994 = vld [vmem:[%s16 + $0x98] sm:$0xff]
  %v1995 = vld [vmem:[%s16 + $0xa0] sm:$0xff]
  %v1996 = vld [vmem:[%s16 + $0xa8] sm:$0xff]
  %v1997 = vld [vmem:[%s16 + $0xb0] sm:$0xff]
  %v1998 = vld [vmem:[%s16 + $0xb8] sm:$0xff]
  %v1999 = vld [vmem:[%s16 + $0xc0] sm:$0xff]
  %v2000 = vld [vmem:[%s16 + $0xc8] sm:$0xff]
  %v2001 = vld [vmem:[%s16 + $0xd0] sm:$0xff]
  %v2002 = vld [vmem:[%s16 + $0xd8] sm:$0xff]
  %v2003 = vld [vmem:[%s16 + $0xe0] sm:$0xff]
  %v2004 = vld [vmem:[%s16 + $0xe8] sm:$0xff]
  %v2005 = vld [vmem:[%s16 + $0xf0] sm:$0xff]
  %v2006 = vld [vmem:[%s16 + $0xf8] sm:$0xff]
  %v2007 = vld [vmem:[%s17] sm:$0x1]
  %v2009 = vlaneseq
  %v2010 = vshrl.u32 %v2009, 7
  %v2011 = vsub.s32 0, %v2010
  %v2012 = vrot.slane %v2007, %v2011
  %2014 = vmatprep.subr.mxu0 0.0
  %2015 = vmatpush1.msra.mxu0 %v1990
  %2016 = vmatprep.subr.mxu0 0.0
  %2017 = vmatpush1.msra.mxu0 %v1989
  %2018 = vmatprep.subr.mxu0 0.0
  %2019 = vmatpush1.msra.mxu0 %v1988
  %2020 = vmatprep.subr.mxu0 0.0
  %2021 = vmatpush1.msra.mxu0 %v1987
  %2022 = vmatprep.subr.mxu0 0.0
  %2023 = vmatpush1.msra.mxu0 %v1986
  %2024 = vmatprep.subr.mxu0 0.0
  %2025 = vmatpush1.msra.mxu0 %v1985
  %2026 = vmatprep.subr.mxu0 0.0
  %2027 = vmatpush1.msra.mxu0 %v1984
  %2028 = vmatprep.subr.mxu0 0.0
  %2029 = vmatpush1.msra.mxu0 %v1983
  %2030 = vmatprep.subr.mxu0 0.0
  %2031 = vmatpush1.msra.mxu0 %v1982
  %2032 = vmatprep.subr.mxu0 0.0
  %2033 = vmatpush1.msra.mxu0 %v1981
  %2034 = vmatprep.subr.mxu0 0.0
  %2035 = vmatpush1.msra.mxu0 %v1980
  %2036 = vmatprep.subr.mxu0 0.0
  %2037 = vmatpush1.msra.mxu0 %v1979
  %2038 = vmatprep.subr.mxu0 0.0
  %2039 = vmatpush1.msra.mxu0 %v1978
  %2040 = vmatprep.subr.mxu0 0.0
  %2041 = vmatpush1.msra.mxu0 %v1977
  %2042 = vmatprep.subr.mxu0 0.0
  %2043 = vmatpush1.msra.mxu0 %v1976
  %2044 = vmatprep.subr.mxu0 0.0
  %2045 = vmatpush1.msra.mxu0 %v1975
  %2046 = vmatprep.subr.mxu0 0.0
  %2047 = vmatpush2.msra.mxu0 %v2006
  %2048 = vmatprep.subr.mxu0 0.0
  %2049 = vmatpush2.msra.mxu0 %v2005
  %2050 = vmatprep.subr.mxu0 0.0
  %2051 = vmatpush2.msra.mxu0 %v2004
  %2052 = vmatprep.subr.mxu0 0.0
  %2053 = vmatpush2.msra.mxu0 %v2003
  %2054 = vmatprep.subr.mxu0 0.0
  %2055 = vmatpush2.msra.mxu0 %v2002
  %2056 = vmatprep.subr.mxu0 0.0
  %2057 = vmatpush2.msra.mxu0 %v2001
  %2058 = vmatprep.subr.mxu0 0.0
  %2059 = vmatpush2.msra.mxu0 %v2000
  %2060 = vmatprep.subr.mxu0 0.0
  %2061 = vmatpush2.msra.mxu0 %v1999
  %2062 = vmatprep.subr.mxu0 0.0
  %2063 = vmatpush2.msra.mxu0 %v1998
  %2064 = vmatprep.subr.mxu0 0.0
  %2065 = vmatpush2.msra.mxu0 %v1997
  %2066 = vmatprep.subr.mxu0 0.0
  %2067 = vmatpush2.msra.mxu0 %v1996
  %2068 = vmatprep.subr.mxu0 0.0
  %2069 = vmatpush2.msra.mxu0 %v1995
  %2070 = vmatprep.subr.mxu0 0.0
  %2071 = vmatpush2.msra.mxu0 %v1994
  %2072 = vmatprep.subr.mxu0 0.0
  %2073 = vmatpush2.msra.mxu0 %v1993
  %2074 = vmatprep.subr.mxu0 0.0
  %2075 = vmatpush2.msra.mxu0 %v1992
  %2076 = vmatprep.subr.mxu0 0.0
  %2077 = vmatpush2.msra.mxu0 %v1991
  %2078 = vmatprep.mubr.f32.mxu0 %v1970
  %2079 = vmatmul.mubr.f32.gmra.mxu0 %v1969
  %v2080 = vpop.f32.mrf.mxu0
  %v2081 = vadd.f32 %v2012, %v2080
  %v2082 = vpop.f32.mrf.mxu0
  %2083 = vmatprep.mubr.f32.mxu0 %v1972
  %2084 = vmatmul.mubr.f32.gmra.mxu0 %v1971
  %v2085 = vpop.f32.mrf.mxu0
  %v2086 = vadd.f32 %v2012, %v2085
  %v2087 = vpop.f32.mrf.mxu0
  %2088 = vmatprep.mubr.f32.mxu0 %v1974
  %2089 = vmatmul.mubr.f32.gmra.mxu0 %v1973
  %v2090 = vpop.f32.mrf.mxu0
  %v2091 = vadd.f32 %v2012, %v2090
  %v2092 = vpop.f32.mrf.mxu0
  %2093 = vdwg.mxu0
  %v2094 = vadd.f32 %v1739, %v2081
  %v2095 = vadd.f32 %v1740, %v2086
  %v2096 = vadd.f32 %v1741, %v2091
  %2097 = vst.msk [vmem:[%s18] sm:$0xff] %vm67, %v2094
  %2098 = vst.msk [vmem:[%s18 + $0x8] sm:$0xff] %vm67, %v2095
  %2099 = vst.msk [vmem:[%s18 + $0x10] sm:$0xf] %vm74, %v2096
  // Predicated region
  $region74: #{dsan_forward.6} parent=0 // pred_check
    _
  $region75: #{dsan_forward.6} parent=0 // pred_check_branch
    %2101 = sbr.rel (0) target = $region77
  $region76: #{dsan_forward.6} parent=0 // pred_region
    _
  $region77: #{dsan_forward.6} parent=0 // pred_fallthru
    _
  // Predicated region
  $region78: #{dsan_forward.6} parent=0 // pred_check
    _
  $region79: #{dsan_forward.6} parent=0 // pred_check_branch
    %2103 = sbr.rel (0) target = $region81
  $region80: #{dsan_forward.6} parent=0 // pred_region
    _
  $region81: #{dsan_forward.6} parent=0 // pred_fallthru
    _

// kernel: dsan_forward.9
$region0: #{dsan_forward.9}
  #allocation0 [shape = 'u32[]', space=smem, size = 0x4, offset = 0x4, fixed_abs, tag = 'smem constant byte address 0x4 - core index']
  #allocation1 [shape = 'u32[144,128]{1,0:T(1,128)}', space=vmem, size = 0x12000, scoped, tag = 'internal scratch']
  %s0 = inlined_call_operand.vmem [shape: f32[4,1024], index: 0, kind: input, shape index: {}]
  %s1 = inlined_call_operand.vmem [shape: f32[2,2], index: 1, kind: input, shape index: {}]
  %s2 = inlined_call_operand.vmem [shape: f32[2,2], index: 2, kind: input, shape index: {}]
  %s3 = inlined_call_operand.vmem [shape: f32[2,2], index: 3, kind: input, shape index: {}]
  %s4 = inlined_call_operand.hbm [shape: f32[1,1], index: 4, kind: output, shape index: {}]
  %s5 = sld [smem:[#allocation0]]
  $region26: #{dsan_forward.9} parent=0
    _
  %s7 = ssub.s32 1, %s5
  %s8 = scalar_select 0, %s7, %s5
  $region1: #{dsan_forward.9} parent=0
    #allocation2 [shape = 'u8[512]{0}', space=vmem, size = 0x400, scoped, tag = 'output window, operand 0, single buffered']
    #allocation3 [shape = 's32[1]{0}', space=sflag, size = 0x4, scoped, tag = 'scoped memory for dsan_forward.9']
    %9 = vsyncpa [#allocation3], 0
    // Predicated region
    $region2: #{dsan_forward.9} parent=1 // pred_check
      _
    $region3: #{dsan_forward.9} parent=1 // pred_check_branch
      %11 = sbr.rel (0) target = $region5
    $region4: #{dsan_forward.9} parent=1 // pred_region
      _
    $region5: #{dsan_forward.9} parent=1 // pred_fallthru
      _
    // Predicated region
    $region6: #{dsan_forward.9} parent=1 // pred_check
      _
    $region7: #{dsan_forward.9} parent=1 // pred_check_branch
      %13 = sbr.rel (0) target = $region9
    $region8: #{dsan_forward.9} parent=1 // pred_region
      _
    $region9: #{dsan_forward.9} parent=1 // pred_fallthru
      _
    // Predicated region
    $region10: #{dsan_forward.9} parent=1 // pred_check
      _
    $region11: #{dsan_forward.9} parent=1 // pred_check_branch
      %15 = sbr.rel (0) target = $region13
    $region12: #{dsan_forward.9} parent=1 // pred_region
      _
    $region13: #{dsan_forward.9} parent=1 // pred_fallthru
      _
    // Predicated region
    $region14: #{dsan_forward.9} parent=1 // pred_check
      _
    $region15: #{dsan_forward.9} parent=1 // pred_check_branch
      %17 = sbr.rel (0) target = $region17
    $region16: #{dsan_forward.9} parent=1 // pred_region
      _
    $region17: #{dsan_forward.9} parent=1 // pred_fallthru
      _
    %v18 = vld [vmem:[%s0] sm:$0xff]
    %v19 = vld [vmem:[%s0 + $0x8] sm:$0xff]
    %v20 = vld [vmem:[%s0 + $0x10] sm:$0xff]
    %v21 = vld [vmem:[%s0 + $0x18] sm:$0xff]
    %v22 = vmul.f32 %v18, %v18
    %v23 = vmul.f32 %v19, %v19
    %v24 = vmul.f32 %v20, %v20
    %v25 = vmul.f32 %v21, %v21
    %v30 = vcombine.high %v22, %v22
    %v31 = vcombine.high %v23, %v23
    %v32 = vcombine.high %v24, %v24
    %v33 = vcombine.high %v25, %v25
    %vm38 = vcmask 1043456
    %v39 = vsel %vm38, %v22, 0.0
    %v40 = vsel %vm38, %v30, 0.0
    %v41 = vadd.f32 %v39, %v40
    %v42 = vsel %vm38, %v23, 0.0
    %v43 = vadd.f32 %v41, %v42
    %v44 = vsel %vm38, %v31, 0.0
    %v45 = vadd.f32 %v43, %v44
    %v46 = vsel %vm38, %v24, 0.0
    %v47 = vadd.f32 %v45, %v46
    %v48 = vsel %vm38, %v32, 0.0
    %v49 = vadd.f32 %v47, %v48
    %v50 = vsel %vm38, %v25, 0.0
    %v51 = vadd.f32 %v49, %v50
    %v52 = vsel %vm38, %v33, 0.0
    %v53 = vadd.f32 %v51, %v52
    %54 = vadd.xlane.f32.xlu0 %v53
    %v55 = vpop.xlane.xlu0 %54
    %v60 = vcombine.high %v18, %v18
    %v61 = vcombine.high %v19, %v19
    %v62 = vcombine.high %v20, %v20
    %v63 = vcombine.high %v21, %v21
    %68 = vmatprep.subr.mxu0 0.0
    %69 = vmatpush1.xpose.msra.mxu0 0.0
    %70 = vmatprep.subr.mxu0 0.0
    %71 = vmatpush1.xpose.msra.mxu0 0.0
    %72 = vmatprep.subr.mxu0 0.0
    %73 = vmatpush1.xpose.msra.mxu0 0.0
    %74 = vmatprep.subr.mxu0 0.0
    %75 = vmatpush1.xpose.msra.mxu0 0.0
    %76 = vmatprep.subr.mxu0 0.0
    %77 = vmatpush1.xpose.msra.mxu0 0.0
    %78 = vmatprep.subr.mxu0 0.0
    %79 = vmatpush1.xpose.msra.mxu0 0.0
    %80 = vmatprep.subr.mxu0 0.0
    %81 = vmatpush1.xpose.msra.mxu0 0.0
    %82 = vmatprep.subr.mxu0 0.0
    %83 = vmatpush1.xpose.msra.mxu0 0.0
    %84 = vmatprep.subr.mxu0 0.0
    %85 = vmatpush1.xpose.msra.mxu0 0.0
    %86 = vmatprep.subr.mxu0 0.0
    %87 = vmatpush1.xpose.msra.mxu0 0.0
    %88 = vmatprep.subr.mxu0 0.0
    %89 = vmatpush1.xpose.msra.mxu0 0.0
    %90 = vmatprep.subr.mxu0 0.0
    %91 = vmatpush1.xpose.msra.mxu0 0.0
    %92 = vmatprep.subr.mxu0 0.0
    %93 = vmatpush1.xpose.msra.mxu0 0.0
    %94 = vmatprep.subr.mxu0 0.0
    %95 = vmatpush1.xpose.msra.mxu0 0.0
    %96 = vmatprep.subr.mxu0 0.0
    %97 = vmatpush1.xpose.msra.mxu0 0.0
    %98 = vmatprep.subr.mxu0 %v60
    %99 = vmatpush1.xpose.msra.mxu0 %v18
    %100 = vmatprep.subr.mxu0 0.0
    %101 = vmatpush2.xpose.msra.mxu0 0.0
    %102 = vmatprep.subr.mxu0 0.0
    %103 = vmatpush2.xpose.msra.mxu0 0.0
    %104 = vmatprep.subr.mxu0 0.0
    %105 = vmatpush2.xpose.msra.mxu0 0.0
    %106 = vmatprep.subr.mxu0 0.0
    %107 = vmatpush2.xpose.msra.mxu0 0.0
    %108 = vmatprep.subr.mxu0 0.0
    %109 = vmatpush2.xpose.msra.mxu0 0.0
    %110 = vmatprep.subr.mxu0 0.0
    %111 = vmatpush2.xpose.msra.mxu0 0.0
    %112 = vmatprep.subr.mxu0 0.0
    %113 = vmatpush2.xpose.msra.mxu0 0.0
    %114 = vmatprep.subr.mxu0 0.0
    %115 = vmatpush2.xpose.msra.mxu0 0.0
    %116 = vmatprep.subr.mxu0 0.0
    %117 = vmatpush2.xpose.msra.mxu0 0.0
    %118 = vmatprep.subr.mxu0 0.0
    %119 = vmatpush2.xpose.msra.mxu0 0.0
    %120 = vmatprep.subr.mxu0 0.0
    %121 = vmatpush2.xpose.msra.mxu0 0.0
    %122 = vmatprep.subr.mxu0 0.0
    %123 = vmatpush2.xpose.msra.mxu0 0.0
    %124 = vmatprep.subr.mxu0 0.0
    %125 = vmatpush2.xpose.msra.mxu0 0.0
    %126 = vmatprep.subr.mxu0 0.0
    %127 = vmatpush2.xpose.msra.mxu0 0.0
    %128 = vmatprep.subr.mxu0 0.0
    %129 = vmatpush2.xpose.msra.mxu0 0.0
    %130 = vmatprep.subr.mxu0 0.0
    %131 = vmatpush2.xpose.msra.mxu0 0.0
    %132 = vmatprep.mubr.f32.mxu0 %v60
    %133 = vmatmul.mubr.f32.gmra.mxu0 %v18
    %v134 = vpop.f32.mrf.mxu0
    %v135 = vadd.f32 0.0, %v134
    %v136 = vpop.f32.mrf.mxu0
    %137 = vdwg.mxu0
    %138 = vmatprep.subr.mxu0 0.0
    %139 = vmatpush1.xpose.msra.mxu0 0.0
    %140 = vmatprep.subr.mxu0 0.0
    %141 = vmatpush1.xpose.msra.mxu0 0.0
    %142 = vmatprep.subr.mxu0 0.0
    %143 = vmatpush1.xpose.msra.mxu0 0.0
    %144 = vmatprep.subr.mxu0 0.0
    %145 = vmatpush1.xpose.msra.mxu0 0.0
    %146 = vmatprep.subr.mxu0 0.0
    %147 = vmatpush1.xpose.msra.mxu0 0.0
    %148 = vmatprep.subr.mxu0 0.0
    %149 = vmatpush1.xpose.msra.mxu0 0.0
    %150 = vmatprep.subr.mxu0 0.0
    %151 = vmatpush1.xpose.msra.mxu0 0.0
    %152 = vmatprep.subr.mxu0 0.0
    %153 = vmatpush1.xpose.msra.mxu0 0.0
    %154 = vmatprep.subr.mxu0 0.0
    %155 = vmatpush1.xpose.msra.mxu0 0.0
    %156 = vmatprep.subr.mxu0 0.0
    %157 = vmatpush1.xpose.msra.mxu0 0.0
    %158 = vmatprep.subr.mxu0 0.0
    %159 = vmatpush1.xpose.msra.mxu0 0.0
    %160 = vmatprep.subr.mxu0 0.0
    %161 = vmatpush1.xpose.msra.mxu0 0.0
    %162 = vmatprep.subr.mxu0 0.0
    %163 = vmatpush1.xpose.msra.mxu0 0.0
    %164 = vmatprep.subr.mxu0 0.0
    %165 = vmatpush1.xpose.msra.mxu0 0.0
    %166 = vmatprep.subr.mxu0 0.0
    %167 = vmatpush1.xpose.msra.mxu0 0.0
    %168 = vmatprep.subr.mxu0 %v61
    %169 = vmatpush1.xpose.msra.mxu0 %v19
    %170 = vmatprep.subr.mxu0 0.0
    %171 = vmatpush2.xpose.msra.mxu0 0.0
    %172 = vmatprep.subr.mxu0 0.0
    %173 = vmatpush2.xpose.msra.mxu0 0.0
    %174 = vmatprep.subr.mxu0 0.0
    %175 = vmatpush2.xpose.msra.mxu0 0.0
    %176 = vmatprep.subr.mxu0 0.0
    %177 = vmatpush2.xpose.msra.mxu0 0.0
    %178 = vmatprep.subr.mxu0 0.0
    %179 = vmatpush2.xpose.msra.mxu0 0.0
    %180 = vmatprep.subr.mxu0 0.0
    %181 = vmatpush2.xpose.msra.mxu0 0.0
    %182 = vmatprep.subr.mxu0 0.0
    %183 = vmatpush2.xpose.msra.mxu0 0.0
    %184 = vmatprep.subr.mxu0 0.0
    %185 = vmatpush2.xpose.msra.mxu0 0.0
    %186 = vmatprep.subr.mxu0 0.0
    %187 = vmatpush2.xpose.msra.mxu0 0.0
    %188 = vmatprep.subr.mxu0 0.0
    %189 = vmatpush2.xpose.msra.mxu0 0.0
    %190 = vmatprep.subr.mxu0 0.0
    %191 = vmatpush2.xpose.msra.mxu0 0.0
    %192 = vmatprep.subr.mxu0 0.0
    %193 = vmatpush2.xpose.msra.mxu0 0.0
    %194 = vmatprep.subr.mxu0 0.0
    %195 = vmatpush2.xpose.msra.mxu0 0.0
    %196 = vmatprep.subr.mxu0 0.0
    %197 = vmatpush2.xpose.msra.mxu0 0.0
    %198 = vmatprep.subr.mxu0 0.0
    %199 = vmatpush2.xpose.msra.mxu0 0.0
    %200 = vmatprep.subr.mxu0 0.0
    %201 = vmatpush2.xpose.msra.mxu0 0.0
    %202 = vmatprep.mubr.f32.mxu0 %v61
    %203 = vmatmul.mubr.f32.gmra.mxu0 %v19
    %v204 = vpop.f32.mrf.mxu0
    %v205 = vadd.f32 %v135, %v204
    %v206 = vpop.f32.mrf.mxu0
    %207 = vdwg.mxu0
    %208 = vmatprep.subr.mxu0 0.0
    %209 = vmatpush1.xpose.msra.mxu0 0.0
    %210 = vmatprep.subr.mxu0 0.0
    %211 = vmatpush1.xpose.msra.mxu0 0.0
    %212 = vmatprep.subr.mxu0 0.0
    %213 = vmatpush1.xpose.msra.mxu0 0.0
    %214 = vmatprep.subr.mxu0 0.0
    %215 = vmatpush1.xpose.msra.mxu0 0.0
    %216 = vmatprep.subr.mxu0 0.0
    %217 = vmatpush1.xpose.msra.mxu0 0.0
    %218 = vmatprep.subr.mxu0 0.0
    %219 = vmatpush1.xpose.msra.mxu0 0.0
    %220 = vmatprep.subr.mxu0 0.0
    %221 = vmatpush1.xpose.msra.mxu0 0.0
    %222 = vmatprep.subr.mxu0 0.0
    %223 = vmatpush1.xpose.msra.mxu0 0.0
    %224 = vmatprep.subr.mxu0 0.0
    %225 = vmatpush1.xpose.msra.mxu0 0.0
    %226 = vmatprep.subr.mxu0 0.0
    %227 = vmatpush1.xpose.msra.mxu0 0.0
    %228 = vmatprep.subr.mxu0 0.0
    %229 = vmatpush1.xpose.msra.mxu0 0.0
    %230 = vmatprep.subr.mxu0 0.0
    %231 = vmatpush1.xpose.msra.mxu0 0.0
    %232 = vmatprep.subr.mxu0 0.0
    %233 = vmatpush1.xpose.msra.mxu0 0.0
    %234 = vmatprep.subr.mxu0 0.0
    %235 = vmatpush1.xpose.msra.mxu0 0.0
    %236 = vmatprep.subr.mxu0 0.0
    %237 = vmatpush1.xpose.msra.mxu0 0.0
    %238 = vmatprep.subr.mxu0 %v62
    %239 = vmatpush1.xpose.msra.mxu0 %v20
    %240 = vmatprep.subr.mxu0 0.0
    %241 = vmatpush2.xpose.msra.mxu0 0.0
    %242 = vmatprep.subr.mxu0 0.0
    %243 = vmatpush2.xpose.msra.mxu0 0.0
    %244 = vmatprep.subr.mxu0 0.0
    %245 = vmatpush2.xpose.msra.mxu0 0.0
    %246 = vmatprep.subr.mxu0 0.0
    %247 = vmatpush2.xpose.msra.mxu0 0.0
    %248 = vmatprep.subr.mxu0 0.0
    %249 = vmatpush2.xpose.msra.mxu0 0.0
    %250 = vmatprep.subr.mxu0 0.0
    %251 = vmatpush2.xpose.msra.mxu0 0.0
    %252 = vmatprep.subr.mxu0 0.0
    %253 = vmatpush2.xpose.msra.mxu0 0.0
    %254 = vmatprep.subr.mxu0 0.0
    %255 = vmatpush2.xpose.msra.mxu0 0.0
    %256 = vmatprep.subr.mxu0 0.0
    %257 = vmatpush2.xpose.msra.mxu0 0.0
    %258 = vmatprep.subr.mxu0 0.0
    %259 = vmatpush2.xpose.msra.mxu0 0.0
    %260 = vmatprep.subr.mxu0 0.0
    %261 = vmatpush2.xpose.msra.mxu0 0.0
    %262 = vmatprep.subr.mxu0 0.0
    %263 = vmatpush2.xpose.msra.mxu0 0.0
    %264 = vmatprep.subr.mxu0 0.0
    %265 = vmatpush2.xpose.msra.mxu0 0.0
    %266 = vmatprep.subr.mxu0 0.0
    %267 = vmatpush2.xpose.msra.mxu0 0.0
    %268 = vmatprep.subr.mxu0 0.0
    %269 = vmatpush2.xpose.msra.mxu0 0.0
    %270 = vmatprep.subr.mxu0 0.0
    %271 = vmatpush2.xpose.msra.mxu0 0.0
    %272 = vmatprep.mubr.f32.mxu0 %v62
    %273 = vmatmul.mubr.f32.gmra.mxu0 %v20
    %v274 = vpop.f32.mrf.mxu0
    %v275 = vadd.f32 %v205, %v274
    %v276 = vpop.f32.mrf.mxu0
    %277 = vdwg.mxu0
    %278 = vmatprep.subr.mxu0 0.0
    %279 = vmatpush1.xpose.msra.mxu0 0.0
    %280 = vmatprep.subr.mxu0 0.0
    %281 = vmatpush1.xpose.msra.mxu0 0.0
    %282 = vmatprep.subr.mxu0 0.0
    %283 = vmatpush1.xpose.msra.mxu0 0.0
    %284 = vmatprep.subr.mxu0 0.0
    %285 = vmatpush1.xpose.msra.mxu0 0.0
    %286 = vmatprep.subr.mxu0 0.0
    %287 = vmatpush1.xpose.msra.mxu0 0.0
    %288 = vmatprep.subr.mxu0 0.0
    %289 = vmatpush1.xpose.msra.mxu0 0.0
    %290 = vmatprep.subr.mxu0 0.0
    %291 = vmatpush1.xpose.msra.mxu0 0.0
    %292 = vmatprep.subr.mxu0 0.0
    %293 = vmatpush1.xpose.msra.mxu0 0.0
    %294 = vmatprep.subr.mxu0 0.0
    %295 = vmatpush1.xpose.msra.mxu0 0.0
    %296 = vmatprep.subr.mxu0 0.0
    %297 = vmatpush1.xpose.msra.mxu0 0.0
    %298 = vmatprep.subr.mxu0 0.0
    %299 = vmatpush1.xpose.msra.mxu0 0.0
    %300 = vmatprep.subr.mxu0 0.0
    %301 = vmatpush1.xpose.msra.mxu0 0.0
    %302 = vmatprep.subr.mxu0 0.0
    %303 = vmatpush1.xpose.msra.mxu0 0.0
    %304 = vmatprep.subr.mxu0 0.0
    %305 = vmatpush1.xpose.msra.mxu0 0.0
    %306 = vmatprep.subr.mxu0 0.0
    %307 = vmatpush1.xpose.msra.mxu0 0.0
    %308 = vmatprep.subr.mxu0 %v63
    %309 = vmatpush1.xpose.msra.mxu0 %v21
    %310 = vmatprep.subr.mxu0 0.0
    %311 = vmatpush2.xpose.msra.mxu0 0.0
    %312 = vmatprep.subr.mxu0 0.0
    %313 = vmatpush2.xpose.msra.mxu0 0.0
    %314 = vmatprep.subr.mxu0 0.0
    %315 = vmatpush2.xpose.msra.mxu0 0.0
    %316 = vmatprep.subr.mxu0 0.0
    %317 = vmatpush2.xpose.msra.mxu0 0.0
    %318 = vmatprep.subr.mxu0 0.0
    %319 = vmatpush2.xpose.msra.mxu0 0.0
    %320 = vmatprep.subr.mxu0 0.0
    %321 = vmatpush2.xpose.msra.mxu0 0.0
    %322 = vmatprep.subr.mxu0 0.0
    %323 = vmatpush2.xpose.msra.mxu0 0.0
    %324 = vmatprep.subr.mxu0 0.0
    %325 = vmatpush2.xpose.msra.mxu0 0.0
    %326 = vmatprep.subr.mxu0 0.0
    %327 = vmatpush2.xpose.msra.mxu0 0.0
    %328 = vmatprep.subr.mxu0 0.0
    %329 = vmatpush2.xpose.msra.mxu0 0.0
    %330 = vmatprep.subr.mxu0 0.0
    %331 = vmatpush2.xpose.msra.mxu0 0.0
    %332 = vmatprep.subr.mxu0 0.0
    %333 = vmatpush2.xpose.msra.mxu0 0.0
    %334 = vmatprep.subr.mxu0 0.0
    %335 = vmatpush2.xpose.msra.mxu0 0.0
    %336 = vmatprep.subr.mxu0 0.0
    %337 = vmatpush2.xpose.msra.mxu0 0.0
    %338 = vmatprep.subr.mxu0 0.0
    %339 = vmatpush2.xpose.msra.mxu0 0.0
    %340 = vmatprep.subr.mxu0 0.0
    %341 = vmatpush2.xpose.msra.mxu0 0.0
    %342 = vmatprep.mubr.f32.mxu0 %v63
    %343 = vmatmul.mubr.f32.gmra.mxu0 %v21
    %v344 = vpop.f32.mrf.mxu0
    %v345 = vadd.f32 %v275, %v344
    %v346 = vpop.f32.mrf.mxu0
    %347 = vdwg.mxu0
    %348 = vxpose.xlu0.b32.start [1/16] %v55, 128
    %349 = vxpose.xlu0.b32.cont [2/16] 0.0, 128
    %350 = vxpose.xlu0.b32.cont [3/16] 0.0, 128
    %351 = vxpose.xlu0.b32.cont [4/16] 0.0, 128
    %352 = vxpose.xlu0.b32.cont [5/16] 0.0, 128
    %353 = vxpose.xlu0.b32.cont [6/16] 0.0, 128
    %354 = vxpose.xlu0.b32.cont [7/16] 0.0, 128
    %355 = vxpose.xlu0.b32.cont [8/16] 0.0, 128
    %356 = vxpose.xlu0.b32.cont [9/16] 0.0, 128
    %357 = vxpose.xlu0.b32.cont [10/16] 0.0, 128
    %358 = vxpose.xlu0.b32.cont [11/16] 0.0, 128
    %359 = vxpose.xlu0.b32.cont [12/16] 0.0, 128
    %360 = vxpose.xlu0.b32.cont [13/16] 0.0, 128
    %361 = vxpose.xlu0.b32.cont [14/16] 0.0, 128
    %362 = vxpose.xlu0.b32.cont [15/16] 0.0, 128
    %363 = vxpose.xlu0.b32.end [16/16] 0.0, 128
    %v364 = vpop.trf.xlu0
    %v365 = vpop.trf.xlu0
    %v366 = vpop.trf.xlu0
    %v367 = vpop.trf.xlu0
    %v368 = vpop.trf.xlu0
    %v369 = vpop.trf.xlu0
    %v370 = vpop.trf.xlu0
    %v371 = vpop.trf.xlu0
    %v372 = vpop.trf.xlu0
    %v373 = vpop.trf.xlu0
    %v374 = vpop.trf.xlu0
    %v375 = vpop.trf.xlu0
    %v376 = vpop.trf.xlu0
    %v377 = vpop.trf.xlu0
    %v378 = vpop.trf.xlu0
    %v379 = vpop.trf.xlu0
    %v380 = vlaneseq
    %v381 = vshrl.u32 %v380, 7
    %v382 = vsub.s32 0, %v381
    %v383 = vrot.slane %v364, %v382
    %v384 = vadd.f32 %v55, %v383
    %v385 = vmul.f32 %v345, 2.0
    %v386 = vsub.f32 %v384, %v385
    %vm387 = vcmask 27648
    %v388 = vsel %vm387, %v386, 0.0
    %389 = vadd.xlane.f32.xlu0 %v388
    %v390 = vpop.xlane.xlu0 %389
    %v391 = vrot.slane %v390, 4
    %v392 = vadd.f32 %v390, %v391
    %v393 = vrot.slane %v392, 2
    %v394 = vadd.f32 %v392, %v393
    %v395 = vrot.slane %v394, 1
    %v396 = vadd.f32 %v394, %v395
    %s397 = vtos %v396
    %v398 = vrcp.pop 12.0
    %s399 = vtos %v398
    %s400 = smul.f32 %s397, %s399
    %s401 = smul.f32 %s400, 0.25
    %v402 = vstv %s401
    %v403 = vrcp.pop %v402
    %s404 = vtos %v403
    %s405 = smul.f32 %s404, -1.0
    %v406 = vstv %s405
    %v407 = vmul.f32 %v386, %v406
    %v408 = vmul.f32 %v407, 1.442695
    %v409 = vpow.pop %v408
    %v410 = vadd.f32 %v409, 0.0
    %s411 = smul.f32 %s404, -0.5
    %v412 = vstv %s411
    %v413 = vmul.f32 %v386, %v412
    %v414 = vmul.f32 %v413, 1.442695
    %v415 = vpow.pop %v414
    %v416 = vadd.f32 %v410, %v415
    %s417 = smul.f32 %s404, -0.25
    %v418 = vstv %s417
    %v419 = vmul.f32 %v386, %v418
    %v420 = vmul.f32 %v419, 1.442695
    %v421 = vpow.pop %v420
    %v422 = vadd.f32 %v416, %v421
    %s423 = smul.f32 %s404, -0.125
    %v424 = vstv %s423
    %v425 = vmul.f32 %v386, %v424
    %v426 = vmul.f32 %v425, 1.442695
    %v427 = vpow.pop %v426
    %v428 = vadd.f32 %v422, %v427
    %s429 = smul.f32 %s404, -0.0625
    %v430 = vstv %s429
    %v431 = vmul.f32 %v386, %v430
    %v432 = vmul.f32 %v431, 1.442695
    %v433 = vpow.pop %v432
    %v434 = vadd.f32 %v428, %v433
    %v435 = vld [vmem:[%s1] sm:$0x3]
    %v436 = vmul.f32 %v435, %v434
    %v437 = vld [vmem:[%s2] sm:$0x3]
    %v439 = vrot.slane %v434, 2
    %440 = vrot.lane.b32.xlu0 %v439, 126
    %v441 = vpop.permute.xlu0 %440
    %v443 = vmul.f32 %v437, %v441
    %v444 = vadd.f32 %v436, %v443
    %v445 = vld [vmem:[%s3] sm:$0x3]
    %v446 = vmul.f32 %v445, 2.0
    %447 = vrot.lane.b32.xlu0 %v434, 126
    %v448 = vpop.permute.xlu0 %447
    %v450 = vmul.f32 %v446, %v448
    %v451 = vadd.f32 %v444, %v450
    %vm452 = vcmask 9216
    %v453 = vsel %vm452, %v451, 0.0
    %454 = vadd.xlane.f32.xlu0 %v453
    %v455 = vpop.xlane.xlu0 %454
    %vm456 = vcmask 1041408
    %v457 = vsel %vm456, %v455, 0.0
    %v458 = vrot.slane %v457, 4
    %v459 = vadd.f32 %v457, %v458
    %v460 = vrot.slane %v459, 2
    %v461 = vadd.f32 %v459, %v460
    %v462 = vrot.slane %v461, 1
    %v463 = vadd.f32 %v461, %v462
    %vm464 = vcmp.ne.f32.partialorder %v434, %v434
    %v465 = vsel %vm464, 1.0, 0.0
    %v466 = vsel %vm387, %v465, -inf
    %467 = vmax.xlane.f32.xlu0 %v466
    %v468 = vpop.xlane.xlu0 %467
    %v469 = vrot.slane %v468, 4
    %v470 = vmax.f32 %v468, %v469
    %v471 = vrot.slane %v470, 2
    %v472 = vmax.f32 %v470, %v471
    %v473 = vrot.slane %v472, 1
    %v474 = vmax.f32 %v472, %v473
    %s475 = vtos %v474
    %p476 = scmp.gt.f32.partialorder %s475, 0.0
    %s477 = scalar_select %p476, 1, 0
    %v478 = vstv %s477
    %vm479 = vcmp.eq.s32.totalorder %v478, 1
    %v480 = vsel %vm479, 0.0, %v463
    %vm481 = vcmask 0
    %482 = vst.msk [vmem:[#allocation2] sm:$0x1] %vm481, %v480
    // Predicated region
    $region18: #{dsan_forward.9} parent=1 // pred_check
      _
    $region19: #{dsan_forward.9} parent=1 // pred_check_branch
      %484 = sbr.rel (0) target = $region21
    $region20: #{dsan_forward.9} parent=1 // pred_region
      %s486 = ssub.s32 16, 16
      %487 = vsyncadd [#allocation3], %s486
      %s489 = sshll.u32 [#allocation2], 4
      %s490 = int_to_ptr.vmem [resolvable:$true] %s489
      %492 = dma.vmem_to_hbm [thread:$0]  %s490, 16, %s4, [#allocation3]
    $region21: #{dsan_forward.9} parent=1 // pred_fallthru
      _
    // Predicated region
    $region22: #{dsan_forward.9} parent=1 // pred_check
      _
    $region23: #{dsan_forward.9} parent=1 // pred_check_branch
      %494 = sbr.rel (0) target = $region25
    $region24: #{dsan_forward.9} parent=1 // pred_region
      %495 = dma.done [#allocation3], 16
    $region25: #{dsan_forward.9} parent=1 // pred_fallthru
      _
    %496 = vsyncpa [#allocation3], 1

</llo_original>
